<compile_context>
chip_gen: v7x
topology: tpu7x:2x2x1
jax: 0.10.0
libtpu: 0.0.40
codegen_flags: <defaults>
</compile_context>

<pallas_src>
import math
import jax
import jax.numpy as jnp
from jax.experimental import pallas as pl
from jax.experimental.pallas import tpu as pltpu


# Row indices inside the packed (9, H) f32 parameter operand.
_LNK_G, _LNK_B, _LNV_G, _LNV_B, _LNF_G, _LNF_B, _BV, _BO, _B2 = range(9)


def make_nova_kernel(n_heads, head_dim, hidden, seq, block_b, eps):
    H, S, Bt = hidden, seq, block_b
    M = Bt * S
    hd = head_dim
    inv_sqrt2 = 1.0 / math.sqrt(2.0)

    def layernorm(x, g, b):                      # f32 element-wise math
        mu = jnp.mean(x, axis=-1, keepdims=True)
        var = jnp.mean(jnp.square(x - mu), axis=-1, keepdims=True)
        return (x - mu) * jax.lax.rsqrt(var + eps) * g + b

    def gelu(x):                                 # exact (erf) gelu, matches the module
        return x * 0.5 * (1.0 + jax.lax.erf(x * inv_sqrt2))

    def kernel(key_ref, hid_ref, mask_ref, pack_ref, bqk_ref, b1_ref,
               wqk_ref, wv_ref, wo_ref, w1_ref, w2_ref, out_ref):
        # (Bt, S, H) blocks flattened to (M, H): fills the MXU M dimension.
        x_key = key_ref[...].reshape(M, H).astype(jnp.float32)
        x_val = hid_ref[...].reshape(M, H).astype(jnp.float32)
        mask = mask_ref[...].astype(jnp.float32)          # (S, S) additive mask

        pv = pack_ref[...]                                # (9, H) packed vectors
        lnk_g, lnk_b = pv[_LNK_G:_LNK_G + 1], pv[_LNK_B:_LNK_B + 1]
        lnv_g, lnv_b = pv[_LNV_G:_LNV_G + 1], pv[_LNV_B:_LNV_B + 1]
        lnf_g, lnf_b = pv[_LNF_G:_LNF_G + 1], pv[_LNF_B:_LNF_B + 1]
        bv, bo, b2 = pv[_BV:_BV + 1], pv[_BO:_BO + 1], pv[_B2:_B2 + 1]

        # --- pre-LayerNorms (f32) ---
        key_ln = layernorm(x_key, lnk_g, lnk_b)
        val_ln = layernorm(x_val, lnv_g, lnv_b)

        # --- fused Q|K projection (one (M,H)x(H,2H) MXU pass) + V projection ---
        qk = jnp.dot(key_ln.astype(jnp.bfloat16), wqk_ref[...],
                     preferred_element_type=jnp.float32) + bqk_ref[...]
        v = jnp.dot(val_ln.astype(jnp.bfloat16), wv_ref[...],
                    preferred_element_type=jnp.float32) + bv

        q_bf = qk[:, :H].astype(jnp.bfloat16)   # 1/sqrt(head_dim) pre-folded into wqk/bqk
        k_bf = qk[:, H:].astype(jnp.bfloat16)
        v_bf = v.astype(jnp.bfloat16)

        def attend(rows):
            # rows: the S token rows of ONE sequence. All in-register; no scratch.
            qr, kr, vr = q_bf[rows], k_bf[rows], v_bf[rows]
            q_h = jnp.stack([qr[:, h * hd:(h + 1) * hd] for h in range(n_heads)], axis=0)
            k_h = jnp.stack([kr[:, h * hd:(h + 1) * hd] for h in range(n_heads)], axis=0)
            v_h = jnp.stack([vr[:, h * hd:(h + 1) * hd] for h in range(n_heads)], axis=0)
            s = jnp.einsum('hqd,hkd->hqk', q_h, k_h,
                           preferred_element_type=jnp.float32) + mask[None, :, :]
            s = s - jnp.max(s, axis=-1, keepdims=True)
            p = jnp.exp(s)
            p = p * pl.reciprocal(jnp.sum(p, axis=-1, keepdims=True), approx=True)
            ctx = jnp.einsum('hqk,hkd->hqd', p.astype(jnp.bfloat16), v_h,
                             preferred_element_type=jnp.float32)      # (n_heads, S, hd)
            return jnp.concatenate([ctx[h] for h in range(n_heads)], axis=-1)   # (S, H)

        # TODO(synk): for large S (n_heads*S^2*4B beyond ~25% of VMEM — hit earlier on
        # v7x's 64 MiB than on v5e/v6e's 128 MiB) switch to a KV-tiled online-softmax
        # (flash) loop instead of materializing the full (n_heads, S, S) score block.
        ctx_rows = [attend(slice(bt * S, (bt + 1) * S)) for bt in range(Bt)]
        ctx_all = ctx_rows[0] if Bt == 1 else jnp.concatenate(ctx_rows, axis=0)  # (M, H)

        attn = jnp.dot(ctx_all.astype(jnp.bfloat16), wo_ref[...],
                       preferred_element_type=jnp.float32) + bo
        attn = attn + val_ln                     # residual with (normed) value stream
        attn = layernorm(attn, lnf_g, lnf_b)

        # --- feed forward (exact-erf gelu) + residual ---
        h1 = gelu(jnp.dot(attn.astype(jnp.bfloat16), w1_ref[...],
                          preferred_element_type=jnp.float32) + b1_ref[...])
        h2 = jnp.dot(h1.astype(jnp.bfloat16), w2_ref[...],
                     preferred_element_type=jnp.float32) + b2
        out_ref[...] = (h2 + attn).reshape(Bt, S, H).astype(out_ref.dtype)

    return kernel


def _padded_vmem_bytes(shape, dtype):
    """Rough (sublane,128)-tiled VMEM footprint of one buffer."""
    itemsize = jnp.dtype(dtype).itemsize
    sub = {4: 8, 2: 16, 1: 32}.get(itemsize, 8)
    if len(shape) == 0:
        lead, r, c = 1, 1, 1
    elif len(shape) == 1:
        lead, r, c = 1, 1, shape[0]
    else:
        r, c = shape[-2], shape[-1]
        lead = 1
        for d in shape[:-2]:
            lead *= d
    return lead * (-(-r // sub) * sub) * (-(-c // 128) * 128) * itemsize


def _physical_vmem_bytes():
    """Per-TensorCore VMEM capacity; conservative (v7x = 64 MiB) if unqueryable."""
    try:
        info = pltpu.get_tpu_info()
        v = getattr(info, "vmem_capacity_bytes", None)
        if v:
            return int(v)
    except Exception:
        pass
    return 64 << 20


def _activation_vmem_bytes(bt, S, H, I, n_heads):
    """Approximate live activation footprint for one grid step with bt sequences."""
    m = bt * S
    hd = max(H // n_heads, 1)
    b = 3 * 2 * _padded_vmem_bytes((bt, S, H), jnp.float32)          # key/hid/out (dbl-buffered)
    b += 2 * bt * n_heads * _padded_vmem_bytes((S, S), jnp.float32)  # scores + probs
    b += _padded_vmem_bytes((m, 2 * H), jnp.float32)                 # fused q|k
    b += 4 * _padded_vmem_bytes((m, H), jnp.float32)                 # v / ctx / attn / temps
    b += 2 * _padded_vmem_bytes((m, I), jnp.float32)                 # ffn hidden
    b += 3 * bt * n_heads * _padded_vmem_bytes((S, hd), jnp.bfloat16)
    return b


def nova_layer_forward(key, hidden, mask, params, *, n_heads, eps,
                       mxu_dtype=jnp.bfloat16):
    B, S, H = key.shape
    head_dim = H // n_heads
    I = params["w1_t"].shape[1]
    scale = 1.0 / math.sqrt(head_dim)

    def row32(a):
        return jnp.asarray(a, jnp.float32).reshape(1, -1)

    # Fused Q|K projection; 1/sqrt(head_dim) folded into the Q half (weights + bias).
    wqk = jnp.concatenate([params["wq_t"] * scale, params["wk_t"]], axis=1).astype(mxu_dtype)
    bqk = jnp.concatenate([row32(params["bq"]) * scale, row32(params["bk"])], axis=1)
    b1 = row32(params["b1"])
    # All H-wide vectors packed into a single (9, H) operand (1 DMA, 1 padded tile).
    pack = jnp.concatenate(
        [row32(params[k]) for k in ("lnk_g", "lnk_b", "lnv_g", "lnv_b",
                                    "lnf_g", "lnf_b", "bv", "bo", "b2")], axis=0)
    wv = params["wv_t"].astype(mxu_dtype)
    wo = params["wo_t"].astype(mxu_dtype)
    w1 = params["w1_t"].astype(mxu_dtype)
    w2 = params["w2_t"].astype(mxu_dtype)
    mask_f32 = mask.astype(jnp.float32)

    const_vals = [mask_f32, pack, bqk, b1, wqk, wv, wo, w1, w2]

    # --- per-generation VMEM budgeting (v5e/v6e: 128 MiB, v7x: 64 MiB per TC) ---
    phys = _physical_vmem_bytes()
    cap = phys - max(12 << 20, phys // 6)          # leave compiler/pipeline headroom
    act_budget = max(cap // 3, 8 << 20)

    block_b = 1                                    # sequences per grid step
    for cand in range(1, B + 1):
        if B % cand:
            continue
        if _activation_vmem_bytes(cand, S, H, I, n_heads) > act_budget:
            break
        block_b = cand
        if cand * S >= 512:                        # enough rows to fill the MXU M dim
            break

    est = _activation_vmem_bytes(block_b, S, H, I, n_heads)
    for cv in const_vals:
        est += 2 * _padded_vmem_bytes(cv.shape, cv.dtype)

    compiler_kwargs = dict(dimension_semantics=("parallel",))
    # Raise-threshold sits below v5e's 16 MiB default scoped limit; cap per generation.
    if est > (12 << 20):
        compiler_kwargs["vmem_limit_bytes"] = int(min(max(int(1.5 * est), 32 << 20), cap))

    kernel = make_nova_kernel(n_heads, head_dim, H, S, block_b, eps)
    grid = (B // block_b,)
    operands = (key, hidden, *const_vals)

    def build(single_buffer_consts):
        def const_spec(arr):
            nd = arr.ndim
            kw = {"pipeline_mode": pl.Buffered(1)} if single_buffer_consts else {}
            return pl.BlockSpec(arr.shape, lambda b, _nd=nd: (0,) * _nd, **kw)

        seq_spec = pl.BlockSpec((block_b, S, H), lambda b: (b, 0, 0))
        in_specs = [seq_spec, seq_spec] + [const_spec(cv) for cv in const_vals]
        return pl.pallas_call(
            kernel,
            out_shape=jax.ShapeDtypeStruct((B, S, H), key.dtype),
            grid_spec=pltpu.PrefetchScalarGridSpec(
                num_scalar_prefetch=0,
                grid=grid,
                in_specs=in_specs,
                out_specs=pl.BlockSpec((block_b, S, H), lambda b: (b, 0, 0)),
            ),
            compiler_params=pltpu.CompilerParams(**compiler_kwargs),
        )

    try:
        # Constant-index operands single-buffered (halves weight/mask VMEM residency).
        return build(True)(*operands)
    except Exception:
        # Fallback: identical kernel, default (double-buffered) pipelining.
        return build(False)(*operands)


def reference_forward(key, hidden, mask, p, *, n_heads, eps):
    """Pure-JAX f32 reference matching nn.MultiheadAttention / NovaLayer eval semantics."""
    def ln(x, g, b):
        mu = x.mean(-1, keepdims=True)
        var = ((x - mu) ** 2).mean(-1, keepdims=True)
        return (x - mu) / jnp.sqrt(var + eps) * g + b

    B, S, H = key.shape
    hd = H // n_heads
    k_ln = ln(key, p["lnk_g"], p["lnk_b"])
    v_ln = ln(hidden, p["lnv_g"], p["lnv_b"])
    q = k_ln @ p["wq_t"] + p["bq"]
    k = k_ln @ p["wk_t"] + p["bk"]
    v = v_ln @ p["wv_t"] + p["bv"]
    qh = q.reshape(B, S, n_heads, hd).transpose(0, 2, 1, 3)
    kh = k.reshape(B, S, n_heads, hd).transpose(0, 2, 1, 3)
    vh = v.reshape(B, S, n_heads, hd).transpose(0, 2, 1, 3)
    s = jnp.einsum("bhqd,bhkd->bhqk", qh, kh) / math.sqrt(hd) + mask
    pa = jax.nn.softmax(s, axis=-1)
    ctx = jnp.einsum("bhqk,bhkd->bhqd", pa, vh).transpose(0, 2, 1, 3).reshape(B, S, H)
    attn = ctx @ p["wo_t"] + p["bo"] + v_ln
    attn = ln(attn, p["lnf_g"], p["lnf_b"])
    ff = jax.nn.gelu(attn @ p["w1_t"] + p["b1"], approximate=False) @ p["w2_t"] + p["b2"]
    return ff + attn


if __name__ == "__main__":
    # Small shapes consistent with the module.
    B, S, H, I, NH = 2, 8, 32, 64, 2
    EPS = 1e-12
    rng = jax.random.PRNGKey(0)
    keys = jax.random.split(rng, 16)

    def norm(k, shape, scale=0.02):
        return (scale * jax.random.normal(k, shape)).astype(jnp.float32)

    # PyTorch parameter shapes -> pre-transposed for the kernel.
    in_proj_w = norm(keys[0], (3 * H, H))            # nn.MultiheadAttention.in_proj_weight
    in_proj_b = norm(keys[1], (3 * H,))
    out_proj_w = norm(keys[2], (H, H))
    out_proj_b = norm(keys[3], (H,))
    w1 = norm(keys[4], (I, H))                       # dense_1.weight (out, in)
    b1 = norm(keys[5], (I,))
    w2 = norm(keys[6], (H, I))                       # dense_2.weight
    b2 = norm(keys[7], (H,))

    params = {
        "lnk_g": jnp.ones((1, H), jnp.float32) + norm(keys[8], (1, H)),
        "lnk_b": norm(keys[9], (1, H)),
        "lnv_g": jnp.ones((1, H), jnp.float32) + norm(keys[10], (1, H)),
        "lnv_b": norm(keys[11], (1, H)),
        "lnf_g": jnp.ones((1, H), jnp.float32) + norm(keys[12], (1, H)),
        "lnf_b": norm(keys[13], (1, H)),
        "wq_t": in_proj_w[0:H, :].T, "wk_t": in_proj_w[H:2 * H, :].T, "wv_t": in_proj_w[2 * H:, :].T,
        "bq": in_proj_b[0:H].reshape(1, H), "bk": in_proj_b[H:2 * H].reshape(1, H),
        "bv": in_proj_b[2 * H:].reshape(1, H),
        "wo_t": out_proj_w.T, "bo": out_proj_b.reshape(1, H),
        "w1_t": w1.T, "b1": b1.reshape(1, I),
        "w2_t": w2.T, "b2": b2.reshape(1, H),
    }

    key_in = jax.random.normal(keys[14], (B, S, H), jnp.float32)
    hidden_in = jax.random.normal(keys[15], (B, S, H), jnp.float32)
    # Float additive attention mask (causal): 0 where allowed, -1e9 where masked.
    causal = jnp.tril(jnp.ones((S, S), jnp.float32))
    attn_mask = jnp.where(causal > 0, 0.0, -1e9).astype(jnp.float32)

    out = nova_layer_forward(key_in, hidden_in, attn_mask, params, n_heads=NH, eps=EPS)
    out = jax.block_until_ready(out)

    ref = reference_forward(key_in, hidden_in, attn_mask, params, n_heads=NH, eps=EPS)
    assert out.shape == (B, S, H)
    # bf16 MXU operands + approx reciprocal -> relaxed (but still tight) tolerance vs f32 ref.
    assert bool(jnp.allclose(out, ref, atol=2e-2, rtol=2e-2)), "mismatch vs JAX reference"
    print("KERNEL_OK")
</pallas_src>

<mosaic_0001>
module attributes {stable_mosaic.version = 11 : i64} {
  func.func @kernel(%arg0: i32, %arg1: memref<2x8x32xf32, #tpu.memory_space<vmem>>, %arg2: memref<2x8x32xf32, #tpu.memory_space<vmem>>, %arg3: memref<8x8xf32, #tpu.memory_space<vmem>>, %arg4: memref<9x32xf32, #tpu.memory_space<vmem>>, %arg5: memref<1x64xf32, #tpu.memory_space<vmem>>, %arg6: memref<1x64xf32, #tpu.memory_space<vmem>>, %arg7: memref<32x64xbf16, #tpu.memory_space<vmem>>, %arg8: memref<32x32xbf16, #tpu.memory_space<vmem>>, %arg9: memref<32x32xbf16, #tpu.memory_space<vmem>>, %arg10: memref<32x64xbf16, #tpu.memory_space<vmem>>, %arg11: memref<64x32xbf16, #tpu.memory_space<vmem>>, %arg12: memref<2x8x32xf32, #tpu.memory_space<vmem>>) attributes {dimension_semantics = [#tpu.dimension_semantics<parallel>], iteration_bounds = array<i64: 1>, scalar_prefetch = 0 : i64, scratch_operands = 0 : i64, tpu.core_type = #tpu.core_type<tc>, window_params = [{transform_indices = @transform_0, window_bounds = array<i64: 2, 8, 32>}, {transform_indices = @transform_1, window_bounds = array<i64: 2, 8, 32>}, {pipeline_mode = #tpu.pipeline_mode<synchronous>, transform_indices = @transform_2, window_bounds = array<i64: 8, 8>}, {pipeline_mode = #tpu.pipeline_mode<synchronous>, transform_indices = @transform_3, window_bounds = array<i64: 9, 32>}, {pipeline_mode = #tpu.pipeline_mode<synchronous>, transform_indices = @transform_4, window_bounds = array<i64: 1, 64>}, {pipeline_mode = #tpu.pipeline_mode<synchronous>, transform_indices = @transform_5, window_bounds = array<i64: 1, 64>}, {pipeline_mode = #tpu.pipeline_mode<synchronous>, transform_indices = @transform_6, window_bounds = array<i64: 32, 64>}, {pipeline_mode = #tpu.pipeline_mode<synchronous>, transform_indices = @transform_7, window_bounds = array<i64: 32, 32>}, {pipeline_mode = #tpu.pipeline_mode<synchronous>, transform_indices = @transform_8, window_bounds = array<i64: 32, 32>}, {pipeline_mode = #tpu.pipeline_mode<synchronous>, transform_indices = @transform_9, window_bounds = array<i64: 32, 64>}, {pipeline_mode = #tpu.pipeline_mode<synchronous>, transform_indices = @transform_10, window_bounds = array<i64: 64, 32>}, {transform_indices = @transform_11, window_bounds = array<i64: 2, 8, 32>}]} {
    %c0 = arith.constant 0 : index
    %c0_0 = arith.constant 0 : index
    %c0_1 = arith.constant 0 : index
    %0 = vector.load %arg1[%c0, %c0_0, %c0_1] : memref<2x8x32xf32, #tpu.memory_space<vmem>>, vector<2x8x32xf32>
    %1 = vector.shape_cast %0 : vector<2x8x32xf32> to vector<16x32xf32>
    %c0_2 = arith.constant 0 : index
    %c0_3 = arith.constant 0 : index
    %c0_4 = arith.constant 0 : index
    %2 = vector.load %arg2[%c0_2, %c0_3, %c0_4] : memref<2x8x32xf32, #tpu.memory_space<vmem>>, vector<2x8x32xf32>
    %3 = vector.shape_cast %2 : vector<2x8x32xf32> to vector<16x32xf32>
    %c0_5 = arith.constant 0 : index
    %c0_6 = arith.constant 0 : index
    %4 = vector.load %arg3[%c0_5, %c0_6] : memref<8x8xf32, #tpu.memory_space<vmem>>, vector<8x8xf32>
    %c0_7 = arith.constant 0 : index
    %c0_8 = arith.constant 0 : index
    %5 = vector.load %arg4[%c0_7, %c0_8] : memref<9x32xf32, #tpu.memory_space<vmem>>, vector<9x32xf32>
    %6 = vector.extract_strided_slice %5 {offsets = [0, 0], sizes = [1, 32], strides = [1, 1]} : vector<9x32xf32> to vector<1x32xf32>
    %7 = vector.extract_strided_slice %5 {offsets = [1, 0], sizes = [1, 32], strides = [1, 1]} : vector<9x32xf32> to vector<1x32xf32>
    %8 = vector.extract_strided_slice %5 {offsets = [2, 0], sizes = [1, 32], strides = [1, 1]} : vector<9x32xf32> to vector<1x32xf32>
    %9 = vector.extract_strided_slice %5 {offsets = [3, 0], sizes = [1, 32], strides = [1, 1]} : vector<9x32xf32> to vector<1x32xf32>
    %10 = vector.extract_strided_slice %5 {offsets = [4, 0], sizes = [1, 32], strides = [1, 1]} : vector<9x32xf32> to vector<1x32xf32>
    %11 = vector.extract_strided_slice %5 {offsets = [5, 0], sizes = [1, 32], strides = [1, 1]} : vector<9x32xf32> to vector<1x32xf32>
    %12 = vector.extract_strided_slice %5 {offsets = [6, 0], sizes = [1, 32], strides = [1, 1]} : vector<9x32xf32> to vector<1x32xf32>
    %13 = vector.extract_strided_slice %5 {offsets = [7, 0], sizes = [1, 32], strides = [1, 1]} : vector<9x32xf32> to vector<1x32xf32>
    %14 = vector.extract_strided_slice %5 {offsets = [8, 0], sizes = [1, 32], strides = [1, 1]} : vector<9x32xf32> to vector<1x32xf32>
    %cst = arith.constant dense<0.000000e+00> : vector<16xf32>
    %15 = vector.multi_reduction <add>, %1, %cst [1] : vector<16x32xf32> to vector<16xf32>
    %16 = vector.shape_cast %15 : vector<16xf32> to vector<16x1xf32>
    %cst_9 = arith.constant 3.200000e+01 : f32
    %17 = vector.broadcast %cst_9 : f32 to vector<16x1xf32>
    %18 = arith.divf %16, %17 : vector<16x1xf32>
    %19 = vector.broadcast %18 : vector<16x1xf32> to vector<16x32xf32>
    %20 = arith.subf %1, %19 : vector<16x32xf32>
    %21 = arith.mulf %20, %20 : vector<16x32xf32>
    %cst_10 = arith.constant dense<0.000000e+00> : vector<16xf32>
    %22 = vector.multi_reduction <add>, %21, %cst_10 [1] : vector<16x32xf32> to vector<16xf32>
    %23 = vector.shape_cast %22 : vector<16xf32> to vector<16x1xf32>
    %cst_11 = arith.constant 3.200000e+01 : f32
    %24 = vector.broadcast %cst_11 : f32 to vector<16x1xf32>
    %25 = arith.divf %23, %24 : vector<16x1xf32>
    %26 = vector.broadcast %18 : vector<16x1xf32> to vector<16x32xf32>
    %27 = arith.subf %1, %26 : vector<16x32xf32>
    %cst_12 = arith.constant 9.99999996E-13 : f32
    %28 = vector.broadcast %cst_12 : f32 to vector<16x1xf32>
    %29 = arith.addf %25, %28 : vector<16x1xf32>
    %30 = math.rsqrt %29 : vector<16x1xf32>
    %31 = vector.broadcast %30 : vector<16x1xf32> to vector<16x32xf32>
    %32 = arith.mulf %27, %31 : vector<16x32xf32>
    %33 = vector.broadcast %6 : vector<1x32xf32> to vector<16x32xf32>
    %34 = arith.mulf %32, %33 : vector<16x32xf32>
    %35 = vector.broadcast %7 : vector<1x32xf32> to vector<16x32xf32>
    %36 = arith.addf %34, %35 : vector<16x32xf32>
    %cst_13 = arith.constant dense<0.000000e+00> : vector<16xf32>
    %37 = vector.multi_reduction <add>, %3, %cst_13 [1] : vector<16x32xf32> to vector<16xf32>
    %38 = vector.shape_cast %37 : vector<16xf32> to vector<16x1xf32>
    %cst_14 = arith.constant 3.200000e+01 : f32
    %39 = vector.broadcast %cst_14 : f32 to vector<16x1xf32>
    %40 = arith.divf %38, %39 : vector<16x1xf32>
    %41 = vector.broadcast %40 : vector<16x1xf32> to vector<16x32xf32>
    %42 = arith.subf %3, %41 : vector<16x32xf32>
    %43 = arith.mulf %42, %42 : vector<16x32xf32>
    %cst_15 = arith.constant dense<0.000000e+00> : vector<16xf32>
    %44 = vector.multi_reduction <add>, %43, %cst_15 [1] : vector<16x32xf32> to vector<16xf32>
    %45 = vector.shape_cast %44 : vector<16xf32> to vector<16x1xf32>
    %cst_16 = arith.constant 3.200000e+01 : f32
    %46 = vector.broadcast %cst_16 : f32 to vector<16x1xf32>
    %47 = arith.divf %45, %46 : vector<16x1xf32>
    %48 = vector.broadcast %40 : vector<16x1xf32> to vector<16x32xf32>
    %49 = arith.subf %3, %48 : vector<16x32xf32>
    %cst_17 = arith.constant 9.99999996E-13 : f32
    %50 = vector.broadcast %cst_17 : f32 to vector<16x1xf32>
    %51 = arith.addf %47, %50 : vector<16x1xf32>
    %52 = math.rsqrt %51 : vector<16x1xf32>
    %53 = vector.broadcast %52 : vector<16x1xf32> to vector<16x32xf32>
    %54 = arith.mulf %49, %53 : vector<16x32xf32>
    %55 = vector.broadcast %8 : vector<1x32xf32> to vector<16x32xf32>
    %56 = arith.mulf %54, %55 : vector<16x32xf32>
    %57 = vector.broadcast %9 : vector<1x32xf32> to vector<16x32xf32>
    %58 = arith.addf %56, %57 : vector<16x32xf32>
    %59 = arith.truncf %36 : vector<16x32xf32> to vector<16x32xbf16>
    %c0_18 = arith.constant 0 : index
    %c0_19 = arith.constant 0 : index
    %60 = vector.load %arg7[%c0_18, %c0_19] : memref<32x64xbf16, #tpu.memory_space<vmem>>, vector<32x64xbf16>
    %cst_20 = arith.constant dense<0.000000e+00> : vector<16x64xf32>
    %61 = tpu.matmul %59, %60, %cst_20 {dimension_numbers = #tpu.dot_dimension_numbers<[1], [0], [0], [1], [0, 0, 1, 1], [], []>} : vector<16x32xbf16>, vector<32x64xbf16>, vector<16x64xf32> -> vector<16x64xf32>
    %c0_21 = arith.constant 0 : index
    %c0_22 = arith.constant 0 : index
    %62 = vector.load %arg5[%c0_21, %c0_22] : memref<1x64xf32, #tpu.memory_space<vmem>>, vector<1x64xf32>
    %63 = vector.broadcast %62 : vector<1x64xf32> to vector<16x64xf32>
    %64 = arith.addf %61, %63 : vector<16x64xf32>
    %65 = arith.truncf %58 : vector<16x32xf32> to vector<16x32xbf16>
    %c0_23 = arith.constant 0 : index
    %c0_24 = arith.constant 0 : index
    %66 = vector.load %arg8[%c0_23, %c0_24] : memref<32x32xbf16, #tpu.memory_space<vmem>>, vector<32x32xbf16>
    %cst_25 = arith.constant dense<0.000000e+00> : vector<16x32xf32>
    %67 = tpu.matmul %65, %66, %cst_25 {dimension_numbers = #tpu.dot_dimension_numbers<[1], [0], [0], [1], [0, 0, 1, 1], [], []>} : vector<16x32xbf16>, vector<32x32xbf16>, vector<16x32xf32> -> vector<16x32xf32>
    %68 = vector.broadcast %12 : vector<1x32xf32> to vector<16x32xf32>
    %69 = arith.addf %67, %68 : vector<16x32xf32>
    %70 = vector.extract_strided_slice %64 {offsets = [0, 0], sizes = [16, 32], strides = [1, 1]} : vector<16x64xf32> to vector<16x32xf32>
    %71 = arith.truncf %70 : vector<16x32xf32> to vector<16x32xbf16>
    %72 = vector.extract_strided_slice %64 {offsets = [0, 32], sizes = [16, 32], strides = [1, 1]} : vector<16x64xf32> to vector<16x32xf32>
    %73 = arith.truncf %72 : vector<16x32xf32> to vector<16x32xbf16>
    %74 = arith.truncf %69 : vector<16x32xf32> to vector<16x32xbf16>
    %75 = vector.extract_strided_slice %71 {offsets = [0, 0], sizes = [8, 32], strides = [1, 1]} : vector<16x32xbf16> to vector<8x32xbf16>
    %76 = vector.extract_strided_slice %73 {offsets = [0, 0], sizes = [8, 32], strides = [1, 1]} : vector<16x32xbf16> to vector<8x32xbf16>
    %77 = vector.extract_strided_slice %74 {offsets = [0, 0], sizes = [8, 32], strides = [1, 1]} : vector<16x32xbf16> to vector<8x32xbf16>
    %78 = vector.extract_strided_slice %75 {offsets = [0, 0], sizes = [8, 16], strides = [1, 1]} : vector<8x32xbf16> to vector<8x16xbf16>
    %79 = vector.extract_strided_slice %75 {offsets = [0, 16], sizes = [8, 16], strides = [1, 1]} : vector<8x32xbf16> to vector<8x16xbf16>
    %80 = vector.shape_cast %78 : vector<8x16xbf16> to vector<1x8x16xbf16>
    %81 = vector.shape_cast %79 : vector<8x16xbf16> to vector<1x8x16xbf16>
    %82 = tpu.concatenate %80, %81 in 0 : vector<1x8x16xbf16>, vector<1x8x16xbf16> -> vector<2x8x16xbf16>
    %83 = vector.extract_strided_slice %76 {offsets = [0, 0], sizes = [8, 16], strides = [1, 1]} : vector<8x32xbf16> to vector<8x16xbf16>
    %84 = vector.extract_strided_slice %76 {offsets = [0, 16], sizes = [8, 16], strides = [1, 1]} : vector<8x32xbf16> to vector<8x16xbf16>
    %85 = vector.shape_cast %83 : vector<8x16xbf16> to vector<1x8x16xbf16>
    %86 = vector.shape_cast %84 : vector<8x16xbf16> to vector<1x8x16xbf16>
    %87 = tpu.concatenate %85, %86 in 0 : vector<1x8x16xbf16>, vector<1x8x16xbf16> -> vector<2x8x16xbf16>
    %88 = vector.extract_strided_slice %77 {offsets = [0, 0], sizes = [8, 16], strides = [1, 1]} : vector<8x32xbf16> to vector<8x16xbf16>
    %89 = vector.extract_strided_slice %77 {offsets = [0, 16], sizes = [8, 16], strides = [1, 1]} : vector<8x32xbf16> to vector<8x16xbf16>
    %90 = vector.shape_cast %88 : vector<8x16xbf16> to vector<1x8x16xbf16>
    %91 = vector.shape_cast %89 : vector<8x16xbf16> to vector<1x8x16xbf16>
    %92 = tpu.concatenate %90, %91 in 0 : vector<1x8x16xbf16>, vector<1x8x16xbf16> -> vector<2x8x16xbf16>
    "tpu.trace_start"() <{level = 10 : i32, message = "hqd,hkd->hqk"}> : () -> ()
    %cst_26 = arith.constant dense<0.000000e+00> : vector<2x8x8xf32>
    %93 = tpu.matmul %82, %87, %cst_26 {dimension_numbers = #tpu.dot_dimension_numbers<[2], [2], [1], [1], [0, 0, 0, 1, 1, 1], [0], [0]>} : vector<2x8x16xbf16>, vector<2x8x16xbf16>, vector<2x8x8xf32> -> vector<2x8x8xf32>
    "tpu.trace_stop"() : () -> ()
    %94 = vector.shape_cast %4 : vector<8x8xf32> to vector<1x8x8xf32>
    %95 = vector.broadcast %94 : vector<1x8x8xf32> to vector<2x8x8xf32>
    %96 = arith.addf %93, %95 : vector<2x8x8xf32>
    %cst_27 = arith.constant dense<0xFF800000> : vector<2x8xf32>
    %97 = vector.multi_reduction <maximumf>, %96, %cst_27 [2] : vector<2x8x8xf32> to vector<2x8xf32>
    %98 = vector.shape_cast %97 : vector<2x8xf32> to vector<2x8x1xf32>
    %99 = vector.broadcast %98 : vector<2x8x1xf32> to vector<2x8x8xf32>
    %100 = arith.subf %96, %99 : vector<2x8x8xf32>
    %101 = math.exp %100 : vector<2x8x8xf32>
    %cst_28 = arith.constant dense<0.000000e+00> : vector<2x8xf32>
    %102 = vector.multi_reduction <add>, %101, %cst_28 [2] : vector<2x8x8xf32> to vector<2x8xf32>
    %103 = vector.shape_cast %102 : vector<2x8xf32> to vector<2x8x1xf32>
    %104 = tpu.reciprocal %103 {approx = true} : vector<2x8x1xf32> -> vector<2x8x1xf32>
    %105 = vector.broadcast %104 : vector<2x8x1xf32> to vector<2x8x8xf32>
    %106 = arith.mulf %101, %105 : vector<2x8x8xf32>
    %107 = arith.truncf %106 : vector<2x8x8xf32> to vector<2x8x8xbf16>
    "tpu.trace_start"() <{level = 10 : i32, message = "hqk,hkd->hqd"}> : () -> ()
    %cst_29 = arith.constant dense<0.000000e+00> : vector<2x8x16xf32>
    %108 = tpu.matmul %107, %92, %cst_29 {dimension_numbers = #tpu.dot_dimension_numbers<[2], [1], [1], [2], [0, 0, 0, 1, 1, 2], [0], [0]>} : vector<2x8x8xbf16>, vector<2x8x16xbf16>, vector<2x8x16xf32> -> vector<2x8x16xf32>
    "tpu.trace_stop"() : () -> ()
    %109 = vector.extract_strided_slice %108 {offsets = [0, 0, 0], sizes = [1, 8, 16], strides = [1, 1, 1]} : vector<2x8x16xf32> to vector<1x8x16xf32>
    %110 = vector.shape_cast %109 : vector<1x8x16xf32> to vector<8x16xf32>
    %111 = vector.extract_strided_slice %108 {offsets = [1, 0, 0], sizes = [1, 8, 16], strides = [1, 1, 1]} : vector<2x8x16xf32> to vector<1x8x16xf32>
    %112 = vector.shape_cast %111 : vector<1x8x16xf32> to vector<8x16xf32>
    %113 = tpu.concatenate %110, %112 in 1 : vector<8x16xf32>, vector<8x16xf32> -> vector<8x32xf32>
    %114 = vector.extract_strided_slice %71 {offsets = [8, 0], sizes = [8, 32], strides = [1, 1]} : vector<16x32xbf16> to vector<8x32xbf16>
    %115 = vector.extract_strided_slice %73 {offsets = [8, 0], sizes = [8, 32], strides = [1, 1]} : vector<16x32xbf16> to vector<8x32xbf16>
    %116 = vector.extract_strided_slice %74 {offsets = [8, 0], sizes = [8, 32], strides = [1, 1]} : vector<16x32xbf16> to vector<8x32xbf16>
    %117 = vector.extract_strided_slice %114 {offsets = [0, 0], sizes = [8, 16], strides = [1, 1]} : vector<8x32xbf16> to vector<8x16xbf16>
    %118 = vector.extract_strided_slice %114 {offsets = [0, 16], sizes = [8, 16], strides = [1, 1]} : vector<8x32xbf16> to vector<8x16xbf16>
    %119 = vector.shape_cast %117 : vector<8x16xbf16> to vector<1x8x16xbf16>
    %120 = vector.shape_cast %118 : vector<8x16xbf16> to vector<1x8x16xbf16>
    %121 = tpu.concatenate %119, %120 in 0 : vector<1x8x16xbf16>, vector<1x8x16xbf16> -> vector<2x8x16xbf16>
    %122 = vector.extract_strided_slice %115 {offsets = [0, 0], sizes = [8, 16], strides = [1, 1]} : vector<8x32xbf16> to vector<8x16xbf16>
    %123 = vector.extract_strided_slice %115 {offsets = [0, 16], sizes = [8, 16], strides = [1, 1]} : vector<8x32xbf16> to vector<8x16xbf16>
    %124 = vector.shape_cast %122 : vector<8x16xbf16> to vector<1x8x16xbf16>
    %125 = vector.shape_cast %123 : vector<8x16xbf16> to vector<1x8x16xbf16>
    %126 = tpu.concatenate %124, %125 in 0 : vector<1x8x16xbf16>, vector<1x8x16xbf16> -> vector<2x8x16xbf16>
    %127 = vector.extract_strided_slice %116 {offsets = [0, 0], sizes = [8, 16], strides = [1, 1]} : vector<8x32xbf16> to vector<8x16xbf16>
    %128 = vector.extract_strided_slice %116 {offsets = [0, 16], sizes = [8, 16], strides = [1, 1]} : vector<8x32xbf16> to vector<8x16xbf16>
    %129 = vector.shape_cast %127 : vector<8x16xbf16> to vector<1x8x16xbf16>
    %130 = vector.shape_cast %128 : vector<8x16xbf16> to vector<1x8x16xbf16>
    %131 = tpu.concatenate %129, %130 in 0 : vector<1x8x16xbf16>, vector<1x8x16xbf16> -> vector<2x8x16xbf16>
    "tpu.trace_start"() <{level = 10 : i32, message = "hqd,hkd->hqk"}> : () -> ()
    %cst_30 = arith.constant dense<0.000000e+00> : vector<2x8x8xf32>
    %132 = tpu.matmul %121, %126, %cst_30 {dimension_numbers = #tpu.dot_dimension_numbers<[2], [2], [1], [1], [0, 0, 0, 1, 1, 1], [0], [0]>} : vector<2x8x16xbf16>, vector<2x8x16xbf16>, vector<2x8x8xf32> -> vector<2x8x8xf32>
    "tpu.trace_stop"() : () -> ()
    %133 = vector.shape_cast %4 : vector<8x8xf32> to vector<1x8x8xf32>
    %134 = vector.broadcast %133 : vector<1x8x8xf32> to vector<2x8x8xf32>
    %135 = arith.addf %132, %134 : vector<2x8x8xf32>
    %cst_31 = arith.constant dense<0xFF800000> : vector<2x8xf32>
    %136 = vector.multi_reduction <maximumf>, %135, %cst_31 [2] : vector<2x8x8xf32> to vector<2x8xf32>
    %137 = vector.shape_cast %136 : vector<2x8xf32> to vector<2x8x1xf32>
    %138 = vector.broadcast %137 : vector<2x8x1xf32> to vector<2x8x8xf32>
    %139 = arith.subf %135, %138 : vector<2x8x8xf32>
    %140 = math.exp %139 : vector<2x8x8xf32>
    %cst_32 = arith.constant dense<0.000000e+00> : vector<2x8xf32>
    %141 = vector.multi_reduction <add>, %140, %cst_32 [2] : vector<2x8x8xf32> to vector<2x8xf32>
    %142 = vector.shape_cast %141 : vector<2x8xf32> to vector<2x8x1xf32>
    %143 = tpu.reciprocal %142 {approx = true} : vector<2x8x1xf32> -> vector<2x8x1xf32>
    %144 = vector.broadcast %143 : vector<2x8x1xf32> to vector<2x8x8xf32>
    %145 = arith.mulf %140, %144 : vector<2x8x8xf32>
    %146 = arith.truncf %145 : vector<2x8x8xf32> to vector<2x8x8xbf16>
    "tpu.trace_start"() <{level = 10 : i32, message = "hqk,hkd->hqd"}> : () -> ()
    %cst_33 = arith.constant dense<0.000000e+00> : vector<2x8x16xf32>
    %147 = tpu.matmul %146, %131, %cst_33 {dimension_numbers = #tpu.dot_dimension_numbers<[2], [1], [1], [2], [0, 0, 0, 1, 1, 2], [0], [0]>} : vector<2x8x8xbf16>, vector<2x8x16xbf16>, vector<2x8x16xf32> -> vector<2x8x16xf32>
    "tpu.trace_stop"() : () -> ()
    %148 = vector.extract_strided_slice %147 {offsets = [0, 0, 0], sizes = [1, 8, 16], strides = [1, 1, 1]} : vector<2x8x16xf32> to vector<1x8x16xf32>
    %149 = vector.shape_cast %148 : vector<1x8x16xf32> to vector<8x16xf32>
    %150 = vector.extract_strided_slice %147 {offsets = [1, 0, 0], sizes = [1, 8, 16], strides = [1, 1, 1]} : vector<2x8x16xf32> to vector<1x8x16xf32>
    %151 = vector.shape_cast %150 : vector<1x8x16xf32> to vector<8x16xf32>
    %152 = tpu.concatenate %149, %151 in 1 : vector<8x16xf32>, vector<8x16xf32> -> vector<8x32xf32>
    %153 = tpu.concatenate %113, %152 in 0 : vector<8x32xf32>, vector<8x32xf32> -> vector<16x32xf32>
    %154 = arith.truncf %153 : vector<16x32xf32> to vector<16x32xbf16>
    %c0_34 = arith.constant 0 : index
    %c0_35 = arith.constant 0 : index
    %155 = vector.load %arg9[%c0_34, %c0_35] : memref<32x32xbf16, #tpu.memory_space<vmem>>, vector<32x32xbf16>
    %cst_36 = arith.constant dense<0.000000e+00> : vector<16x32xf32>
    %156 = tpu.matmul %154, %155, %cst_36 {dimension_numbers = #tpu.dot_dimension_numbers<[1], [0], [0], [1], [0, 0, 1, 1], [], []>} : vector<16x32xbf16>, vector<32x32xbf16>, vector<16x32xf32> -> vector<16x32xf32>
    %157 = vector.broadcast %13 : vector<1x32xf32> to vector<16x32xf32>
    %158 = arith.addf %156, %157 : vector<16x32xf32>
    %159 = arith.addf %158, %58 : vector<16x32xf32>
    %cst_37 = arith.constant dense<0.000000e+00> : vector<16xf32>
    %160 = vector.multi_reduction <add>, %159, %cst_37 [1] : vector<16x32xf32> to vector<16xf32>
    %161 = vector.shape_cast %160 : vector<16xf32> to vector<16x1xf32>
    %cst_38 = arith.constant 3.200000e+01 : f32
    %162 = vector.broadcast %cst_38 : f32 to vector<16x1xf32>
    %163 = arith.divf %161, %162 : vector<16x1xf32>
    %164 = vector.broadcast %163 : vector<16x1xf32> to vector<16x32xf32>
    %165 = arith.subf %159, %164 : vector<16x32xf32>
    %166 = arith.mulf %165, %165 : vector<16x32xf32>
    %cst_39 = arith.constant dense<0.000000e+00> : vector<16xf32>
    %167 = vector.multi_reduction <add>, %166, %cst_39 [1] : vector<16x32xf32> to vector<16xf32>
    %168 = vector.shape_cast %167 : vector<16xf32> to vector<16x1xf32>
    %cst_40 = arith.constant 3.200000e+01 : f32
    %169 = vector.broadcast %cst_40 : f32 to vector<16x1xf32>
    %170 = arith.divf %168, %169 : vector<16x1xf32>
    %171 = vector.broadcast %163 : vector<16x1xf32> to vector<16x32xf32>
    %172 = arith.subf %159, %171 : vector<16x32xf32>
    %cst_41 = arith.constant 9.99999996E-13 : f32
    %173 = vector.broadcast %cst_41 : f32 to vector<16x1xf32>
    %174 = arith.addf %170, %173 : vector<16x1xf32>
    %175 = math.rsqrt %174 : vector<16x1xf32>
    %176 = vector.broadcast %175 : vector<16x1xf32> to vector<16x32xf32>
    %177 = arith.mulf %172, %176 : vector<16x32xf32>
    %178 = vector.broadcast %10 : vector<1x32xf32> to vector<16x32xf32>
    %179 = arith.mulf %177, %178 : vector<16x32xf32>
    %180 = vector.broadcast %11 : vector<1x32xf32> to vector<16x32xf32>
    %181 = arith.addf %179, %180 : vector<16x32xf32>
    %182 = arith.truncf %181 : vector<16x32xf32> to vector<16x32xbf16>
    %c0_42 = arith.constant 0 : index
    %c0_43 = arith.constant 0 : index
    %183 = vector.load %arg10[%c0_42, %c0_43] : memref<32x64xbf16, #tpu.memory_space<vmem>>, vector<32x64xbf16>
    %cst_44 = arith.constant dense<0.000000e+00> : vector<16x64xf32>
    %184 = tpu.matmul %182, %183, %cst_44 {dimension_numbers = #tpu.dot_dimension_numbers<[1], [0], [0], [1], [0, 0, 1, 1], [], []>} : vector<16x32xbf16>, vector<32x64xbf16>, vector<16x64xf32> -> vector<16x64xf32>
    %c0_45 = arith.constant 0 : index
    %c0_46 = arith.constant 0 : index
    %185 = vector.load %arg6[%c0_45, %c0_46] : memref<1x64xf32, #tpu.memory_space<vmem>>, vector<1x64xf32>
    %186 = vector.broadcast %185 : vector<1x64xf32> to vector<16x64xf32>
    %187 = arith.addf %184, %186 : vector<16x64xf32>
    %cst_47 = arith.constant 5.000000e-01 : f32
    %188 = vector.broadcast %cst_47 : f32 to vector<16x64xf32>
    %189 = arith.mulf %187, %188 : vector<16x64xf32>
    %cst_48 = arith.constant 0.707106769 : f32
    %190 = vector.broadcast %cst_48 : f32 to vector<16x64xf32>
    %191 = arith.mulf %187, %190 : vector<16x64xf32>
    %192 = math.erf %191 : vector<16x64xf32>
    %cst_49 = arith.constant 1.000000e+00 : f32
    %193 = vector.broadcast %cst_49 : f32 to vector<16x64xf32>
    %194 = arith.addf %193, %192 : vector<16x64xf32>
    %195 = arith.mulf %189, %194 : vector<16x64xf32>
    %196 = arith.truncf %195 : vector<16x64xf32> to vector<16x64xbf16>
    %c0_50 = arith.constant 0 : index
    %c0_51 = arith.constant 0 : index
    %197 = vector.load %arg11[%c0_50, %c0_51] : memref<64x32xbf16, #tpu.memory_space<vmem>>, vector<64x32xbf16>
    %cst_52 = arith.constant dense<0.000000e+00> : vector<16x32xf32>
    %198 = tpu.matmul %196, %197, %cst_52 {dimension_numbers = #tpu.dot_dimension_numbers<[1], [0], [0], [1], [0, 0, 1, 1], [], []>} : vector<16x64xbf16>, vector<64x32xbf16>, vector<16x32xf32> -> vector<16x32xf32>
    %199 = vector.broadcast %14 : vector<1x32xf32> to vector<16x32xf32>
    %200 = arith.addf %198, %199 : vector<16x32xf32>
    %201 = arith.addf %200, %181 : vector<16x32xf32>
    %202 = vector.shape_cast %201 : vector<16x32xf32> to vector<2x8x32xf32>
    %c0_53 = arith.constant 0 : index
    %c0_54 = arith.constant 0 : index
    %c0_55 = arith.constant 0 : index
    %203 = vector.load %arg12[%c0_53, %c0_54, %c0_55] : memref<2x8x32xf32, #tpu.memory_space<vmem>>, vector<2x8x32xf32>
    tpu.vector_store %arg12[%c0_53, %c0_54, %c0_55], %202 {strides = array<i32>} : memref<2x8x32xf32, #tpu.memory_space<vmem>>, vector<2x8x32xf32>,
    return
  }
  func.func @transform_0(%arg0: i32) -> (i32, i32, i32) {
    %c0_i32 = arith.constant 0 : i32
    %c0_i32_0 = arith.constant 0 : i32
    %c0_i32_1 = arith.constant 0 : i32
    return %arg0, %c0_i32, %c0_i32_0 : i32, i32, i32
  }
  func.func @transform_1(%arg0: i32) -> (i32, i32, i32) {
    %c0_i32 = arith.constant 0 : i32
    %c0_i32_0 = arith.constant 0 : i32
    %c0_i32_1 = arith.constant 0 : i32
    return %arg0, %c0_i32, %c0_i32_0 : i32, i32, i32
  }
  func.func @transform_2(%arg0: i32) -> (i32, i32) {
    %c0_i32 = arith.constant 0 : i32
    %c0_i32_0 = arith.constant 0 : i32
    %c0_i32_1 = arith.constant 0 : i32
    return %c0_i32, %c0_i32_0 : i32, i32
  }
  func.func @transform_3(%arg0: i32) -> (i32, i32) {
    %c0_i32 = arith.constant 0 : i32
    %c0_i32_0 = arith.constant 0 : i32
    %c0_i32_1 = arith.constant 0 : i32
    return %c0_i32, %c0_i32_0 : i32, i32
  }
  func.func @transform_4(%arg0: i32) -> (i32, i32) {
    %c0_i32 = arith.constant 0 : i32
    %c0_i32_0 = arith.constant 0 : i32
    %c0_i32_1 = arith.constant 0 : i32
    return %c0_i32, %c0_i32_0 : i32, i32
  }
  func.func @transform_5(%arg0: i32) -> (i32, i32) {
    %c0_i32 = arith.constant 0 : i32
    %c0_i32_0 = arith.constant 0 : i32
    %c0_i32_1 = arith.constant 0 : i32
    return %c0_i32, %c0_i32_0 : i32, i32
  }
  func.func @transform_6(%arg0: i32) -> (i32, i32) {
    %c0_i32 = arith.constant 0 : i32
    %c0_i32_0 = arith.constant 0 : i32
    %c0_i32_1 = arith.constant 0 : i32
    return %c0_i32, %c0_i32_0 : i32, i32
  }
  func.func @transform_7(%arg0: i32) -> (i32, i32) {
    %c0_i32 = arith.constant 0 : i32
    %c0_i32_0 = arith.constant 0 : i32
    %c0_i32_1 = arith.constant 0 : i32
    return %c0_i32, %c0_i32_0 : i32, i32
  }
  func.func @transform_8(%arg0: i32) -> (i32, i32) {
    %c0_i32 = arith.constant 0 : i32
    %c0_i32_0 = arith.constant 0 : i32
    %c0_i32_1 = arith.constant 0 : i32
    return %c0_i32, %c0_i32_0 : i32, i32
  }
  func.func @transform_9(%arg0: i32) -> (i32, i32) {
    %c0_i32 = arith.constant 0 : i32
    %c0_i32_0 = arith.constant 0 : i32
    %c0_i32_1 = arith.constant 0 : i32
    return %c0_i32, %c0_i32_0 : i32, i32
  }
  func.func @transform_10(%arg0: i32) -> (i32, i32) {
    %c0_i32 = arith.constant 0 : i32
    %c0_i32_0 = arith.constant 0 : i32
    %c0_i32_1 = arith.constant 0 : i32
    return %c0_i32, %c0_i32_0 : i32, i32
  }
  func.func @transform_11(%arg0: i32) -> (i32, i32, i32) {
    %c0_i32 = arith.constant 0 : i32
    %c0_i32_0 = arith.constant 0 : i32
    %c0_i32_1 = arith.constant 0 : i32
    return %arg0, %c0_i32, %c0_i32_0 : i32, i32, i32
  }
}

module attributes {stable_mosaic.version = 11 : i64} {
  func.func @kernel(%arg0: i32, %arg1: memref<2x8x32xf32, #tpu.memory_space<vmem>>, %arg2: memref<2x8x32xf32, #tpu.memory_space<vmem>>, %arg3: memref<8x8xf32, #tpu.memory_space<vmem>>, %arg4: memref<9x32xf32, #tpu.memory_space<vmem>>, %arg5: memref<1x64xf32, #tpu.memory_space<vmem>>, %arg6: memref<1x64xf32, #tpu.memory_space<vmem>>, %arg7: memref<32x64xbf16, #tpu.memory_space<vmem>>, %arg8: memref<32x32xbf16, #tpu.memory_space<vmem>>, %arg9: memref<32x32xbf16, #tpu.memory_space<vmem>>, %arg10: memref<32x64xbf16, #tpu.memory_space<vmem>>, %arg11: memref<64x32xbf16, #tpu.memory_space<vmem>>, %arg12: memref<2x8x32xf32, #tpu.memory_space<vmem>>) attributes {dimension_semantics = [#tpu.dimension_semantics<parallel>], iteration_bounds = array<i64: 1>, scalar_prefetch = 0 : i64, scratch_operands = 0 : i64, tpu.core_type = #tpu.core_type<tc>, window_params = [{transform_indices = @transform_0, window_bounds = array<i64: 2, 8, 32>}, {transform_indices = @transform_1, window_bounds = array<i64: 2, 8, 32>}, {pipeline_mode = #tpu.pipeline_mode<synchronous>, transform_indices = @transform_2, window_bounds = array<i64: 8, 8>}, {pipeline_mode = #tpu.pipeline_mode<synchronous>, transform_indices = @transform_3, window_bounds = array<i64: 9, 32>}, {pipeline_mode = #tpu.pipeline_mode<synchronous>, transform_indices = @transform_4, window_bounds = array<i64: 1, 64>}, {pipeline_mode = #tpu.pipeline_mode<synchronous>, transform_indices = @transform_5, window_bounds = array<i64: 1, 64>}, {pipeline_mode = #tpu.pipeline_mode<synchronous>, transform_indices = @transform_6, window_bounds = array<i64: 32, 64>}, {pipeline_mode = #tpu.pipeline_mode<synchronous>, transform_indices = @transform_7, window_bounds = array<i64: 32, 32>}, {pipeline_mode = #tpu.pipeline_mode<synchronous>, transform_indices = @transform_8, window_bounds = array<i64: 32, 32>}, {pipeline_mode = #tpu.pipeline_mode<synchronous>, transform_indices = @transform_9, window_bounds = array<i64: 32, 64>}, {pipeline_mode = #tpu.pipeline_mode<synchronous>, transform_indices = @transform_10, window_bounds = array<i64: 64, 32>}, {transform_indices = @transform_11, window_bounds = array<i64: 2, 8, 32>}]} {
    %c0 = arith.constant 0 : index
    %c0_0 = arith.constant 0 : index
    %c0_1 = arith.constant 0 : index
    %0 = vector.load %arg1[%c0, %c0_0, %c0_1] : memref<2x8x32xf32, #tpu.memory_space<vmem>>, vector<2x8x32xf32>
    %1 = vector.shape_cast %0 : vector<2x8x32xf32> to vector<16x32xf32>
    %c0_2 = arith.constant 0 : index
    %c0_3 = arith.constant 0 : index
    %c0_4 = arith.constant 0 : index
    %2 = vector.load %arg2[%c0_2, %c0_3, %c0_4] : memref<2x8x32xf32, #tpu.memory_space<vmem>>, vector<2x8x32xf32>
    %3 = vector.shape_cast %2 : vector<2x8x32xf32> to vector<16x32xf32>
    %c0_5 = arith.constant 0 : index
    %c0_6 = arith.constant 0 : index
    %4 = vector.load %arg3[%c0_5, %c0_6] : memref<8x8xf32, #tpu.memory_space<vmem>>, vector<8x8xf32>
    %c0_7 = arith.constant 0 : index
    %c0_8 = arith.constant 0 : index
    %5 = vector.load %arg4[%c0_7, %c0_8] : memref<9x32xf32, #tpu.memory_space<vmem>>, vector<9x32xf32>
    %6 = vector.extract_strided_slice %5 {offsets = [0, 0], sizes = [1, 32], strides = [1, 1]} : vector<9x32xf32> to vector<1x32xf32>
    %7 = vector.extract_strided_slice %5 {offsets = [1, 0], sizes = [1, 32], strides = [1, 1]} : vector<9x32xf32> to vector<1x32xf32>
    %8 = vector.extract_strided_slice %5 {offsets = [2, 0], sizes = [1, 32], strides = [1, 1]} : vector<9x32xf32> to vector<1x32xf32>
    %9 = vector.extract_strided_slice %5 {offsets = [3, 0], sizes = [1, 32], strides = [1, 1]} : vector<9x32xf32> to vector<1x32xf32>
    %10 = vector.extract_strided_slice %5 {offsets = [4, 0], sizes = [1, 32], strides = [1, 1]} : vector<9x32xf32> to vector<1x32xf32>
    %11 = vector.extract_strided_slice %5 {offsets = [5, 0], sizes = [1, 32], strides = [1, 1]} : vector<9x32xf32> to vector<1x32xf32>
    %12 = vector.extract_strided_slice %5 {offsets = [6, 0], sizes = [1, 32], strides = [1, 1]} : vector<9x32xf32> to vector<1x32xf32>
    %13 = vector.extract_strided_slice %5 {offsets = [7, 0], sizes = [1, 32], strides = [1, 1]} : vector<9x32xf32> to vector<1x32xf32>
    %14 = vector.extract_strided_slice %5 {offsets = [8, 0], sizes = [1, 32], strides = [1, 1]} : vector<9x32xf32> to vector<1x32xf32>
    %cst = arith.constant dense<0.000000e+00> : vector<16xf32>
    %15 = vector.multi_reduction <add>, %1, %cst [1] : vector<16x32xf32> to vector<16xf32>
    %16 = vector.shape_cast %15 : vector<16xf32> to vector<16x1xf32>
    %cst_9 = arith.constant 3.200000e+01 : f32
    %17 = vector.broadcast %cst_9 : f32 to vector<16x1xf32>
    %18 = arith.divf %16, %17 : vector<16x1xf32>
    %19 = vector.broadcast %18 : vector<16x1xf32> to vector<16x32xf32>
    %20 = arith.subf %1, %19 : vector<16x32xf32>
    %21 = arith.mulf %20, %20 : vector<16x32xf32>
    %cst_10 = arith.constant dense<0.000000e+00> : vector<16xf32>
    %22 = vector.multi_reduction <add>, %21, %cst_10 [1] : vector<16x32xf32> to vector<16xf32>
    %23 = vector.shape_cast %22 : vector<16xf32> to vector<16x1xf32>
    %cst_11 = arith.constant 3.200000e+01 : f32
    %24 = vector.broadcast %cst_11 : f32 to vector<16x1xf32>
    %25 = arith.divf %23, %24 : vector<16x1xf32>
    %26 = vector.broadcast %18 : vector<16x1xf32> to vector<16x32xf32>
    %27 = arith.subf %1, %26 : vector<16x32xf32>
    %cst_12 = arith.constant 9.99999996E-13 : f32
    %28 = vector.broadcast %cst_12 : f32 to vector<16x1xf32>
    %29 = arith.addf %25, %28 : vector<16x1xf32>
    %30 = math.rsqrt %29 : vector<16x1xf32>
    %31 = vector.broadcast %30 : vector<16x1xf32> to vector<16x32xf32>
    %32 = arith.mulf %27, %31 : vector<16x32xf32>
    %33 = vector.broadcast %6 : vector<1x32xf32> to vector<16x32xf32>
    %34 = arith.mulf %32, %33 : vector<16x32xf32>
    %35 = vector.broadcast %7 : vector<1x32xf32> to vector<16x32xf32>
    %36 = arith.addf %34, %35 : vector<16x32xf32>
    %cst_13 = arith.constant dense<0.000000e+00> : vector<16xf32>
    %37 = vector.multi_reduction <add>, %3, %cst_13 [1] : vector<16x32xf32> to vector<16xf32>
    %38 = vector.shape_cast %37 : vector<16xf32> to vector<16x1xf32>
    %cst_14 = arith.constant 3.200000e+01 : f32
    %39 = vector.broadcast %cst_14 : f32 to vector<16x1xf32>
    %40 = arith.divf %38, %39 : vector<16x1xf32>
    %41 = vector.broadcast %40 : vector<16x1xf32> to vector<16x32xf32>
    %42 = arith.subf %3, %41 : vector<16x32xf32>
    %43 = arith.mulf %42, %42 : vector<16x32xf32>
    %cst_15 = arith.constant dense<0.000000e+00> : vector<16xf32>
    %44 = vector.multi_reduction <add>, %43, %cst_15 [1] : vector<16x32xf32> to vector<16xf32>
    %45 = vector.shape_cast %44 : vector<16xf32> to vector<16x1xf32>
    %cst_16 = arith.constant 3.200000e+01 : f32
    %46 = vector.broadcast %cst_16 : f32 to vector<16x1xf32>
    %47 = arith.divf %45, %46 : vector<16x1xf32>
    %48 = vector.broadcast %40 : vector<16x1xf32> to vector<16x32xf32>
    %49 = arith.subf %3, %48 : vector<16x32xf32>
    %cst_17 = arith.constant 9.99999996E-13 : f32
    %50 = vector.broadcast %cst_17 : f32 to vector<16x1xf32>
    %51 = arith.addf %47, %50 : vector<16x1xf32>
    %52 = math.rsqrt %51 : vector<16x1xf32>
    %53 = vector.broadcast %52 : vector<16x1xf32> to vector<16x32xf32>
    %54 = arith.mulf %49, %53 : vector<16x32xf32>
    %55 = vector.broadcast %8 : vector<1x32xf32> to vector<16x32xf32>
    %56 = arith.mulf %54, %55 : vector<16x32xf32>
    %57 = vector.broadcast %9 : vector<1x32xf32> to vector<16x32xf32>
    %58 = arith.addf %56, %57 : vector<16x32xf32>
    %59 = arith.truncf %36 : vector<16x32xf32> to vector<16x32xbf16>
    %c0_18 = arith.constant 0 : index
    %c0_19 = arith.constant 0 : index
    %60 = vector.load %arg7[%c0_18, %c0_19] : memref<32x64xbf16, #tpu.memory_space<vmem>>, vector<32x64xbf16>
    %cst_20 = arith.constant dense<0.000000e+00> : vector<16x64xf32>
    %61 = tpu.matmul %59, %60, %cst_20 {dimension_numbers = #tpu.dot_dimension_numbers<[1], [0], [0], [1], [0, 0, 1, 1], [], []>} : vector<16x32xbf16>, vector<32x64xbf16>, vector<16x64xf32> -> vector<16x64xf32>
    %c0_21 = arith.constant 0 : index
    %c0_22 = arith.constant 0 : index
    %62 = vector.load %arg5[%c0_21, %c0_22] : memref<1x64xf32, #tpu.memory_space<vmem>>, vector<1x64xf32>
    %63 = vector.broadcast %62 : vector<1x64xf32> to vector<16x64xf32>
    %64 = arith.addf %61, %63 : vector<16x64xf32>
    %65 = arith.truncf %58 : vector<16x32xf32> to vector<16x32xbf16>
    %c0_23 = arith.constant 0 : index
    %c0_24 = arith.constant 0 : index
    %66 = vector.load %arg8[%c0_23, %c0_24] : memref<32x32xbf16, #tpu.memory_space<vmem>>, vector<32x32xbf16>
    %cst_25 = arith.constant dense<0.000000e+00> : vector<16x32xf32>
    %67 = tpu.matmul %65, %66, %cst_25 {dimension_numbers = #tpu.dot_dimension_numbers<[1], [0], [0], [1], [0, 0, 1, 1], [], []>} : vector<16x32xbf16>, vector<32x32xbf16>, vector<16x32xf32> -> vector<16x32xf32>
    %68 = vector.broadcast %12 : vector<1x32xf32> to vector<16x32xf32>
    %69 = arith.addf %67, %68 : vector<16x32xf32>
    %70 = vector.extract_strided_slice %64 {offsets = [0, 0], sizes = [16, 32], strides = [1, 1]} : vector<16x64xf32> to vector<16x32xf32>
    %71 = arith.truncf %70 : vector<16x32xf32> to vector<16x32xbf16>
    %72 = vector.extract_strided_slice %64 {offsets = [0, 32], sizes = [16, 32], strides = [1, 1]} : vector<16x64xf32> to vector<16x32xf32>
    %73 = arith.truncf %72 : vector<16x32xf32> to vector<16x32xbf16>
    %74 = arith.truncf %69 : vector<16x32xf32> to vector<16x32xbf16>
    %75 = vector.extract_strided_slice %71 {offsets = [0, 0], sizes = [8, 32], strides = [1, 1]} : vector<16x32xbf16> to vector<8x32xbf16>
    %76 = vector.extract_strided_slice %73 {offsets = [0, 0], sizes = [8, 32], strides = [1, 1]} : vector<16x32xbf16> to vector<8x32xbf16>
    %77 = vector.extract_strided_slice %74 {offsets = [0, 0], sizes = [8, 32], strides = [1, 1]} : vector<16x32xbf16> to vector<8x32xbf16>
    %78 = vector.extract_strided_slice %75 {offsets = [0, 0], sizes = [8, 16], strides = [1, 1]} : vector<8x32xbf16> to vector<8x16xbf16>
    %79 = vector.extract_strided_slice %75 {offsets = [0, 16], sizes = [8, 16], strides = [1, 1]} : vector<8x32xbf16> to vector<8x16xbf16>
    %80 = vector.shape_cast %78 : vector<8x16xbf16> to vector<1x8x16xbf16>
    %81 = vector.shape_cast %79 : vector<8x16xbf16> to vector<1x8x16xbf16>
    %82 = tpu.concatenate %80, %81 in 0 : vector<1x8x16xbf16>, vector<1x8x16xbf16> -> vector<2x8x16xbf16>
    %83 = vector.extract_strided_slice %76 {offsets = [0, 0], sizes = [8, 16], strides = [1, 1]} : vector<8x32xbf16> to vector<8x16xbf16>
    %84 = vector.extract_strided_slice %76 {offsets = [0, 16], sizes = [8, 16], strides = [1, 1]} : vector<8x32xbf16> to vector<8x16xbf16>
    %85 = vector.shape_cast %83 : vector<8x16xbf16> to vector<1x8x16xbf16>
    %86 = vector.shape_cast %84 : vector<8x16xbf16> to vector<1x8x16xbf16>
    %87 = tpu.concatenate %85, %86 in 0 : vector<1x8x16xbf16>, vector<1x8x16xbf16> -> vector<2x8x16xbf16>
    %88 = vector.extract_strided_slice %77 {offsets = [0, 0], sizes = [8, 16], strides = [1, 1]} : vector<8x32xbf16> to vector<8x16xbf16>
    %89 = vector.extract_strided_slice %77 {offsets = [0, 16], sizes = [8, 16], strides = [1, 1]} : vector<8x32xbf16> to vector<8x16xbf16>
    %90 = vector.shape_cast %88 : vector<8x16xbf16> to vector<1x8x16xbf16>
    %91 = vector.shape_cast %89 : vector<8x16xbf16> to vector<1x8x16xbf16>
    %92 = tpu.concatenate %90, %91 in 0 : vector<1x8x16xbf16>, vector<1x8x16xbf16> -> vector<2x8x16xbf16>
    "tpu.trace_start"() <{level = 10 : i32, message = "hqd,hkd->hqk"}> : () -> ()
    %cst_26 = arith.constant dense<0.000000e+00> : vector<2x8x8xf32>
    %93 = tpu.matmul %82, %87, %cst_26 {dimension_numbers = #tpu.dot_dimension_numbers<[2], [2], [1], [1], [0, 0, 0, 1, 1, 1], [0], [0]>} : vector<2x8x16xbf16>, vector<2x8x16xbf16>, vector<2x8x8xf32> -> vector<2x8x8xf32>
    "tpu.trace_stop"() : () -> ()
    %94 = vector.shape_cast %4 : vector<8x8xf32> to vector<1x8x8xf32>
    %95 = vector.broadcast %94 : vector<1x8x8xf32> to vector<2x8x8xf32>
    %96 = arith.addf %93, %95 : vector<2x8x8xf32>
    %cst_27 = arith.constant dense<0xFF800000> : vector<2x8xf32>
    %97 = vector.multi_reduction <maximumf>, %96, %cst_27 [2] : vector<2x8x8xf32> to vector<2x8xf32>
    %98 = vector.shape_cast %97 : vector<2x8xf32> to vector<2x8x1xf32>
    %99 = vector.broadcast %98 : vector<2x8x1xf32> to vector<2x8x8xf32>
    %100 = arith.subf %96, %99 : vector<2x8x8xf32>
    %101 = math.exp %100 : vector<2x8x8xf32>
    %cst_28 = arith.constant dense<0.000000e+00> : vector<2x8xf32>
    %102 = vector.multi_reduction <add>, %101, %cst_28 [2] : vector<2x8x8xf32> to vector<2x8xf32>
    %103 = vector.shape_cast %102 : vector<2x8xf32> to vector<2x8x1xf32>
    %104 = tpu.reciprocal %103 {approx = true} : vector<2x8x1xf32> -> vector<2x8x1xf32>
    %105 = vector.broadcast %104 : vector<2x8x1xf32> to vector<2x8x8xf32>
    %106 = arith.mulf %101, %105 : vector<2x8x8xf32>
    %107 = arith.truncf %106 : vector<2x8x8xf32> to vector<2x8x8xbf16>
    "tpu.trace_start"() <{level = 10 : i32, message = "hqk,hkd->hqd"}> : () -> ()
    %cst_29 = arith.constant dense<0.000000e+00> : vector<2x8x16xf32>
    %108 = tpu.matmul %107, %92, %cst_29 {dimension_numbers = #tpu.dot_dimension_numbers<[2], [1], [1], [2], [0, 0, 0, 1, 1, 2], [0], [0]>} : vector<2x8x8xbf16>, vector<2x8x16xbf16>, vector<2x8x16xf32> -> vector<2x8x16xf32>
    "tpu.trace_stop"() : () -> ()
    %109 = vector.extract_strided_slice %108 {offsets = [0, 0, 0], sizes = [1, 8, 16], strides = [1, 1, 1]} : vector<2x8x16xf32> to vector<1x8x16xf32>
    %110 = vector.shape_cast %109 : vector<1x8x16xf32> to vector<8x16xf32>
    %111 = vector.extract_strided_slice %108 {offsets = [1, 0, 0], sizes = [1, 8, 16], strides = [1, 1, 1]} : vector<2x8x16xf32> to vector<1x8x16xf32>
    %112 = vector.shape_cast %111 : vector<1x8x16xf32> to vector<8x16xf32>
    %113 = tpu.concatenate %110, %112 in 1 : vector<8x16xf32>, vector<8x16xf32> -> vector<8x32xf32>
    %114 = vector.extract_strided_slice %71 {offsets = [8, 0], sizes = [8, 32], strides = [1, 1]} : vector<16x32xbf16> to vector<8x32xbf16>
    %115 = vector.extract_strided_slice %73 {offsets = [8, 0], sizes = [8, 32], strides = [1, 1]} : vector<16x32xbf16> to vector<8x32xbf16>
    %116 = vector.extract_strided_slice %74 {offsets = [8, 0], sizes = [8, 32], strides = [1, 1]} : vector<16x32xbf16> to vector<8x32xbf16>
    %117 = vector.extract_strided_slice %114 {offsets = [0, 0], sizes = [8, 16], strides = [1, 1]} : vector<8x32xbf16> to vector<8x16xbf16>
    %118 = vector.extract_strided_slice %114 {offsets = [0, 16], sizes = [8, 16], strides = [1, 1]} : vector<8x32xbf16> to vector<8x16xbf16>
    %119 = vector.shape_cast %117 : vector<8x16xbf16> to vector<1x8x16xbf16>
    %120 = vector.shape_cast %118 : vector<8x16xbf16> to vector<1x8x16xbf16>
    %121 = tpu.concatenate %119, %120 in 0 : vector<1x8x16xbf16>, vector<1x8x16xbf16> -> vector<2x8x16xbf16>
    %122 = vector.extract_strided_slice %115 {offsets = [0, 0], sizes = [8, 16], strides = [1, 1]} : vector<8x32xbf16> to vector<8x16xbf16>
    %123 = vector.extract_strided_slice %115 {offsets = [0, 16], sizes = [8, 16], strides = [1, 1]} : vector<8x32xbf16> to vector<8x16xbf16>
    %124 = vector.shape_cast %122 : vector<8x16xbf16> to vector<1x8x16xbf16>
    %125 = vector.shape_cast %123 : vector<8x16xbf16> to vector<1x8x16xbf16>
    %126 = tpu.concatenate %124, %125 in 0 : vector<1x8x16xbf16>, vector<1x8x16xbf16> -> vector<2x8x16xbf16>
    %127 = vector.extract_strided_slice %116 {offsets = [0, 0], sizes = [8, 16], strides = [1, 1]} : vector<8x32xbf16> to vector<8x16xbf16>
    %128 = vector.extract_strided_slice %116 {offsets = [0, 16], sizes = [8, 16], strides = [1, 1]} : vector<8x32xbf16> to vector<8x16xbf16>
    %129 = vector.shape_cast %127 : vector<8x16xbf16> to vector<1x8x16xbf16>
    %130 = vector.shape_cast %128 : vector<8x16xbf16> to vector<1x8x16xbf16>
    %131 = tpu.concatenate %129, %130 in 0 : vector<1x8x16xbf16>, vector<1x8x16xbf16> -> vector<2x8x16xbf16>
    "tpu.trace_start"() <{level = 10 : i32, message = "hqd,hkd->hqk"}> : () -> ()
    %cst_30 = arith.constant dense<0.000000e+00> : vector<2x8x8xf32>
    %132 = tpu.matmul %121, %126, %cst_30 {dimension_numbers = #tpu.dot_dimension_numbers<[2], [2], [1], [1], [0, 0, 0, 1, 1, 1], [0], [0]>} : vector<2x8x16xbf16>, vector<2x8x16xbf16>, vector<2x8x8xf32> -> vector<2x8x8xf32>
    "tpu.trace_stop"() : () -> ()
    %133 = vector.shape_cast %4 : vector<8x8xf32> to vector<1x8x8xf32>
    %134 = vector.broadcast %133 : vector<1x8x8xf32> to vector<2x8x8xf32>
    %135 = arith.addf %132, %134 : vector<2x8x8xf32>
    %cst_31 = arith.constant dense<0xFF800000> : vector<2x8xf32>
    %136 = vector.multi_reduction <maximumf>, %135, %cst_31 [2] : vector<2x8x8xf32> to vector<2x8xf32>
    %137 = vector.shape_cast %136 : vector<2x8xf32> to vector<2x8x1xf32>
    %138 = vector.broadcast %137 : vector<2x8x1xf32> to vector<2x8x8xf32>
    %139 = arith.subf %135, %138 : vector<2x8x8xf32>
    %140 = math.exp %139 : vector<2x8x8xf32>
    %cst_32 = arith.constant dense<0.000000e+00> : vector<2x8xf32>
    %141 = vector.multi_reduction <add>, %140, %cst_32 [2] : vector<2x8x8xf32> to vector<2x8xf32>
    %142 = vector.shape_cast %141 : vector<2x8xf32> to vector<2x8x1xf32>
    %143 = tpu.reciprocal %142 {approx = true} : vector<2x8x1xf32> -> vector<2x8x1xf32>
    %144 = vector.broadcast %143 : vector<2x8x1xf32> to vector<2x8x8xf32>
    %145 = arith.mulf %140, %144 : vector<2x8x8xf32>
    %146 = arith.truncf %145 : vector<2x8x8xf32> to vector<2x8x8xbf16>
    "tpu.trace_start"() <{level = 10 : i32, message = "hqk,hkd->hqd"}> : () -> ()
    %cst_33 = arith.constant dense<0.000000e+00> : vector<2x8x16xf32>
    %147 = tpu.matmul %146, %131, %cst_33 {dimension_numbers = #tpu.dot_dimension_numbers<[2], [1], [1], [2], [0, 0, 0, 1, 1, 2], [0], [0]>} : vector<2x8x8xbf16>, vector<2x8x16xbf16>, vector<2x8x16xf32> -> vector<2x8x16xf32>
    "tpu.trace_stop"() : () -> ()
    %148 = vector.extract_strided_slice %147 {offsets = [0, 0, 0], sizes = [1, 8, 16], strides = [1, 1, 1]} : vector<2x8x16xf32> to vector<1x8x16xf32>
    %149 = vector.shape_cast %148 : vector<1x8x16xf32> to vector<8x16xf32>
    %150 = vector.extract_strided_slice %147 {offsets = [1, 0, 0], sizes = [1, 8, 16], strides = [1, 1, 1]} : vector<2x8x16xf32> to vector<1x8x16xf32>
    %151 = vector.shape_cast %150 : vector<1x8x16xf32> to vector<8x16xf32>
    %152 = tpu.concatenate %149, %151 in 1 : vector<8x16xf32>, vector<8x16xf32> -> vector<8x32xf32>
    %153 = tpu.concatenate %113, %152 in 0 : vector<8x32xf32>, vector<8x32xf32> -> vector<16x32xf32>
    %154 = arith.truncf %153 : vector<16x32xf32> to vector<16x32xbf16>
    %c0_34 = arith.constant 0 : index
    %c0_35 = arith.constant 0 : index
    %155 = vector.load %arg9[%c0_34, %c0_35] : memref<32x32xbf16, #tpu.memory_space<vmem>>, vector<32x32xbf16>
    %cst_36 = arith.constant dense<0.000000e+00> : vector<16x32xf32>
    %156 = tpu.matmul %154, %155, %cst_36 {dimension_numbers = #tpu.dot_dimension_numbers<[1], [0], [0], [1], [0, 0, 1, 1], [], []>} : vector<16x32xbf16>, vector<32x32xbf16>, vector<16x32xf32> -> vector<16x32xf32>
    %157 = vector.broadcast %13 : vector<1x32xf32> to vector<16x32xf32>
    %158 = arith.addf %156, %157 : vector<16x32xf32>
    %159 = arith.addf %158, %58 : vector<16x32xf32>
    %cst_37 = arith.constant dense<0.000000e+00> : vector<16xf32>
    %160 = vector.multi_reduction <add>, %159, %cst_37 [1] : vector<16x32xf32> to vector<16xf32>
    %161 = vector.shape_cast %160 : vector<16xf32> to vector<16x1xf32>
    %cst_38 = arith.constant 3.200000e+01 : f32
    %162 = vector.broadcast %cst_38 : f32 to vector<16x1xf32>
    %163 = arith.divf %161, %162 : vector<16x1xf32>
    %164 = vector.broadcast %163 : vector<16x1xf32> to vector<16x32xf32>
    %165 = arith.subf %159, %164 : vector<16x32xf32>
    %166 = arith.mulf %165, %165 : vector<16x32xf32>
    %cst_39 = arith.constant dense<0.000000e+00> : vector<16xf32>
    %167 = vector.multi_reduction <add>, %166, %cst_39 [1] : vector<16x32xf32> to vector<16xf32>
    %168 = vector.shape_cast %167 : vector<16xf32> to vector<16x1xf32>
    %cst_40 = arith.constant 3.200000e+01 : f32
    %169 = vector.broadcast %cst_40 : f32 to vector<16x1xf32>
    %170 = arith.divf %168, %169 : vector<16x1xf32>
    %171 = vector.broadcast %163 : vector<16x1xf32> to vector<16x32xf32>
    %172 = arith.subf %159, %171 : vector<16x32xf32>
    %cst_41 = arith.constant 9.99999996E-13 : f32
    %173 = vector.broadcast %cst_41 : f32 to vector<16x1xf32>
    %174 = arith.addf %170, %173 : vector<16x1xf32>
    %175 = math.rsqrt %174 : vector<16x1xf32>
    %176 = vector.broadcast %175 : vector<16x1xf32> to vector<16x32xf32>
    %177 = arith.mulf %172, %176 : vector<16x32xf32>
    %178 = vector.broadcast %10 : vector<1x32xf32> to vector<16x32xf32>
    %179 = arith.mulf %177, %178 : vector<16x32xf32>
    %180 = vector.broadcast %11 : vector<1x32xf32> to vector<16x32xf32>
    %181 = arith.addf %179, %180 : vector<16x32xf32>
    %182 = arith.truncf %181 : vector<16x32xf32> to vector<16x32xbf16>
    %c0_42 = arith.constant 0 : index
    %c0_43 = arith.constant 0 : index
    %183 = vector.load %arg10[%c0_42, %c0_43] : memref<32x64xbf16, #tpu.memory_space<vmem>>, vector<32x64xbf16>
    %cst_44 = arith.constant dense<0.000000e+00> : vector<16x64xf32>
    %184 = tpu.matmul %182, %183, %cst_44 {dimension_numbers = #tpu.dot_dimension_numbers<[1], [0], [0], [1], [0, 0, 1, 1], [], []>} : vector<16x32xbf16>, vector<32x64xbf16>, vector<16x64xf32> -> vector<16x64xf32>
    %c0_45 = arith.constant 0 : index
    %c0_46 = arith.constant 0 : index
    %185 = vector.load %arg6[%c0_45, %c0_46] : memref<1x64xf32, #tpu.memory_space<vmem>>, vector<1x64xf32>
    %186 = vector.broadcast %185 : vector<1x64xf32> to vector<16x64xf32>
    %187 = arith.addf %184, %186 : vector<16x64xf32>
    %cst_47 = arith.constant 5.000000e-01 : f32
    %188 = vector.broadcast %cst_47 : f32 to vector<16x64xf32>
    %189 = arith.mulf %187, %188 : vector<16x64xf32>
    %cst_48 = arith.constant 0.707106769 : f32
    %190 = vector.broadcast %cst_48 : f32 to vector<16x64xf32>
    %191 = arith.mulf %187, %190 : vector<16x64xf32>
    %192 = math.erf %191 : vector<16x64xf32>
    %cst_49 = arith.constant 1.000000e+00 : f32
    %193 = vector.broadcast %cst_49 : f32 to vector<16x64xf32>
    %194 = arith.addf %193, %192 : vector<16x64xf32>
    %195 = arith.mulf %189, %194 : vector<16x64xf32>
    %196 = arith.truncf %195 : vector<16x64xf32> to vector<16x64xbf16>
    %c0_50 = arith.constant 0 : index
    %c0_51 = arith.constant 0 : index
    %197 = vector.load %arg11[%c0_50, %c0_51] : memref<64x32xbf16, #tpu.memory_space<vmem>>, vector<64x32xbf16>
    %cst_52 = arith.constant dense<0.000000e+00> : vector<16x32xf32>
    %198 = tpu.matmul %196, %197, %cst_52 {dimension_numbers = #tpu.dot_dimension_numbers<[1], [0], [0], [1], [0, 0, 1, 1], [], []>} : vector<16x64xbf16>, vector<64x32xbf16>, vector<16x32xf32> -> vector<16x32xf32>
    %199 = vector.broadcast %14 : vector<1x32xf32> to vector<16x32xf32>
    %200 = arith.addf %198, %199 : vector<16x32xf32>
    %201 = arith.addf %200, %181 : vector<16x32xf32>
    %202 = vector.shape_cast %201 : vector<16x32xf32> to vector<2x8x32xf32>
    %c0_53 = arith.constant 0 : index
    %c0_54 = arith.constant 0 : index
    %c0_55 = arith.constant 0 : index
    %203 = vector.load %arg12[%c0_53, %c0_54, %c0_55] : memref<2x8x32xf32, #tpu.memory_space<vmem>>, vector<2x8x32xf32>
    tpu.vector_store %arg12[%c0_53, %c0_54, %c0_55], %202 {strides = array<i32>} : memref<2x8x32xf32, #tpu.memory_space<vmem>>, vector<2x8x32xf32>,
    return
  }
  func.func @transform_0(%arg0: i32) -> (i32, i32, i32) {
    %c0_i32 = arith.constant 0 : i32
    %c0_i32_0 = arith.constant 0 : i32
    %c0_i32_1 = arith.constant 0 : i32
    return %arg0, %c0_i32, %c0_i32_0 : i32, i32, i32
  }
  func.func @transform_1(%arg0: i32) -> (i32, i32, i32) {
    %c0_i32 = arith.constant 0 : i32
    %c0_i32_0 = arith.constant 0 : i32
    %c0_i32_1 = arith.constant 0 : i32
    return %arg0, %c0_i32, %c0_i32_0 : i32, i32, i32
  }
  func.func @transform_2(%arg0: i32) -> (i32, i32) {
    %c0_i32 = arith.constant 0 : i32
    %c0_i32_0 = arith.constant 0 : i32
    %c0_i32_1 = arith.constant 0 : i32
    return %c0_i32, %c0_i32_0 : i32, i32
  }
  func.func @transform_3(%arg0: i32) -> (i32, i32) {
    %c0_i32 = arith.constant 0 : i32
    %c0_i32_0 = arith.constant 0 : i32
    %c0_i32_1 = arith.constant 0 : i32
    return %c0_i32, %c0_i32_0 : i32, i32
  }
  func.func @transform_4(%arg0: i32) -> (i32, i32) {
    %c0_i32 = arith.constant 0 : i32
    %c0_i32_0 = arith.constant 0 : i32
    %c0_i32_1 = arith.constant 0 : i32
    return %c0_i32, %c0_i32_0 : i32, i32
  }
  func.func @transform_5(%arg0: i32) -> (i32, i32) {
    %c0_i32 = arith.constant 0 : i32
    %c0_i32_0 = arith.constant 0 : i32
    %c0_i32_1 = arith.constant 0 : i32
    return %c0_i32, %c0_i32_0 : i32, i32
  }
  func.func @transform_6(%arg0: i32) -> (i32, i32) {
    %c0_i32 = arith.constant 0 : i32
    %c0_i32_0 = arith.constant 0 : i32
    %c0_i32_1 = arith.constant 0 : i32
    return %c0_i32, %c0_i32_0 : i32, i32
  }
  func.func @transform_7(%arg0: i32) -> (i32, i32) {
    %c0_i32 = arith.constant 0 : i32
    %c0_i32_0 = arith.constant 0 : i32
    %c0_i32_1 = arith.constant 0 : i32
    return %c0_i32, %c0_i32_0 : i32, i32
  }
  func.func @transform_8(%arg0: i32) -> (i32, i32) {
    %c0_i32 = arith.constant 0 : i32
    %c0_i32_0 = arith.constant 0 : i32
    %c0_i32_1 = arith.constant 0 : i32
    return %c0_i32, %c0_i32_0 : i32, i32
  }
  func.func @transform_9(%arg0: i32) -> (i32, i32) {
    %c0_i32 = arith.constant 0 : i32
    %c0_i32_0 = arith.constant 0 : i32
    %c0_i32_1 = arith.constant 0 : i32
    return %c0_i32, %c0_i32_0 : i32, i32
  }
  func.func @transform_10(%arg0: i32) -> (i32, i32) {
    %c0_i32 = arith.constant 0 : i32
    %c0_i32_0 = arith.constant 0 : i32
    %c0_i32_1 = arith.constant 0 : i32
    return %c0_i32, %c0_i32_0 : i32, i32
  }
  func.func @transform_11(%arg0: i32) -> (i32, i32, i32) {
    %c0_i32 = arith.constant 0 : i32
    %c0_i32_0 = arith.constant 0 : i32
    %c0_i32_1 = arith.constant 0 : i32
    return %arg0, %c0_i32, %c0_i32_0 : i32, i32, i32
  }
}

</mosaic_0001>

<llo_original>
// kernel: tpu_custom_call.1
$region0: #{tpu_custom_call.1}
  #allocation0 [shape = 'u32[]', space=smem, size = 0x4, offset = 0x4, fixed_abs, tag = 'smem constant byte address 0x4 - core index']
  #allocation1 [shape = 'u32[144,128]{1,0:T(1,128)}', space=vmem, size = 0x12000, scoped, tag = 'internal scratch']
  %s0 = inlined_call_operand.vmem [shape: f32[2,8,32], index: 0, kind: input, shape index: {}]
  %s1 = inlined_call_operand.vmem [shape: f32[2,8,32], index: 1, kind: input, shape index: {}]
  %s2 = inlined_call_operand.hbm [shape: f32[8,8], index: 2, kind: input, shape index: {}]
  %s3 = inlined_call_operand.vmem [shape: f32[9,32], index: 3, kind: input, shape index: {}]
  %s4 = inlined_call_operand.vmem [shape: f32[1,64], index: 4, kind: input, shape index: {}]
  %s5 = inlined_call_operand.vmem [shape: f32[1,64], index: 5, kind: input, shape index: {}]
  %s6 = inlined_call_operand.hbm [shape: bf16[32,64], index: 6, kind: input, shape index: {}]
  %s7 = inlined_call_operand.hbm [shape: bf16[32,32], index: 7, kind: input, shape index: {}]
  %s8 = inlined_call_operand.hbm [shape: bf16[32,32], index: 8, kind: input, shape index: {}]
  %s9 = inlined_call_operand.vmem [shape: bf16[32,64], index: 9, kind: input, shape index: {}]
  %s10 = inlined_call_operand.vmem [shape: bf16[64,32], index: 10, kind: input, shape index: {}]
  %s11 = inlined_call_operand.hbm [shape: f32[2,8,32], index: 11, kind: output, shape index: {}]
  %s12 = sld [smem:[#allocation0]]
  $region70: #{tpu_custom_call.1} parent=0
    _
  %s14 = ssub.s32 1, %s12
  %s15 = scalar_select 0, %s14, %s12
  $region1: #{tpu_custom_call.1} parent=0
    #allocation2 [shape = 'u8[4096]{0}', space=vmem, size = 0x1000, scoped, tag = 'input window, operand 2, single buffered']
    #allocation3 [shape = 's32[1]{0}', space=sflag, size = 0x4, scoped, tag = 'scoped memory for tpu_custom_call.1']
    #allocation4 [shape = 's32[1]{0}', space=sflag, size = 0x4, scoped, tag = 'scoped memory for tpu_custom_call.1']
    #allocation5 [shape = 'u8[8192]{0}', space=vmem, size = 0x2000, scoped, tag = 'input window, operand 6, single buffered']
    #allocation6 [shape = 's32[1]{0}', space=sflag, size = 0x4, scoped, tag = 'scoped memory for tpu_custom_call.1']
    #allocation7 [shape = 'u8[8192]{0}', space=vmem, size = 0x2000, scoped, tag = 'input window, operand 7, single buffered']
    #allocation8 [shape = 'u8[8192]{0}', space=vmem, size = 0x2000, scoped, tag = 'input window, operand 8, single buffered']
    #allocation9 [shape = 's32[1]{0}', space=sflag, size = 0x4, scoped, tag = 'scoped memory for tpu_custom_call.1']
    #allocation10 [shape = 'u8[8192]{0}', space=vmem, size = 0x2000, scoped, tag = 'output window, operand 0, single buffered']
    %16 = vsyncpa [#allocation3], 0
    %17 = vsyncpa [#allocation6], 0
    %18 = vsyncpa [#allocation9], 0
    %19 = vsyncpa [#allocation4], 0
    // Predicated region
    $region2: #{tpu_custom_call.1} parent=1 // pred_check
      _
    $region3: #{tpu_custom_call.1} parent=1 // pred_check_branch
      %21 = sbr.rel (0) target = $region5
    $region4: #{tpu_custom_call.1} parent=1 // pred_region
      _
    $region5: #{tpu_custom_call.1} parent=1 // pred_fallthru
      _
    // Predicated region
    $region6: #{tpu_custom_call.1} parent=1 // pred_check
      _
    $region7: #{tpu_custom_call.1} parent=1 // pred_check_branch
      %23 = sbr.rel (0) target = $region9
    $region8: #{tpu_custom_call.1} parent=1 // pred_region
      _
    $region9: #{tpu_custom_call.1} parent=1 // pred_fallthru
      _
    // Predicated region
    $region10: #{tpu_custom_call.1} parent=1 // pred_check
      _
    $region11: #{tpu_custom_call.1} parent=1 // pred_check_branch
      %25 = sbr.rel (0) target = $region13
    $region12: #{tpu_custom_call.1} parent=1 // pred_region
      %s27 = ssub.s32 128, 128
      %28 = vsyncadd [#allocation3], %s27
      %s30 = sshll.u32 [#allocation2], 4
      %s31 = int_to_ptr.vmem [resolvable:$true] %s30
      %33 = dma.hbm_to_vmem [thread:$0]  %s2, 128, %s31, [#allocation3]
    $region13: #{tpu_custom_call.1} parent=1 // pred_fallthru
      _
    // Predicated region
    $region14: #{tpu_custom_call.1} parent=1 // pred_check
      _
    $region15: #{tpu_custom_call.1} parent=1 // pred_check_branch
      %35 = sbr.rel (0) target = $region17
    $region16: #{tpu_custom_call.1} parent=1 // pred_region
      _
    $region17: #{tpu_custom_call.1} parent=1 // pred_fallthru
      _
    // Predicated region
    $region18: #{tpu_custom_call.1} parent=1 // pred_check
      _
    $region19: #{tpu_custom_call.1} parent=1 // pred_check_branch
      %37 = sbr.rel (0) target = $region21
    $region20: #{tpu_custom_call.1} parent=1 // pred_region
      _
    $region21: #{tpu_custom_call.1} parent=1 // pred_fallthru
      _
    // Predicated region
    $region22: #{tpu_custom_call.1} parent=1 // pred_check
      _
    $region23: #{tpu_custom_call.1} parent=1 // pred_check_branch
      %39 = sbr.rel (0) target = $region25
    $region24: #{tpu_custom_call.1} parent=1 // pred_region
      _
    $region25: #{tpu_custom_call.1} parent=1 // pred_fallthru
      _
    // Predicated region
    $region26: #{tpu_custom_call.1} parent=1 // pred_check
      _
    $region27: #{tpu_custom_call.1} parent=1 // pred_check_branch
      %41 = sbr.rel (0) target = $region29
    $region28: #{tpu_custom_call.1} parent=1 // pred_region
      %s43 = ssub.s32 256, 256
      %44 = vsyncadd [#allocation6], %s43
      %s45 = sshll.u32 [#allocation5], 4
      %s46 = int_to_ptr.vmem [resolvable:$true] %s45
      %51 = dma.hbm_to_vmem [thread:$0]  %s6, 256, %s46, [#allocation6], 64, 64, 4
    $region29: #{tpu_custom_call.1} parent=1 // pred_fallthru
      _
    // Predicated region
    $region30: #{tpu_custom_call.1} parent=1 // pred_check
      _
    $region31: #{tpu_custom_call.1} parent=1 // pred_check_branch
      %53 = sbr.rel (0) target = $region33
    $region32: #{tpu_custom_call.1} parent=1 // pred_region
      %s55 = ssub.s32 256, 256
      %56 = vsyncadd [#allocation6], %s55
      %s57 = sshll.u32 [#allocation7], 4
      %s58 = int_to_ptr.vmem [resolvable:$true] %s57
      %63 = dma.hbm_to_vmem [thread:$0]  %s7, 256, %s58, [#allocation6], 64, 64, 4
    $region33: #{tpu_custom_call.1} parent=1 // pred_fallthru
      _
    // Predicated region
    $region34: #{tpu_custom_call.1} parent=1 // pred_check
      _
    $region35: #{tpu_custom_call.1} parent=1 // pred_check_branch
      %65 = sbr.rel (0) target = $region37
    $region36: #{tpu_custom_call.1} parent=1 // pred_region
      %s67 = ssub.s32 256, 256
      %68 = vsyncadd [#allocation9], %s67
      %s69 = sshll.u32 [#allocation8], 4
      %s70 = int_to_ptr.vmem [resolvable:$true] %s69
      %75 = dma.hbm_to_vmem [thread:$0]  %s8, 256, %s70, [#allocation9], 64, 64, 4
    $region37: #{tpu_custom_call.1} parent=1 // pred_fallthru
      _
    // Predicated region
    $region38: #{tpu_custom_call.1} parent=1 // pred_check
      _
    $region39: #{tpu_custom_call.1} parent=1 // pred_check_branch
      %77 = sbr.rel (0) target = $region41
    $region40: #{tpu_custom_call.1} parent=1 // pred_region
      _
    $region41: #{tpu_custom_call.1} parent=1 // pred_fallthru
      _
    // Predicated region
    $region42: #{tpu_custom_call.1} parent=1 // pred_check
      _
    $region43: #{tpu_custom_call.1} parent=1 // pred_check_branch
      %79 = sbr.rel (0) target = $region45
    $region44: #{tpu_custom_call.1} parent=1 // pred_region
      _
    $region45: #{tpu_custom_call.1} parent=1 // pred_fallthru
      _
    // Predicated region
    $region46: #{tpu_custom_call.1} parent=1 // pred_check
      _
    $region47: #{tpu_custom_call.1} parent=1 // pred_check_branch
      %81 = sbr.rel (0) target = $region49
    $region48: #{tpu_custom_call.1} parent=1 // pred_region
      %82 = dma.done [#allocation3], 128
    $region49: #{tpu_custom_call.1} parent=1 // pred_fallthru
      _
    // Predicated region
    $region50: #{tpu_custom_call.1} parent=1 // pred_check
      _
    $region51: #{tpu_custom_call.1} parent=1 // pred_check_branch
      %84 = sbr.rel (0) target = $region53
    $region52: #{tpu_custom_call.1} parent=1 // pred_region
      %85 = dma.done [#allocation6], 256
    $region53: #{tpu_custom_call.1} parent=1 // pred_fallthru
      _
    // Predicated region
    $region54: #{tpu_custom_call.1} parent=1 // pred_check
      _
    $region55: #{tpu_custom_call.1} parent=1 // pred_check_branch
      %87 = sbr.rel (0) target = $region57
    $region56: #{tpu_custom_call.1} parent=1 // pred_region
      %88 = dma.done [#allocation6], 256
    $region57: #{tpu_custom_call.1} parent=1 // pred_fallthru
      _
    // Predicated region
    $region58: #{tpu_custom_call.1} parent=1 // pred_check
      _
    $region59: #{tpu_custom_call.1} parent=1 // pred_check_branch
      %90 = sbr.rel (0) target = $region61
    $region60: #{tpu_custom_call.1} parent=1 // pred_region
      %91 = dma.done [#allocation9], 256
    $region61: #{tpu_custom_call.1} parent=1 // pred_fallthru
      _
    %v93 = vld [vmem:[%s0] sm:$0xff]
    %v94 = vld [vmem:[%s0 + $0x8] sm:$0xff]
    %v95 = vld [vmem:[%s1] sm:$0xff]
    %v96 = vld [vmem:[%s1 + $0x8] sm:$0xff]
    %v97 = vld [vmem:[#allocation2] sm:$0xff]
    %v98 = vld [vmem:[%s3] sm:$0xff]
    %v99 = vld [vmem:[%s3 + $0x8] sm:$0x1]
    %vm100 = vcmask 261120
    %v101 = vsel %vm100, %v93, 0.0
    %102 = vadd.xlane.f32.xlu0 %v101
    %v103 = vpop.xlane.xlu0 %102
    %v104 = vsel %vm100, %v94, 0.0
    %105 = vadd.xlane.f32.xlu0 %v104
    %v106 = vpop.xlane.xlu0 %105
    %v107 = vrcp.pop 32.0
    %v108 = vmul.f32 %v103, %v107
    %v109 = vmul.f32 %v106, %v107
    %v110 = vsub.f32 %v93, %v108
    %v111 = vsub.f32 %v94, %v109
    %v112 = vmul.f32 %v110, %v110
    %v113 = vmul.f32 %v111, %v111
    %v114 = vsel %vm100, %v112, 0.0
    %115 = vadd.xlane.f32.xlu0 %v114
    %v116 = vpop.xlane.xlu0 %115
    %v117 = vsel %vm100, %v113, 0.0
    %118 = vadd.xlane.f32.xlu0 %v117
    %v119 = vpop.xlane.xlu0 %118
    %v120 = vmul.f32 %v116, %v107
    %v121 = vmul.f32 %v119, %v107
    %v122 = vadd.f32 %v120, 1e-12
    %v123 = vadd.f32 %v121, 1e-12
    %v124 = vrsqrt.pop %v122
    %v125 = vrsqrt.pop %v123
    %v126 = vmul.f32 %v110, %v124
    %v127 = vmul.f32 %v111, %v125
    %v128 = vlaneseq
    %v129 = vshrl.u32 %v128, 7
    %v130 = vsub.s32 0, %v129
    %v131 = vrot.slane %v98, %v130
    %v132 = vmul.f32 %v126, %v131
    %v133 = vmul.f32 %v127, %v131
    %v134 = vlaneseq
    %v135 = vshrl.u32 %v134, 7
    %v136 = vsub.s32 1, %v135
    %v137 = vrot.slane %v98, %v136
    %v138 = vadd.f32 %v132, %v137
    %v139 = vadd.f32 %v133, %v137
    %v140 = vsel %vm100, %v95, 0.0
    %141 = vadd.xlane.f32.xlu0 %v140
    %v142 = vpop.xlane.xlu0 %141
    %v143 = vsel %vm100, %v96, 0.0
    %144 = vadd.xlane.f32.xlu0 %v143
    %v145 = vpop.xlane.xlu0 %144
    %v146 = vmul.f32 %v142, %v107
    %v147 = vmul.f32 %v145, %v107
    %v148 = vsub.f32 %v95, %v146
    %v149 = vsub.f32 %v96, %v147
    %v150 = vmul.f32 %v148, %v148
    %v151 = vmul.f32 %v149, %v149
    %v152 = vsel %vm100, %v150, 0.0
    %153 = vadd.xlane.f32.xlu0 %v152
    %v154 = vpop.xlane.xlu0 %153
    %v155 = vsel %vm100, %v151, 0.0
    %156 = vadd.xlane.f32.xlu0 %v155
    %v157 = vpop.xlane.xlu0 %156
    %v158 = vmul.f32 %v154, %v107
    %v159 = vmul.f32 %v157, %v107
    %v160 = vadd.f32 %v158, 1e-12
    %v161 = vadd.f32 %v159, 1e-12
    %v162 = vrsqrt.pop %v160
    %v163 = vrsqrt.pop %v161
    %v164 = vmul.f32 %v148, %v162
    %v165 = vmul.f32 %v149, %v163
    %v166 = vlaneseq
    %v167 = vshrl.u32 %v166, 7
    %v168 = vsub.s32 2, %v167
    %v169 = vrot.slane %v98, %v168
    %v170 = vmul.f32 %v164, %v169
    %v171 = vmul.f32 %v165, %v169
    %v172 = vlaneseq
    %v173 = vshrl.u32 %v172, 7
    %v174 = vsub.s32 3, %v173
    %v175 = vrot.slane %v98, %v174
    %v176 = vadd.f32 %v170, %v175
    %v177 = vadd.f32 %v171, %v175
    %v178 = vpack.c.bf16 %v139, %v138
    %v179 = vld [vmem:[#allocation5] sm:$0xf]
    %v180 = vld [vmem:[#allocation5 + $0x4] sm:$0xf]
    %v181 = vld [vmem:[#allocation5 + $0x8] sm:$0xf]
    %v182 = vld [vmem:[#allocation5 + $0xc] sm:$0xf]
    %v183 = vld [vmem:[%s4] sm:$0x1]
    %v185 = vlaneseq
    %v186 = vshrl.u32 %v185, 7
    %v187 = vsub.s32 0, %v186
    %v188 = vrot.slane %v183, %v187
    %v194 = vunpack.c.l.b16 %v179
    %v195 = vunpack.c.l.b16 %v180
    %v196 = vunpack.c.l.b16 %v181
    %v197 = vunpack.c.l.b16 %v182
    %v198 = vpack.c.b16 %v195, %v194
    %v199 = vpack.c.b16 %v197, %v196
    %v203 = vsel %vm100, %v178, 0
    %205 = vmatprep.subr.bf16.mxu0 0
    %206 = vmatpush1.bf16.msra.mxu0 %v198
    %207 = vmatprep.subr.bf16.mxu0 0
    %208 = vmatpush1.bf16.msra.mxu0 %v199
    %209 = vmatprep.subr.bf16.mxu0 0
    %210 = vmatpush1.bf16.msra.mxu0 0
    %211 = vmatprep.subr.bf16.mxu0 0
    %212 = vmatpush1.bf16.msra.mxu0 0
    %213 = vmatprep.subr.bf16.mxu0 0
    %214 = vmatpush1.bf16.msra.mxu0 0
    %215 = vmatprep.subr.bf16.mxu0 0
    %216 = vmatpush1.bf16.msra.mxu0 0
    %217 = vmatprep.subr.bf16.mxu0 0
    %218 = vmatpush1.bf16.msra.mxu0 0
    %219 = vmatprep.subr.bf16.mxu0 0
    %220 = vmatpush1.bf16.msra.mxu0 0
    %221 = vmatprep.subr.bf16.mxu0 0
    %222 = vmatpush1.bf16.msra.mxu0 0
    %223 = vmatprep.subr.bf16.mxu0 0
    %224 = vmatpush1.bf16.msra.mxu0 0
    %225 = vmatprep.subr.bf16.mxu0 0
    %226 = vmatpush1.bf16.msra.mxu0 0
    %227 = vmatprep.subr.bf16.mxu0 0
    %228 = vmatpush1.bf16.msra.mxu0 0
    %229 = vmatprep.subr.bf16.mxu0 0
    %230 = vmatpush1.bf16.msra.mxu0 0
    %231 = vmatprep.subr.bf16.mxu0 0
    %232 = vmatpush1.bf16.msra.mxu0 0
    %233 = vmatprep.subr.bf16.mxu0 0
    %234 = vmatpush1.bf16.msra.mxu0 0
    %235 = vmatprep.subr.bf16.mxu0 0
    %236 = vmatpush1.bf16.msra.mxu0 0
    %237 = vmatprep.mubr.bf16.mxu0 0
    %238 = vmatmul.mubr.bf16.gmra.mrb[0].mxu0 %v203
    %v239 = vpop.f32.mrb[0].mxu0
    %v240 = vadd.f32 %v188, %v239
    %v241 = vpop.f32.mrb[0].mxu0
    %v242 = vpop.f32.mrb[0].mxu0
    %v243 = vadd.f32 %v188, %v242
    %v244 = vpop.f32.mrb[0].mxu0
    %245 = vdwg.mxu0
    %v246 = vpack.c.bf16 %v177, %v176
    %v247 = vld [vmem:[#allocation7] sm:$0xf]
    %v248 = vld [vmem:[#allocation7 + $0x4] sm:$0xf]
    %v249 = vld [vmem:[#allocation7 + $0x8] sm:$0xf]
    %v250 = vld [vmem:[#allocation7 + $0xc] sm:$0xf]
    %v251 = vlaneseq
    %v252 = vshrl.u32 %v251, 7
    %v253 = vsub.s32 6, %v252
    %v254 = vrot.slane %v98, %v253
    %v259 = vunpack.c.l.b16 %v247
    %v260 = vunpack.c.l.b16 %v248
    %v261 = vunpack.c.l.b16 %v249
    %v262 = vunpack.c.l.b16 %v250
    %v263 = vpack.c.b16 %v260, %v259
    %v264 = vpack.c.b16 %v262, %v261
    %v268 = vsel %vm100, %v246, 0
    %270 = vmatprep.subr.bf16.mxu0 0
    %271 = vmatpush1.bf16.msra.mxu0 %v263
    %272 = vmatprep.subr.bf16.mxu0 0
    %273 = vmatpush1.bf16.msra.mxu0 %v264
    %274 = vmatprep.subr.bf16.mxu0 0
    %275 = vmatpush1.bf16.msra.mxu0 0
    %276 = vmatprep.subr.bf16.mxu0 0
    %277 = vmatpush1.bf16.msra.mxu0 0
    %278 = vmatprep.subr.bf16.mxu0 0
    %279 = vmatpush1.bf16.msra.mxu0 0
    %280 = vmatprep.subr.bf16.mxu0 0
    %281 = vmatpush1.bf16.msra.mxu0 0
    %282 = vmatprep.subr.bf16.mxu0 0
    %283 = vmatpush1.bf16.msra.mxu0 0
    %284 = vmatprep.subr.bf16.mxu0 0
    %285 = vmatpush1.bf16.msra.mxu0 0
    %286 = vmatprep.subr.bf16.mxu0 0
    %287 = vmatpush1.bf16.msra.mxu0 0
    %288 = vmatprep.subr.bf16.mxu0 0
    %289 = vmatpush1.bf16.msra.mxu0 0
    %290 = vmatprep.subr.bf16.mxu0 0
    %291 = vmatpush1.bf16.msra.mxu0 0
    %292 = vmatprep.subr.bf16.mxu0 0
    %293 = vmatpush1.bf16.msra.mxu0 0
    %294 = vmatprep.subr.bf16.mxu0 0
    %295 = vmatpush1.bf16.msra.mxu0 0
    %296 = vmatprep.subr.bf16.mxu0 0
    %297 = vmatpush1.bf16.msra.mxu0 0
    %298 = vmatprep.subr.bf16.mxu0 0
    %299 = vmatpush1.bf16.msra.mxu0 0
    %300 = vmatprep.subr.bf16.mxu0 0
    %301 = vmatpush1.bf16.msra.mxu0 0
    %302 = vmatprep.mubr.bf16.mxu0 0
    %303 = vmatmul.mubr.bf16.gmra.mrb[0].mxu0 %v268
    %v304 = vpop.f32.mrb[0].mxu0
    %v305 = vadd.f32 %v254, %v304
    %v306 = vpop.f32.mrb[0].mxu0
    %v307 = vpop.f32.mrb[0].mxu0
    %v308 = vadd.f32 %v254, %v307
    %v309 = vpop.f32.mrb[0].mxu0
    %310 = vdwg.mxu0
    %v311 = vpack.c.bf16 %v243, %v240
    %v312 = vpack.c.bf16 %v308, %v305
    %314 = vrot.lane.b32.xlu0 %v311, 112
    %v315 = vpop.permute.xlu0 %314
    %317 = vrot.lane.b32.xlu0 %v312, 112
    %v318 = vpop.permute.xlu0 %317
    %319 = vrot.lane.b32.xlu0 %v311, 96
    %v320 = vpop.permute.xlu0 %319
    %vm321 = vcmask 130048
    %v323 = vsel %vm321, %v311, 0
    %v326 = vsel %vm321, %v320, 0
    %328 = vmatprep.subr.bf16.mxu0 0
    %329 = vmatpush1.bf16.xpose.msra.mxu0 %v326
    %330 = vmatprep.subr.bf16.mxu0 0
    %331 = vmatpush1.bf16.xpose.msra.mxu0 0
    %332 = vmatprep.subr.bf16.mxu0 0
    %333 = vmatpush1.bf16.xpose.msra.mxu0 0
    %334 = vmatprep.subr.bf16.mxu0 0
    %335 = vmatpush1.bf16.xpose.msra.mxu0 0
    %336 = vmatprep.subr.bf16.mxu0 0
    %337 = vmatpush1.bf16.xpose.msra.mxu0 0
    %338 = vmatprep.subr.bf16.mxu0 0
    %339 = vmatpush1.bf16.xpose.msra.mxu0 0
    %340 = vmatprep.subr.bf16.mxu0 0
    %341 = vmatpush1.bf16.xpose.msra.mxu0 0
    %342 = vmatprep.subr.bf16.mxu0 0
    %343 = vmatpush1.bf16.xpose.msra.mxu0 0
    %344 = vmatprep.subr.bf16.mxu0 0
    %345 = vmatpush1.bf16.xpose.msra.mxu0 0
    %346 = vmatprep.subr.bf16.mxu0 0
    %347 = vmatpush1.bf16.xpose.msra.mxu0 0
    %348 = vmatprep.subr.bf16.mxu0 0
    %349 = vmatpush1.bf16.xpose.msra.mxu0 0
    %350 = vmatprep.subr.bf16.mxu0 0
    %351 = vmatpush1.bf16.xpose.msra.mxu0 0
    %352 = vmatprep.subr.bf16.mxu0 0
    %353 = vmatpush1.bf16.xpose.msra.mxu0 0
    %354 = vmatprep.subr.bf16.mxu0 0
    %355 = vmatpush1.bf16.xpose.msra.mxu0 0
    %356 = vmatprep.subr.bf16.mxu0 0
    %357 = vmatpush1.bf16.xpose.msra.mxu0 0
    %358 = vmatprep.subr.bf16.mxu0 0
    %359 = vmatpush1.bf16.xpose.msra.mxu0 0
    %360 = vmatprep.mubr.bf16.mxu0 0
    %361 = vmatmul.mubr.bf16.gmra.mrb[0].mxu0 %v323
    %v362 = vpop.f32.mrb[0].mxu0
    %v363 = vadd.f32 %v97, %v362
    %v364 = vpop.f32.mrb[0].mxu0
    %v365 = vpop.f32.mrb[0].mxu0
    %v366 = vpop.f32.mrb[0].mxu0
    %367 = vdwg.mxu0
    %368 = vrot.lane.b32.xlu0 %v315, 96
    %v369 = vpop.permute.xlu0 %368
    %v371 = vsel %vm321, %v315, 0
    %v374 = vsel %vm321, %v369, 0
    %376 = vmatprep.subr.bf16.mxu0 0
    %377 = vmatpush1.bf16.xpose.msra.mxu0 %v374
    %378 = vmatprep.subr.bf16.mxu0 0
    %379 = vmatpush1.bf16.xpose.msra.mxu0 0
    %380 = vmatprep.subr.bf16.mxu0 0
    %381 = vmatpush1.bf16.xpose.msra.mxu0 0
    %382 = vmatprep.subr.bf16.mxu0 0
    %383 = vmatpush1.bf16.xpose.msra.mxu0 0
    %384 = vmatprep.subr.bf16.mxu0 0
    %385 = vmatpush1.bf16.xpose.msra.mxu0 0
    %386 = vmatprep.subr.bf16.mxu0 0
    %387 = vmatpush1.bf16.xpose.msra.mxu0 0
    %388 = vmatprep.subr.bf16.mxu0 0
    %389 = vmatpush1.bf16.xpose.msra.mxu0 0
    %390 = vmatprep.subr.bf16.mxu0 0
    %391 = vmatpush1.bf16.xpose.msra.mxu0 0
    %392 = vmatprep.subr.bf16.mxu0 0
    %393 = vmatpush1.bf16.xpose.msra.mxu0 0
    %394 = vmatprep.subr.bf16.mxu0 0
    %395 = vmatpush1.bf16.xpose.msra.mxu0 0
    %396 = vmatprep.subr.bf16.mxu0 0
    %397 = vmatpush1.bf16.xpose.msra.mxu0 0
    %398 = vmatprep.subr.bf16.mxu0 0
    %399 = vmatpush1.bf16.xpose.msra.mxu0 0
    %400 = vmatprep.subr.bf16.mxu0 0
    %401 = vmatpush1.bf16.xpose.msra.mxu0 0
    %402 = vmatprep.subr.bf16.mxu0 0
    %403 = vmatpush1.bf16.xpose.msra.mxu0 0
    %404 = vmatprep.subr.bf16.mxu0 0
    %405 = vmatpush1.bf16.xpose.msra.mxu0 0
    %406 = vmatprep.subr.bf16.mxu0 0
    %407 = vmatpush1.bf16.xpose.msra.mxu0 0
    %408 = vmatprep.mubr.bf16.mxu0 0
    %409 = vmatmul.mubr.bf16.gmra.mrb[0].mxu0 %v371
    %v410 = vpop.f32.mrb[0].mxu0
    %v411 = vadd.f32 %v97, %v410
    %v412 = vpop.f32.mrb[0].mxu0
    %v413 = vpop.f32.mrb[0].mxu0
    %v414 = vpop.f32.mrb[0].mxu0
    %415 = vdwg.mxu0
    %vm416 = vcmask 64512
    %v417 = vsel %vm416, %v363, -inf
    %418 = vmax.xlane.f32.xlu0 %v417
    %v419 = vpop.xlane.xlu0 %418
    %v420 = vsel %vm416, %v411, -inf
    %421 = vmax.xlane.f32.xlu0 %v420
    %v422 = vpop.xlane.xlu0 %421
    %v423 = vsub.f32 %v363, %v419
    %v424 = vsub.f32 %v411, %v422
    %v425 = vmul.f32 %v423, 1.442695
    %v426 = vpow.pop %v425
    %v427 = vmul.f32 %v424, 1.442695
    %v428 = vpow.pop %v427
    %v429 = vsel %vm416, %v426, 0.0
    %430 = vadd.xlane.f32.xlu0 %v429
    %v431 = vpop.xlane.xlu0 %430
    %v432 = vsel %vm416, %v428, 0.0
    %433 = vadd.xlane.f32.xlu0 %v432
    %v434 = vpop.xlane.xlu0 %433
    %v435 = vrcp.pop %v431
    %v436 = vrcp.pop %v434
    %v437 = vmul.f32 %v426, %v435
    %v438 = vmul.f32 %v428, %v436
    %v439 = vpack.c.bf16 %v437, %v437
    %v440 = vpack.c.bf16 %v438, %v438
    %v442 = vsel %vm416, %v439, 0
    %vm444 = vcmask 1043456
    %v446 = vsel %vm444, %v312, 0
    %448 = vmatprep.subr.bf16.mxu0 0
    %449 = vmatpush1.bf16.msra.mxu0 %v446
    %450 = vmatprep.subr.bf16.mxu0 0
    %451 = vmatpush1.bf16.msra.mxu0 0
    %452 = vmatprep.subr.bf16.mxu0 0
    %453 = vmatpush1.bf16.msra.mxu0 0
    %454 = vmatprep.subr.bf16.mxu0 0
    %455 = vmatpush1.bf16.msra.mxu0 0
    %456 = vmatprep.subr.bf16.mxu0 0
    %457 = vmatpush1.bf16.msra.mxu0 0
    %458 = vmatprep.subr.bf16.mxu0 0
    %459 = vmatpush1.bf16.msra.mxu0 0
    %460 = vmatprep.subr.bf16.mxu0 0
    %461 = vmatpush1.bf16.msra.mxu0 0
    %462 = vmatprep.subr.bf16.mxu0 0
    %463 = vmatpush1.bf16.msra.mxu0 0
    %464 = vmatprep.subr.bf16.mxu0 0
    %465 = vmatpush1.bf16.msra.mxu0 0
    %466 = vmatprep.subr.bf16.mxu0 0
    %467 = vmatpush1.bf16.msra.mxu0 0
    %468 = vmatprep.subr.bf16.mxu0 0
    %469 = vmatpush1.bf16.msra.mxu0 0
    %470 = vmatprep.subr.bf16.mxu0 0
    %471 = vmatpush1.bf16.msra.mxu0 0
    %472 = vmatprep.subr.bf16.mxu0 0
    %473 = vmatpush1.bf16.msra.mxu0 0
    %474 = vmatprep.subr.bf16.mxu0 0
    %475 = vmatpush1.bf16.msra.mxu0 0
    %476 = vmatprep.subr.bf16.mxu0 0
    %477 = vmatpush1.bf16.msra.mxu0 0
    %478 = vmatprep.subr.bf16.mxu0 0
    %479 = vmatpush1.bf16.msra.mxu0 0
    %480 = vmatprep.mubr.bf16.mxu0 0
    %481 = vmatmul.mubr.bf16.gmra.mrb[0].mxu0 %v442
    %v482 = vpop.f32.mrb[0].mxu0
    %v483 = vadd.f32 0.0, %v482
    %v484 = vpop.f32.mrb[0].mxu0
    %v485 = vpop.f32.mrb[0].mxu0
    %v486 = vpop.f32.mrb[0].mxu0
    %487 = vdwg.mxu0
    %v489 = vsel %vm416, %v440, 0
    %v492 = vsel %vm444, %v318, 0
    %494 = vmatprep.subr.bf16.mxu0 0
    %495 = vmatpush1.bf16.msra.mxu0 %v492
    %496 = vmatprep.subr.bf16.mxu0 0
    %497 = vmatpush1.bf16.msra.mxu0 0
    %498 = vmatprep.subr.bf16.mxu0 0
    %499 = vmatpush1.bf16.msra.mxu0 0
    %500 = vmatprep.subr.bf16.mxu0 0
    %501 = vmatpush1.bf16.msra.mxu0 0
    %502 = vmatprep.subr.bf16.mxu0 0
    %503 = vmatpush1.bf16.msra.mxu0 0
    %504 = vmatprep.subr.bf16.mxu0 0
    %505 = vmatpush1.bf16.msra.mxu0 0
    %506 = vmatprep.subr.bf16.mxu0 0
    %507 = vmatpush1.bf16.msra.mxu0 0
    %508 = vmatprep.subr.bf16.mxu0 0
    %509 = vmatpush1.bf16.msra.mxu0 0
    %510 = vmatprep.subr.bf16.mxu0 0
    %511 = vmatpush1.bf16.msra.mxu0 0
    %512 = vmatprep.subr.bf16.mxu0 0
    %513 = vmatpush1.bf16.msra.mxu0 0
    %514 = vmatprep.subr.bf16.mxu0 0
    %515 = vmatpush1.bf16.msra.mxu0 0
    %516 = vmatprep.subr.bf16.mxu0 0
    %517 = vmatpush1.bf16.msra.mxu0 0
    %518 = vmatprep.subr.bf16.mxu0 0
    %519 = vmatpush1.bf16.msra.mxu0 0
    %520 = vmatprep.subr.bf16.mxu0 0
    %521 = vmatpush1.bf16.msra.mxu0 0
    %522 = vmatprep.subr.bf16.mxu0 0
    %523 = vmatpush1.bf16.msra.mxu0 0
    %524 = vmatprep.subr.bf16.mxu0 0
    %525 = vmatpush1.bf16.msra.mxu0 0
    %526 = vmatprep.mubr.bf16.mxu0 0
    %527 = vmatmul.mubr.bf16.gmra.mrb[0].mxu0 %v489
    %v528 = vpop.f32.mrb[0].mxu0
    %v529 = vadd.f32 0.0, %v528
    %v530 = vpop.f32.mrb[0].mxu0
    %v531 = vpop.f32.mrb[0].mxu0
    %v532 = vpop.f32.mrb[0].mxu0
    %533 = vdwg.mxu0
    %535 = vrot.lane.b32.xlu0 %v529, 16
    %v536 = vpop.permute.xlu0 %535
    %v538 = vsel %vm321, %v483, %v536
    %v539 = vrot.slane %v311, 4
    %540 = vrot.lane.b32.xlu0 %v539, 96
    %v541 = vpop.permute.xlu0 %540
    %v543 = vsel %vm321, %v539, 0
    %v546 = vsel %vm321, %v541, 0
    %548 = vmatprep.subr.bf16.mxu0 0
    %549 = vmatpush1.bf16.xpose.msra.mxu0 %v546
    %550 = vmatprep.subr.bf16.mxu0 0
    %551 = vmatpush1.bf16.xpose.msra.mxu0 0
    %552 = vmatprep.subr.bf16.mxu0 0
    %553 = vmatpush1.bf16.xpose.msra.mxu0 0
    %554 = vmatprep.subr.bf16.mxu0 0
    %555 = vmatpush1.bf16.xpose.msra.mxu0 0
    %556 = vmatprep.subr.bf16.mxu0 0
    %557 = vmatpush1.bf16.xpose.msra.mxu0 0
    %558 = vmatprep.subr.bf16.mxu0 0
    %559 = vmatpush1.bf16.xpose.msra.mxu0 0
    %560 = vmatprep.subr.bf16.mxu0 0
    %561 = vmatpush1.bf16.xpose.msra.mxu0 0
    %562 = vmatprep.subr.bf16.mxu0 0
    %563 = vmatpush1.bf16.xpose.msra.mxu0 0
    %564 = vmatprep.subr.bf16.mxu0 0
    %565 = vmatpush1.bf16.xpose.msra.mxu0 0
    %566 = vmatprep.subr.bf16.mxu0 0
    %567 = vmatpush1.bf16.xpose.msra.mxu0 0
    %568 = vmatprep.subr.bf16.mxu0 0
    %569 = vmatpush1.bf16.xpose.msra.mxu0 0
    %570 = vmatprep.subr.bf16.mxu0 0
    %571 = vmatpush1.bf16.xpose.msra.mxu0 0
    %572 = vmatprep.subr.bf16.mxu0 0
    %573 = vmatpush1.bf16.xpose.msra.mxu0 0
    %574 = vmatprep.subr.bf16.mxu0 0
    %575 = vmatpush1.bf16.xpose.msra.mxu0 0
    %576 = vmatprep.subr.bf16.mxu0 0
    %577 = vmatpush1.bf16.xpose.msra.mxu0 0
    %578 = vmatprep.subr.bf16.mxu0 0
    %579 = vmatpush1.bf16.xpose.msra.mxu0 0
    %580 = vmatprep.mubr.bf16.mxu0 0
    %581 = vmatmul.mubr.bf16.gmra.mrb[0].mxu0 %v543
    %v582 = vpop.f32.mrb[0].mxu0
    %v583 = vadd.f32 %v97, %v582
    %v584 = vpop.f32.mrb[0].mxu0
    %v585 = vpop.f32.mrb[0].mxu0
    %v586 = vpop.f32.mrb[0].mxu0
    %587 = vdwg.mxu0
    %v588 = vrot.slane %v315, 4
    %589 = vrot.lane.b32.xlu0 %v588, 96
    %v590 = vpop.permute.xlu0 %589
    %v592 = vsel %vm321, %v588, 0
    %v595 = vsel %vm321, %v590, 0
    %597 = vmatprep.subr.bf16.mxu0 0
    %598 = vmatpush1.bf16.xpose.msra.mxu0 %v595
    %599 = vmatprep.subr.bf16.mxu0 0
    %600 = vmatpush1.bf16.xpose.msra.mxu0 0
    %601 = vmatprep.subr.bf16.mxu0 0
    %602 = vmatpush1.bf16.xpose.msra.mxu0 0
    %603 = vmatprep.subr.bf16.mxu0 0
    %604 = vmatpush1.bf16.xpose.msra.mxu0 0
    %605 = vmatprep.subr.bf16.mxu0 0
    %606 = vmatpush1.bf16.xpose.msra.mxu0 0
    %607 = vmatprep.subr.bf16.mxu0 0
    %608 = vmatpush1.bf16.xpose.msra.mxu0 0
    %609 = vmatprep.subr.bf16.mxu0 0
    %610 = vmatpush1.bf16.xpose.msra.mxu0 0
    %611 = vmatprep.subr.bf16.mxu0 0
    %612 = vmatpush1.bf16.xpose.msra.mxu0 0
    %613 = vmatprep.subr.bf16.mxu0 0
    %614 = vmatpush1.bf16.xpose.msra.mxu0 0
    %615 = vmatprep.subr.bf16.mxu0 0
    %616 = vmatpush1.bf16.xpose.msra.mxu0 0
    %617 = vmatprep.subr.bf16.mxu0 0
    %618 = vmatpush1.bf16.xpose.msra.mxu0 0
    %619 = vmatprep.subr.bf16.mxu0 0
    %620 = vmatpush1.bf16.xpose.msra.mxu0 0
    %621 = vmatprep.subr.bf16.mxu0 0
    %622 = vmatpush1.bf16.xpose.msra.mxu0 0
    %623 = vmatprep.subr.bf16.mxu0 0
    %624 = vmatpush1.bf16.xpose.msra.mxu0 0
    %625 = vmatprep.subr.bf16.mxu0 0
    %626 = vmatpush1.bf16.xpose.msra.mxu0 0
    %627 = vmatprep.subr.bf16.mxu0 0
    %628 = vmatpush1.bf16.xpose.msra.mxu0 0
    %629 = vmatprep.mubr.bf16.mxu0 0
    %630 = vmatmul.mubr.bf16.gmra.mrb[0].mxu0 %v592
    %v631 = vpop.f32.mrb[0].mxu0
    %v632 = vadd.f32 %v97, %v631
    %v633 = vpop.f32.mrb[0].mxu0
    %v634 = vpop.f32.mrb[0].mxu0
    %v635 = vpop.f32.mrb[0].mxu0
    %636 = vdwg.mxu0
    %v637 = vsel %vm416, %v583, -inf
    %638 = vmax.xlane.f32.xlu0 %v637
    %v639 = vpop.xlane.xlu0 %638
    %v640 = vsel %vm416, %v632, -inf
    %641 = vmax.xlane.f32.xlu0 %v640
    %v642 = vpop.xlane.xlu0 %641
    %v643 = vsub.f32 %v583, %v639
    %v644 = vsub.f32 %v632, %v642
    %v645 = vmul.f32 %v643, 1.442695
    %v646 = vpow.pop %v645
    %v647 = vmul.f32 %v644, 1.442695
    %v648 = vpow.pop %v647
    %v649 = vsel %vm416, %v646, 0.0
    %650 = vadd.xlane.f32.xlu0 %v649
    %v651 = vpop.xlane.xlu0 %650
    %v652 = vsel %vm416, %v648, 0.0
    %653 = vadd.xlane.f32.xlu0 %v652
    %v654 = vpop.xlane.xlu0 %653
    %v655 = vrcp.pop %v651
    %v656 = vrcp.pop %v654
    %v657 = vmul.f32 %v646, %v655
    %v658 = vmul.f32 %v648, %v656
    %v659 = vpack.c.bf16 %v657, %v657
    %v660 = vpack.c.bf16 %v658, %v658
    %v661 = vrot.slane %v312, 4
    %v663 = vsel %vm416, %v659, 0
    %v666 = vsel %vm444, %v661, 0
    %668 = vmatprep.subr.bf16.mxu0 0
    %669 = vmatpush1.bf16.msra.mxu0 %v666
    %670 = vmatprep.subr.bf16.mxu0 0
    %671 = vmatpush1.bf16.msra.mxu0 0
    %672 = vmatprep.subr.bf16.mxu0 0
    %673 = vmatpush1.bf16.msra.mxu0 0
    %674 = vmatprep.subr.bf16.mxu0 0
    %675 = vmatpush1.bf16.msra.mxu0 0
    %676 = vmatprep.subr.bf16.mxu0 0
    %677 = vmatpush1.bf16.msra.mxu0 0
    %678 = vmatprep.subr.bf16.mxu0 0
    %679 = vmatpush1.bf16.msra.mxu0 0
    %680 = vmatprep.subr.bf16.mxu0 0
    %681 = vmatpush1.bf16.msra.mxu0 0
    %682 = vmatprep.subr.bf16.mxu0 0
    %683 = vmatpush1.bf16.msra.mxu0 0
    %684 = vmatprep.subr.bf16.mxu0 0
    %685 = vmatpush1.bf16.msra.mxu0 0
    %686 = vmatprep.subr.bf16.mxu0 0
    %687 = vmatpush1.bf16.msra.mxu0 0
    %688 = vmatprep.subr.bf16.mxu0 0
    %689 = vmatpush1.bf16.msra.mxu0 0
    %690 = vmatprep.subr.bf16.mxu0 0
    %691 = vmatpush1.bf16.msra.mxu0 0
    %692 = vmatprep.subr.bf16.mxu0 0
    %693 = vmatpush1.bf16.msra.mxu0 0
    %694 = vmatprep.subr.bf16.mxu0 0
    %695 = vmatpush1.bf16.msra.mxu0 0
    %696 = vmatprep.subr.bf16.mxu0 0
    %697 = vmatpush1.bf16.msra.mxu0 0
    %698 = vmatprep.subr.bf16.mxu0 0
    %699 = vmatpush1.bf16.msra.mxu0 0
    %700 = vmatprep.mubr.bf16.mxu0 0
    %701 = vmatmul.mubr.bf16.gmra.mrb[0].mxu0 %v663
    %v702 = vpop.f32.mrb[0].mxu0
    %v703 = vadd.f32 0.0, %v702
    %v704 = vpop.f32.mrb[0].mxu0
    %v705 = vpop.f32.mrb[0].mxu0
    %v706 = vpop.f32.mrb[0].mxu0
    %707 = vdwg.mxu0
    %v708 = vrot.slane %v318, 4
    %v710 = vsel %vm416, %v660, 0
    %v713 = vsel %vm444, %v708, 0
    %715 = vmatprep.subr.bf16.mxu0 0
    %716 = vmatpush1.bf16.msra.mxu0 %v713
    %717 = vmatprep.subr.bf16.mxu0 0
    %718 = vmatpush1.bf16.msra.mxu0 0
    %719 = vmatprep.subr.bf16.mxu0 0
    %720 = vmatpush1.bf16.msra.mxu0 0
    %721 = vmatprep.subr.bf16.mxu0 0
    %722 = vmatpush1.bf16.msra.mxu0 0
    %723 = vmatprep.subr.bf16.mxu0 0
    %724 = vmatpush1.bf16.msra.mxu0 0
    %725 = vmatprep.subr.bf16.mxu0 0
    %726 = vmatpush1.bf16.msra.mxu0 0
    %727 = vmatprep.subr.bf16.mxu0 0
    %728 = vmatpush1.bf16.msra.mxu0 0
    %729 = vmatprep.subr.bf16.mxu0 0
    %730 = vmatpush1.bf16.msra.mxu0 0
    %731 = vmatprep.subr.bf16.mxu0 0
    %732 = vmatpush1.bf16.msra.mxu0 0
    %733 = vmatprep.subr.bf16.mxu0 0
    %734 = vmatpush1.bf16.msra.mxu0 0
    %735 = vmatprep.subr.bf16.mxu0 0
    %736 = vmatpush1.bf16.msra.mxu0 0
    %737 = vmatprep.subr.bf16.mxu0 0
    %738 = vmatpush1.bf16.msra.mxu0 0
    %739 = vmatprep.subr.bf16.mxu0 0
    %740 = vmatpush1.bf16.msra.mxu0 0
    %741 = vmatprep.subr.bf16.mxu0 0
    %742 = vmatpush1.bf16.msra.mxu0 0
    %743 = vmatprep.subr.bf16.mxu0 0
    %744 = vmatpush1.bf16.msra.mxu0 0
    %745 = vmatprep.subr.bf16.mxu0 0
    %746 = vmatpush1.bf16.msra.mxu0 0
    %747 = vmatprep.mubr.bf16.mxu0 0
    %748 = vmatmul.mubr.bf16.gmra.mrb[0].mxu0 %v710
    %v749 = vpop.f32.mrb[0].mxu0
    %v750 = vadd.f32 0.0, %v749
    %v751 = vpop.f32.mrb[0].mxu0
    %v752 = vpop.f32.mrb[0].mxu0
    %v753 = vpop.f32.mrb[0].mxu0
    %754 = vdwg.mxu0
    %756 = vrot.lane.b32.xlu0 %v750, 16
    %v757 = vpop.permute.xlu0 %756
    %v759 = vsel %vm321, %v703, %v757
    %v760 = vpack.c.bf16 %v759, %v538
    %v761 = vld [vmem:[#allocation8] sm:$0xf]
    %v762 = vld [vmem:[#allocation8 + $0x4] sm:$0xf]
    %v763 = vld [vmem:[#allocation8 + $0x8] sm:$0xf]
    %v764 = vld [vmem:[#allocation8 + $0xc] sm:$0xf]
    %v765 = vlaneseq
    %v766 = vshrl.u32 %v765, 7
    %v767 = vsub.s32 7, %v766
    %v768 = vrot.slane %v98, %v767
    %v773 = vunpack.c.l.b16 %v761
    %v774 = vunpack.c.l.b16 %v762
    %v775 = vunpack.c.l.b16 %v763
    %v776 = vunpack.c.l.b16 %v764
    %v777 = vpack.c.b16 %v774, %v773
    %v778 = vpack.c.b16 %v776, %v775
    %v782 = vsel %vm100, %v760, 0
    %784 = vmatprep.subr.bf16.mxu0 0
    %785 = vmatpush1.bf16.msra.mxu0 %v777
    %786 = vmatprep.subr.bf16.mxu0 0
    %787 = vmatpush1.bf16.msra.mxu0 %v778
    %788 = vmatprep.subr.bf16.mxu0 0
    %789 = vmatpush1.bf16.msra.mxu0 0
    %790 = vmatprep.subr.bf16.mxu0 0
    %791 = vmatpush1.bf16.msra.mxu0 0
    %792 = vmatprep.subr.bf16.mxu0 0
    %793 = vmatpush1.bf16.msra.mxu0 0
    %794 = vmatprep.subr.bf16.mxu0 0
    %795 = vmatpush1.bf16.msra.mxu0 0
    %796 = vmatprep.subr.bf16.mxu0 0
    %797 = vmatpush1.bf16.msra.mxu0 0
    %798 = vmatprep.subr.bf16.mxu0 0
    %799 = vmatpush1.bf16.msra.mxu0 0
    %800 = vmatprep.subr.bf16.mxu0 0
    %801 = vmatpush1.bf16.msra.mxu0 0
    %802 = vmatprep.subr.bf16.mxu0 0
    %803 = vmatpush1.bf16.msra.mxu0 0
    %804 = vmatprep.subr.bf16.mxu0 0
    %805 = vmatpush1.bf16.msra.mxu0 0
    %806 = vmatprep.subr.bf16.mxu0 0
    %807 = vmatpush1.bf16.msra.mxu0 0
    %808 = vmatprep.subr.bf16.mxu0 0
    %809 = vmatpush1.bf16.msra.mxu0 0
    %810 = vmatprep.subr.bf16.mxu0 0
    %811 = vmatpush1.bf16.msra.mxu0 0
    %812 = vmatprep.subr.bf16.mxu0 0
    %813 = vmatpush1.bf16.msra.mxu0 0
    %814 = vmatprep.subr.bf16.mxu0 0
    %815 = vmatpush1.bf16.msra.mxu0 0
    %816 = vmatprep.mubr.bf16.mxu0 0
    %817 = vmatmul.mubr.bf16.gmra.mrb[0].mxu0 %v782
    %v818 = vpop.f32.mrb[0].mxu0
    %v819 = vadd.f32 %v768, %v818
    %v820 = vpop.f32.mrb[0].mxu0
    %v821 = vpop.f32.mrb[0].mxu0
    %v822 = vadd.f32 %v768, %v821
    %v823 = vpop.f32.mrb[0].mxu0
    %824 = vdwg.mxu0
    %v825 = vadd.f32 %v819, %v176
    %v826 = vadd.f32 %v822, %v177
    %v827 = vsel %vm100, %v825, 0.0
    %828 = vadd.xlane.f32.xlu0 %v827
    %v829 = vpop.xlane.xlu0 %828
    %v830 = vsel %vm100, %v826, 0.0
    %831 = vadd.xlane.f32.xlu0 %v830
    %v832 = vpop.xlane.xlu0 %831
    %v833 = vmul.f32 %v829, %v107
    %v834 = vmul.f32 %v832, %v107
    %v835 = vsub.f32 %v825, %v833
    %v836 = vsub.f32 %v826, %v834
    %v837 = vmul.f32 %v835, %v835
    %v838 = vmul.f32 %v836, %v836
    %v839 = vsel %vm100, %v837, 0.0
    %840 = vadd.xlane.f32.xlu0 %v839
    %v841 = vpop.xlane.xlu0 %840
    %v842 = vsel %vm100, %v838, 0.0
    %843 = vadd.xlane.f32.xlu0 %v842
    %v844 = vpop.xlane.xlu0 %843
    %v845 = vmul.f32 %v841, %v107
    %v846 = vmul.f32 %v844, %v107
    %v847 = vadd.f32 %v845, 1e-12
    %v848 = vadd.f32 %v846, 1e-12
    %v849 = vrsqrt.pop %v847
    %v850 = vrsqrt.pop %v848
    %v851 = vmul.f32 %v835, %v849
    %v852 = vmul.f32 %v836, %v850
    %v853 = vlaneseq
    %v854 = vshrl.u32 %v853, 7
    %v855 = vsub.s32 4, %v854
    %v856 = vrot.slane %v98, %v855
    %v857 = vmul.f32 %v851, %v856
    %v858 = vmul.f32 %v852, %v856
    %v859 = vlaneseq
    %v860 = vshrl.u32 %v859, 7
    %v861 = vsub.s32 5, %v860
    %v862 = vrot.slane %v98, %v861
    %v863 = vadd.f32 %v857, %v862
    %v864 = vadd.f32 %v858, %v862
    %v865 = vpack.c.bf16 %v864, %v863
    %v866 = vld [vmem:[%s9] sm:$0xf]
    %v867 = vld [vmem:[%s9 + $0x4] sm:$0xf]
    %v868 = vld [vmem:[%s9 + $0x8] sm:$0xf]
    %v869 = vld [vmem:[%s9 + $0xc] sm:$0xf]
    %v870 = vld [vmem:[%s5] sm:$0x1]
    %v872 = vlaneseq
    %v873 = vshrl.u32 %v872, 7
    %v874 = vsub.s32 0, %v873
    %v875 = vrot.slane %v870, %v874
    %v881 = vunpack.c.l.b16 %v866
    %v882 = vunpack.c.l.b16 %v867
    %v883 = vunpack.c.l.b16 %v868
    %v884 = vunpack.c.l.b16 %v869
    %v885 = vpack.c.b16 %v882, %v881
    %v886 = vpack.c.b16 %v884, %v883
    %v890 = vsel %vm100, %v865, 0
    %892 = vmatprep.subr.bf16.mxu0 0
    %893 = vmatpush1.bf16.msra.mxu0 %v885
    %894 = vmatprep.subr.bf16.mxu0 0
    %895 = vmatpush1.bf16.msra.mxu0 %v886
    %896 = vmatprep.subr.bf16.mxu0 0
    %897 = vmatpush1.bf16.msra.mxu0 0
    %898 = vmatprep.subr.bf16.mxu0 0
    %899 = vmatpush1.bf16.msra.mxu0 0
    %900 = vmatprep.subr.bf16.mxu0 0
    %901 = vmatpush1.bf16.msra.mxu0 0
    %902 = vmatprep.subr.bf16.mxu0 0
    %903 = vmatpush1.bf16.msra.mxu0 0
    %904 = vmatprep.subr.bf16.mxu0 0
    %905 = vmatpush1.bf16.msra.mxu0 0
    %906 = vmatprep.subr.bf16.mxu0 0
    %907 = vmatpush1.bf16.msra.mxu0 0
    %908 = vmatprep.subr.bf16.mxu0 0
    %909 = vmatpush1.bf16.msra.mxu0 0
    %910 = vmatprep.subr.bf16.mxu0 0
    %911 = vmatpush1.bf16.msra.mxu0 0
    %912 = vmatprep.subr.bf16.mxu0 0
    %913 = vmatpush1.bf16.msra.mxu0 0
    %914 = vmatprep.subr.bf16.mxu0 0
    %915 = vmatpush1.bf16.msra.mxu0 0
    %916 = vmatprep.subr.bf16.mxu0 0
    %917 = vmatpush1.bf16.msra.mxu0 0
    %918 = vmatprep.subr.bf16.mxu0 0
    %919 = vmatpush1.bf16.msra.mxu0 0
    %920 = vmatprep.subr.bf16.mxu0 0
    %921 = vmatpush1.bf16.msra.mxu0 0
    %922 = vmatprep.subr.bf16.mxu0 0
    %923 = vmatpush1.bf16.msra.mxu0 0
    %924 = vmatprep.mubr.bf16.mxu0 0
    %925 = vmatmul.mubr.bf16.gmra.mrb[0].mxu0 %v890
    %v926 = vpop.f32.mrb[0].mxu0
    %v927 = vadd.f32 %v875, %v926
    %v928 = vpop.f32.mrb[0].mxu0
    %v929 = vpop.f32.mrb[0].mxu0
    %v930 = vadd.f32 %v875, %v929
    %v931 = vpop.f32.mrb[0].mxu0
    %932 = vdwg.mxu0
    %v933 = vmul.f32 %v927, 0.5
    %v934 = vmul.f32 %v930, 0.5
    %v935 = vmul.f32 %v927, 0.70710677
    %v936 = vmul.f32 %v930, 0.70710677
    %v937 = verf.f32.pop %v935
    %v938 = verf.f32.pop %v936
    %v939 = vadd.f32 %v937, 1.0
    %v940 = vadd.f32 %v938, 1.0
    %v941 = vmul.f32 %v933, %v939
    %v942 = vmul.f32 %v934, %v940
    %v943 = vpack.c.bf16 %v942, %v941
    %v944 = vld [vmem:[%s10] sm:$0xf]
    %v945 = vld [vmem:[%s10 + $0x4] sm:$0xf]
    %v946 = vld [vmem:[%s10 + $0x8] sm:$0xf]
    %v947 = vld [vmem:[%s10 + $0xc] sm:$0xf]
    %v948 = vld [vmem:[%s10 + $0x10] sm:$0xf]
    %v949 = vld [vmem:[%s10 + $0x14] sm:$0xf]
    %v950 = vld [vmem:[%s10 + $0x18] sm:$0xf]
    %v951 = vld [vmem:[%s10 + $0x1c] sm:$0xf]
    %v952 = vlaneseq
    %v953 = vshrl.u32 %v952, 7
    %v954 = vsub.s32 0, %v953
    %v955 = vrot.slane %v99, %v954
    %v964 = vunpack.c.l.b16 %v944
    %v965 = vunpack.c.l.b16 %v945
    %v966 = vunpack.c.l.b16 %v946
    %v967 = vunpack.c.l.b16 %v947
    %v968 = vunpack.c.l.b16 %v948
    %v969 = vunpack.c.l.b16 %v949
    %v970 = vunpack.c.l.b16 %v950
    %v971 = vunpack.c.l.b16 %v951
    %v972 = vpack.c.b16 %v965, %v964
    %v973 = vpack.c.b16 %v967, %v966
    %v974 = vpack.c.b16 %v969, %v968
    %v975 = vpack.c.b16 %v971, %v970
    %vm980 = vcmask 523264
    %v982 = vsel %vm980, %v943, 0
    %984 = vmatprep.subr.bf16.mxu0 0
    %985 = vmatpush1.bf16.msra.mxu0 %v972
    %986 = vmatprep.subr.bf16.mxu0 0
    %987 = vmatpush1.bf16.msra.mxu0 %v973
    %988 = vmatprep.subr.bf16.mxu0 0
    %989 = vmatpush1.bf16.msra.mxu0 %v974
    %990 = vmatprep.subr.bf16.mxu0 0
    %991 = vmatpush1.bf16.msra.mxu0 %v975
    %992 = vmatprep.subr.bf16.mxu0 0
    %993 = vmatpush1.bf16.msra.mxu0 0
    %994 = vmatprep.subr.bf16.mxu0 0
    %995 = vmatpush1.bf16.msra.mxu0 0
    %996 = vmatprep.subr.bf16.mxu0 0
    %997 = vmatpush1.bf16.msra.mxu0 0
    %998 = vmatprep.subr.bf16.mxu0 0
    %999 = vmatpush1.bf16.msra.mxu0 0
    %1000 = vmatprep.subr.bf16.mxu0 0
    %1001 = vmatpush1.bf16.msra.mxu0 0
    %1002 = vmatprep.subr.bf16.mxu0 0
    %1003 = vmatpush1.bf16.msra.mxu0 0
    %1004 = vmatprep.subr.bf16.mxu0 0
    %1005 = vmatpush1.bf16.msra.mxu0 0
    %1006 = vmatprep.subr.bf16.mxu0 0
    %1007 = vmatpush1.bf16.msra.mxu0 0
    %1008 = vmatprep.subr.bf16.mxu0 0
    %1009 = vmatpush1.bf16.msra.mxu0 0
    %1010 = vmatprep.subr.bf16.mxu0 0
    %1011 = vmatpush1.bf16.msra.mxu0 0
    %1012 = vmatprep.subr.bf16.mxu0 0
    %1013 = vmatpush1.bf16.msra.mxu0 0
    %1014 = vmatprep.subr.bf16.mxu0 0
    %1015 = vmatpush1.bf16.msra.mxu0 0
    %1016 = vmatprep.mubr.bf16.mxu0 0
    %1017 = vmatmul.mubr.bf16.gmra.mrb[0].mxu0 %v982
    %v1018 = vpop.f32.mrb[0].mxu0
    %v1019 = vadd.f32 %v955, %v1018
    %v1020 = vpop.f32.mrb[0].mxu0
    %v1021 = vpop.f32.mrb[0].mxu0
    %v1022 = vadd.f32 %v955, %v1021
    %v1023 = vpop.f32.mrb[0].mxu0
    %1024 = vdwg.mxu0
    %v1025 = vadd.f32 %v1019, %v863
    %v1026 = vadd.f32 %v1022, %v864
    %1027 = vst.msk [vmem:[#allocation10] sm:$0xff] %vm100, %v1025
    %1028 = vst.msk [vmem:[#allocation10 + $0x8] sm:$0xff] %vm100, %v1026
    // Predicated region
    $region62: #{tpu_custom_call.1} parent=1 // pred_check
      _
    $region63: #{tpu_custom_call.1} parent=1 // pred_check_branch
      %1030 = sbr.rel (0) target = $region65
    $region64: #{tpu_custom_call.1} parent=1 // pred_region
      %s1032 = ssub.s32 256, 256
      %1033 = vsyncadd [#allocation4], %s1032
      %s1034 = sshll.u32 [#allocation10], 4
      %s1035 = int_to_ptr.vmem [resolvable:$true] %s1034
      %1040 = dma.vmem_to_hbm [thread:$0]  %s1035, 256, %s11, [#allocation4], 128, 128, 8
    $region65: #{tpu_custom_call.1} parent=1 // pred_fallthru
      _
    // Predicated region
    $region66: #{tpu_custom_call.1} parent=1 // pred_check
      _
    $region67: #{tpu_custom_call.1} parent=1 // pred_check_branch
      %1042 = sbr.rel (0) target = $region69
    $region68: #{tpu_custom_call.1} parent=1 // pred_region
      %1043 = dma.done [#allocation4], 256
    $region69: #{tpu_custom_call.1} parent=1 // pred_fallthru
      _
    %1044 = vsyncpa [#allocation3], 1
    %1045 = vsyncpa [#allocation6], 1
    %1046 = vsyncpa [#allocation9], 1
    %1047 = vsyncpa [#allocation4], 1

// kernel: tpu_custom_call.1
$region0: #{tpu_custom_call.1}
  #allocation0 [shape = 'u32[]', space=smem, size = 0x4, offset = 0x4, fixed_abs, tag = 'smem constant byte address 0x4 - core index']
  #allocation1 [shape = 'u32[144,128]{1,0:T(1,128)}', space=vmem, size = 0x12000, scoped, tag = 'internal scratch']
  %s0 = inlined_call_operand.vmem [shape: f32[2,8,32], index: 0, kind: input, shape index: {}]
  %s1 = inlined_call_operand.vmem [shape: f32[2,8,32], index: 1, kind: input, shape index: {}]
  %s2 = inlined_call_operand.hbm [shape: f32[8,8], index: 2, kind: input, shape index: {}]
  %s3 = inlined_call_operand.vmem [shape: f32[9,32], index: 3, kind: input, shape index: {}]
  %s4 = inlined_call_operand.vmem [shape: f32[1,64], index: 4, kind: input, shape index: {}]
  %s5 = inlined_call_operand.vmem [shape: f32[1,64], index: 5, kind: input, shape index: {}]
  %s6 = inlined_call_operand.hbm [shape: bf16[32,64], index: 6, kind: input, shape index: {}]
  %s7 = inlined_call_operand.hbm [shape: bf16[32,32], index: 7, kind: input, shape index: {}]
  %s8 = inlined_call_operand.hbm [shape: bf16[32,32], index: 8, kind: input, shape index: {}]
  %s9 = inlined_call_operand.vmem [shape: bf16[32,64], index: 9, kind: input, shape index: {}]
  %s10 = inlined_call_operand.vmem [shape: bf16[64,32], index: 10, kind: input, shape index: {}]
  %s11 = inlined_call_operand.hbm [shape: f32[2,8,32], index: 11, kind: output, shape index: {}]
  %s12 = sld [smem:[#allocation0]]
  $region70: #{tpu_custom_call.1} parent=0
    _
  %s14 = ssub.s32 1, %s12
  %s15 = scalar_select 0, %s14, %s12
  $region1: #{tpu_custom_call.1} parent=0
    #allocation2 [shape = 'u8[4096]{0}', space=vmem, size = 0x1000, scoped, tag = 'input window, operand 2, single buffered']
    #allocation3 [shape = 's32[1]{0}', space=sflag, size = 0x4, scoped, tag = 'scoped memory for tpu_custom_call.1']
    #allocation4 [shape = 's32[1]{0}', space=sflag, size = 0x4, scoped, tag = 'scoped memory for tpu_custom_call.1']
    #allocation5 [shape = 'u8[8192]{0}', space=vmem, size = 0x2000, scoped, tag = 'input window, operand 6, single buffered']
    #allocation6 [shape = 's32[1]{0}', space=sflag, size = 0x4, scoped, tag = 'scoped memory for tpu_custom_call.1']
    #allocation7 [shape = 'u8[8192]{0}', space=vmem, size = 0x2000, scoped, tag = 'input window, operand 7, single buffered']
    #allocation8 [shape = 'u8[8192]{0}', space=vmem, size = 0x2000, scoped, tag = 'input window, operand 8, single buffered']
    #allocation9 [shape = 's32[1]{0}', space=sflag, size = 0x4, scoped, tag = 'scoped memory for tpu_custom_call.1']
    #allocation10 [shape = 'u8[8192]{0}', space=vmem, size = 0x2000, scoped, tag = 'output window, operand 0, single buffered']
    %16 = vsyncpa [#allocation3], 0
    %17 = vsyncpa [#allocation6], 0
    %18 = vsyncpa [#allocation9], 0
    %19 = vsyncpa [#allocation4], 0
    // Predicated region
    $region2: #{tpu_custom_call.1} parent=1 // pred_check
      _
    $region3: #{tpu_custom_call.1} parent=1 // pred_check_branch
      %21 = sbr.rel (0) target = $region5
    $region4: #{tpu_custom_call.1} parent=1 // pred_region
      _
    $region5: #{tpu_custom_call.1} parent=1 // pred_fallthru
      _
    // Predicated region
    $region6: #{tpu_custom_call.1} parent=1 // pred_check
      _
    $region7: #{tpu_custom_call.1} parent=1 // pred_check_branch
      %23 = sbr.rel (0) target = $region9
    $region8: #{tpu_custom_call.1} parent=1 // pred_region
      _
    $region9: #{tpu_custom_call.1} parent=1 // pred_fallthru
      _
    // Predicated region
    $region10: #{tpu_custom_call.1} parent=1 // pred_check
      _
    $region11: #{tpu_custom_call.1} parent=1 // pred_check_branch
      %25 = sbr.rel (0) target = $region13
    $region12: #{tpu_custom_call.1} parent=1 // pred_region
      %s27 = ssub.s32 128, 128
      %28 = vsyncadd [#allocation3], %s27
      %s30 = sshll.u32 [#allocation2], 4
      %s31 = int_to_ptr.vmem [resolvable:$true] %s30
      %33 = dma.hbm_to_vmem [thread:$0]  %s2, 128, %s31, [#allocation3]
    $region13: #{tpu_custom_call.1} parent=1 // pred_fallthru
      _
    // Predicated region
    $region14: #{tpu_custom_call.1} parent=1 // pred_check
      _
    $region15: #{tpu_custom_call.1} parent=1 // pred_check_branch
      %35 = sbr.rel (0) target = $region17
    $region16: #{tpu_custom_call.1} parent=1 // pred_region
      _
    $region17: #{tpu_custom_call.1} parent=1 // pred_fallthru
      _
    // Predicated region
    $region18: #{tpu_custom_call.1} parent=1 // pred_check
      _
    $region19: #{tpu_custom_call.1} parent=1 // pred_check_branch
      %37 = sbr.rel (0) target = $region21
    $region20: #{tpu_custom_call.1} parent=1 // pred_region
      _
    $region21: #{tpu_custom_call.1} parent=1 // pred_fallthru
      _
    // Predicated region
    $region22: #{tpu_custom_call.1} parent=1 // pred_check
      _
    $region23: #{tpu_custom_call.1} parent=1 // pred_check_branch
      %39 = sbr.rel (0) target = $region25
    $region24: #{tpu_custom_call.1} parent=1 // pred_region
      _
    $region25: #{tpu_custom_call.1} parent=1 // pred_fallthru
      _
    // Predicated region
    $region26: #{tpu_custom_call.1} parent=1 // pred_check
      _
    $region27: #{tpu_custom_call.1} parent=1 // pred_check_branch
      %41 = sbr.rel (0) target = $region29
    $region28: #{tpu_custom_call.1} parent=1 // pred_region
      %s43 = ssub.s32 256, 256
      %44 = vsyncadd [#allocation6], %s43
      %s45 = sshll.u32 [#allocation5], 4
      %s46 = int_to_ptr.vmem [resolvable:$true] %s45
      %51 = dma.hbm_to_vmem [thread:$0]  %s6, 256, %s46, [#allocation6], 64, 64, 4
    $region29: #{tpu_custom_call.1} parent=1 // pred_fallthru
      _
    // Predicated region
    $region30: #{tpu_custom_call.1} parent=1 // pred_check
      _
    $region31: #{tpu_custom_call.1} parent=1 // pred_check_branch
      %53 = sbr.rel (0) target = $region33
    $region32: #{tpu_custom_call.1} parent=1 // pred_region
      %s55 = ssub.s32 256, 256
      %56 = vsyncadd [#allocation6], %s55
      %s57 = sshll.u32 [#allocation7], 4
      %s58 = int_to_ptr.vmem [resolvable:$true] %s57
      %63 = dma.hbm_to_vmem [thread:$0]  %s7, 256, %s58, [#allocation6], 64, 64, 4
    $region33: #{tpu_custom_call.1} parent=1 // pred_fallthru
      _
    // Predicated region
    $region34: #{tpu_custom_call.1} parent=1 // pred_check
      _
    $region35: #{tpu_custom_call.1} parent=1 // pred_check_branch
      %65 = sbr.rel (0) target = $region37
    $region36: #{tpu_custom_call.1} parent=1 // pred_region
      %s67 = ssub.s32 256, 256
      %68 = vsyncadd [#allocation9], %s67
      %s69 = sshll.u32 [#allocation8], 4
      %s70 = int_to_ptr.vmem [resolvable:$true] %s69
      %75 = dma.hbm_to_vmem [thread:$0]  %s8, 256, %s70, [#allocation9], 64, 64, 4
    $region37: #{tpu_custom_call.1} parent=1 // pred_fallthru
      _
    // Predicated region
    $region38: #{tpu_custom_call.1} parent=1 // pred_check
      _
    $region39: #{tpu_custom_call.1} parent=1 // pred_check_branch
      %77 = sbr.rel (0) target = $region41
    $region40: #{tpu_custom_call.1} parent=1 // pred_region
      _
    $region41: #{tpu_custom_call.1} parent=1 // pred_fallthru
      _
    // Predicated region
    $region42: #{tpu_custom_call.1} parent=1 // pred_check
      _
    $region43: #{tpu_custom_call.1} parent=1 // pred_check_branch
      %79 = sbr.rel (0) target = $region45
    $region44: #{tpu_custom_call.1} parent=1 // pred_region
      _
    $region45: #{tpu_custom_call.1} parent=1 // pred_fallthru
      _
    // Predicated region
    $region46: #{tpu_custom_call.1} parent=1 // pred_check
      _
    $region47: #{tpu_custom_call.1} parent=1 // pred_check_branch
      %81 = sbr.rel (0) target = $region49
    $region48: #{tpu_custom_call.1} parent=1 // pred_region
      %82 = dma.done [#allocation3], 128
    $region49: #{tpu_custom_call.1} parent=1 // pred_fallthru
      _
    // Predicated region
    $region50: #{tpu_custom_call.1} parent=1 // pred_check
      _
    $region51: #{tpu_custom_call.1} parent=1 // pred_check_branch
      %84 = sbr.rel (0) target = $region53
    $region52: #{tpu_custom_call.1} parent=1 // pred_region
      %85 = dma.done [#allocation6], 256
    $region53: #{tpu_custom_call.1} parent=1 // pred_fallthru
      _
    // Predicated region
    $region54: #{tpu_custom_call.1} parent=1 // pred_check
      _
    $region55: #{tpu_custom_call.1} parent=1 // pred_check_branch
      %87 = sbr.rel (0) target = $region57
    $region56: #{tpu_custom_call.1} parent=1 // pred_region
      %88 = dma.done [#allocation6], 256
    $region57: #{tpu_custom_call.1} parent=1 // pred_fallthru
      _
    // Predicated region
    $region58: #{tpu_custom_call.1} parent=1 // pred_check
      _
    $region59: #{tpu_custom_call.1} parent=1 // pred_check_branch
      %90 = sbr.rel (0) target = $region61
    $region60: #{tpu_custom_call.1} parent=1 // pred_region
      %91 = dma.done [#allocation9], 256
    $region61: #{tpu_custom_call.1} parent=1 // pred_fallthru
      _
    %v93 = vld [vmem:[%s0] sm:$0xff]
    %v94 = vld [vmem:[%s0 + $0x8] sm:$0xff]
    %v95 = vld [vmem:[%s1] sm:$0xff]
    %v96 = vld [vmem:[%s1 + $0x8] sm:$0xff]
    %v97 = vld [vmem:[#allocation2] sm:$0xff]
    %v98 = vld [vmem:[%s3] sm:$0xff]
    %v99 = vld [vmem:[%s3 + $0x8] sm:$0x1]
    %vm100 = vcmask 261120
    %v101 = vsel %vm100, %v93, 0.0
    %102 = vadd.xlane.f32.xlu0 %v101
    %v103 = vpop.xlane.xlu0 %102
    %v104 = vsel %vm100, %v94, 0.0
    %105 = vadd.xlane.f32.xlu0 %v104
    %v106 = vpop.xlane.xlu0 %105
    %v107 = vrcp.pop 32.0
    %v108 = vmul.f32 %v103, %v107
    %v109 = vmul.f32 %v106, %v107
    %v110 = vsub.f32 %v93, %v108
    %v111 = vsub.f32 %v94, %v109
    %v112 = vmul.f32 %v110, %v110
    %v113 = vmul.f32 %v111, %v111
    %v114 = vsel %vm100, %v112, 0.0
    %115 = vadd.xlane.f32.xlu0 %v114
    %v116 = vpop.xlane.xlu0 %115
    %v117 = vsel %vm100, %v113, 0.0
    %118 = vadd.xlane.f32.xlu0 %v117
    %v119 = vpop.xlane.xlu0 %118
    %v120 = vmul.f32 %v116, %v107
    %v121 = vmul.f32 %v119, %v107
    %v122 = vadd.f32 %v120, 1e-12
    %v123 = vadd.f32 %v121, 1e-12
    %v124 = vrsqrt.pop %v122
    %v125 = vrsqrt.pop %v123
    %v126 = vmul.f32 %v110, %v124
    %v127 = vmul.f32 %v111, %v125
    %v128 = vlaneseq
    %v129 = vshrl.u32 %v128, 7
    %v130 = vsub.s32 0, %v129
    %v131 = vrot.slane %v98, %v130
    %v132 = vmul.f32 %v126, %v131
    %v133 = vmul.f32 %v127, %v131
    %v134 = vlaneseq
    %v135 = vshrl.u32 %v134, 7
    %v136 = vsub.s32 1, %v135
    %v137 = vrot.slane %v98, %v136
    %v138 = vadd.f32 %v132, %v137
    %v139 = vadd.f32 %v133, %v137
    %v140 = vsel %vm100, %v95, 0.0
    %141 = vadd.xlane.f32.xlu0 %v140
    %v142 = vpop.xlane.xlu0 %141
    %v143 = vsel %vm100, %v96, 0.0
    %144 = vadd.xlane.f32.xlu0 %v143
    %v145 = vpop.xlane.xlu0 %144
    %v146 = vmul.f32 %v142, %v107
    %v147 = vmul.f32 %v145, %v107
    %v148 = vsub.f32 %v95, %v146
    %v149 = vsub.f32 %v96, %v147
    %v150 = vmul.f32 %v148, %v148
    %v151 = vmul.f32 %v149, %v149
    %v152 = vsel %vm100, %v150, 0.0
    %153 = vadd.xlane.f32.xlu0 %v152
    %v154 = vpop.xlane.xlu0 %153
    %v155 = vsel %vm100, %v151, 0.0
    %156 = vadd.xlane.f32.xlu0 %v155
    %v157 = vpop.xlane.xlu0 %156
    %v158 = vmul.f32 %v154, %v107
    %v159 = vmul.f32 %v157, %v107
    %v160 = vadd.f32 %v158, 1e-12
    %v161 = vadd.f32 %v159, 1e-12
    %v162 = vrsqrt.pop %v160
    %v163 = vrsqrt.pop %v161
    %v164 = vmul.f32 %v148, %v162
    %v165 = vmul.f32 %v149, %v163
    %v166 = vlaneseq
    %v167 = vshrl.u32 %v166, 7
    %v168 = vsub.s32 2, %v167
    %v169 = vrot.slane %v98, %v168
    %v170 = vmul.f32 %v164, %v169
    %v171 = vmul.f32 %v165, %v169
    %v172 = vlaneseq
    %v173 = vshrl.u32 %v172, 7
    %v174 = vsub.s32 3, %v173
    %v175 = vrot.slane %v98, %v174
    %v176 = vadd.f32 %v170, %v175
    %v177 = vadd.f32 %v171, %v175
    %v178 = vpack.c.bf16 %v139, %v138
    %v179 = vld [vmem:[#allocation5] sm:$0xf]
    %v180 = vld [vmem:[#allocation5 + $0x4] sm:$0xf]
    %v181 = vld [vmem:[#allocation5 + $0x8] sm:$0xf]
    %v182 = vld [vmem:[#allocation5 + $0xc] sm:$0xf]
    %v183 = vld [vmem:[%s4] sm:$0x1]
    %v185 = vlaneseq
    %v186 = vshrl.u32 %v185, 7
    %v187 = vsub.s32 0, %v186
    %v188 = vrot.slane %v183, %v187
    %v194 = vunpack.c.l.b16 %v179
    %v195 = vunpack.c.l.b16 %v180
    %v196 = vunpack.c.l.b16 %v181
    %v197 = vunpack.c.l.b16 %v182
    %v198 = vpack.c.b16 %v195, %v194
    %v199 = vpack.c.b16 %v197, %v196
    %v203 = vsel %vm100, %v178, 0
    %205 = vmatprep.subr.bf16.mxu0 0
    %206 = vmatpush1.bf16.msra.mxu0 %v198
    %207 = vmatprep.subr.bf16.mxu0 0
    %208 = vmatpush1.bf16.msra.mxu0 %v199
    %209 = vmatprep.subr.bf16.mxu0 0
    %210 = vmatpush1.bf16.msra.mxu0 0
    %211 = vmatprep.subr.bf16.mxu0 0
    %212 = vmatpush1.bf16.msra.mxu0 0
    %213 = vmatprep.subr.bf16.mxu0 0
    %214 = vmatpush1.bf16.msra.mxu0 0
    %215 = vmatprep.subr.bf16.mxu0 0
    %216 = vmatpush1.bf16.msra.mxu0 0
    %217 = vmatprep.subr.bf16.mxu0 0
    %218 = vmatpush1.bf16.msra.mxu0 0
    %219 = vmatprep.subr.bf16.mxu0 0
    %220 = vmatpush1.bf16.msra.mxu0 0
    %221 = vmatprep.subr.bf16.mxu0 0
    %222 = vmatpush1.bf16.msra.mxu0 0
    %223 = vmatprep.subr.bf16.mxu0 0
    %224 = vmatpush1.bf16.msra.mxu0 0
    %225 = vmatprep.subr.bf16.mxu0 0
    %226 = vmatpush1.bf16.msra.mxu0 0
    %227 = vmatprep.subr.bf16.mxu0 0
    %228 = vmatpush1.bf16.msra.mxu0 0
    %229 = vmatprep.subr.bf16.mxu0 0
    %230 = vmatpush1.bf16.msra.mxu0 0
    %231 = vmatprep.subr.bf16.mxu0 0
    %232 = vmatpush1.bf16.msra.mxu0 0
    %233 = vmatprep.subr.bf16.mxu0 0
    %234 = vmatpush1.bf16.msra.mxu0 0
    %235 = vmatprep.subr.bf16.mxu0 0
    %236 = vmatpush1.bf16.msra.mxu0 0
    %237 = vmatprep.mubr.bf16.mxu0 0
    %238 = vmatmul.mubr.bf16.gmra.mrb[0].mxu0 %v203
    %v239 = vpop.f32.mrb[0].mxu0
    %v240 = vadd.f32 %v188, %v239
    %v241 = vpop.f32.mrb[0].mxu0
    %v242 = vpop.f32.mrb[0].mxu0
    %v243 = vadd.f32 %v188, %v242
    %v244 = vpop.f32.mrb[0].mxu0
    %245 = vdwg.mxu0
    %v246 = vpack.c.bf16 %v177, %v176
    %v247 = vld [vmem:[#allocation7] sm:$0xf]
    %v248 = vld [vmem:[#allocation7 + $0x4] sm:$0xf]
    %v249 = vld [vmem:[#allocation7 + $0x8] sm:$0xf]
    %v250 = vld [vmem:[#allocation7 + $0xc] sm:$0xf]
    %v251 = vlaneseq
    %v252 = vshrl.u32 %v251, 7
    %v253 = vsub.s32 6, %v252
    %v254 = vrot.slane %v98, %v253
    %v259 = vunpack.c.l.b16 %v247
    %v260 = vunpack.c.l.b16 %v248
    %v261 = vunpack.c.l.b16 %v249
    %v262 = vunpack.c.l.b16 %v250
    %v263 = vpack.c.b16 %v260, %v259
    %v264 = vpack.c.b16 %v262, %v261
    %v268 = vsel %vm100, %v246, 0
    %270 = vmatprep.subr.bf16.mxu0 0
    %271 = vmatpush1.bf16.msra.mxu0 %v263
    %272 = vmatprep.subr.bf16.mxu0 0
    %273 = vmatpush1.bf16.msra.mxu0 %v264
    %274 = vmatprep.subr.bf16.mxu0 0
    %275 = vmatpush1.bf16.msra.mxu0 0
    %276 = vmatprep.subr.bf16.mxu0 0
    %277 = vmatpush1.bf16.msra.mxu0 0
    %278 = vmatprep.subr.bf16.mxu0 0
    %279 = vmatpush1.bf16.msra.mxu0 0
    %280 = vmatprep.subr.bf16.mxu0 0
    %281 = vmatpush1.bf16.msra.mxu0 0
    %282 = vmatprep.subr.bf16.mxu0 0
    %283 = vmatpush1.bf16.msra.mxu0 0
    %284 = vmatprep.subr.bf16.mxu0 0
    %285 = vmatpush1.bf16.msra.mxu0 0
    %286 = vmatprep.subr.bf16.mxu0 0
    %287 = vmatpush1.bf16.msra.mxu0 0
    %288 = vmatprep.subr.bf16.mxu0 0
    %289 = vmatpush1.bf16.msra.mxu0 0
    %290 = vmatprep.subr.bf16.mxu0 0
    %291 = vmatpush1.bf16.msra.mxu0 0
    %292 = vmatprep.subr.bf16.mxu0 0
    %293 = vmatpush1.bf16.msra.mxu0 0
    %294 = vmatprep.subr.bf16.mxu0 0
    %295 = vmatpush1.bf16.msra.mxu0 0
    %296 = vmatprep.subr.bf16.mxu0 0
    %297 = vmatpush1.bf16.msra.mxu0 0
    %298 = vmatprep.subr.bf16.mxu0 0
    %299 = vmatpush1.bf16.msra.mxu0 0
    %300 = vmatprep.subr.bf16.mxu0 0
    %301 = vmatpush1.bf16.msra.mxu0 0
    %302 = vmatprep.mubr.bf16.mxu0 0
    %303 = vmatmul.mubr.bf16.gmra.mrb[0].mxu0 %v268
    %v304 = vpop.f32.mrb[0].mxu0
    %v305 = vadd.f32 %v254, %v304
    %v306 = vpop.f32.mrb[0].mxu0
    %v307 = vpop.f32.mrb[0].mxu0
    %v308 = vadd.f32 %v254, %v307
    %v309 = vpop.f32.mrb[0].mxu0
    %310 = vdwg.mxu0
    %v311 = vpack.c.bf16 %v243, %v240
    %v312 = vpack.c.bf16 %v308, %v305
    %314 = vrot.lane.b32.xlu0 %v311, 112
    %v315 = vpop.permute.xlu0 %314
    %317 = vrot.lane.b32.xlu0 %v312, 112
    %v318 = vpop.permute.xlu0 %317
    %319 = vrot.lane.b32.xlu0 %v311, 96
    %v320 = vpop.permute.xlu0 %319
    %vm321 = vcmask 130048
    %v323 = vsel %vm321, %v311, 0
    %v326 = vsel %vm321, %v320, 0
    %328 = vmatprep.subr.bf16.mxu0 0
    %329 = vmatpush1.bf16.xpose.msra.mxu0 %v326
    %330 = vmatprep.subr.bf16.mxu0 0
    %331 = vmatpush1.bf16.xpose.msra.mxu0 0
    %332 = vmatprep.subr.bf16.mxu0 0
    %333 = vmatpush1.bf16.xpose.msra.mxu0 0
    %334 = vmatprep.subr.bf16.mxu0 0
    %335 = vmatpush1.bf16.xpose.msra.mxu0 0
    %336 = vmatprep.subr.bf16.mxu0 0
    %337 = vmatpush1.bf16.xpose.msra.mxu0 0
    %338 = vmatprep.subr.bf16.mxu0 0
    %339 = vmatpush1.bf16.xpose.msra.mxu0 0
    %340 = vmatprep.subr.bf16.mxu0 0
    %341 = vmatpush1.bf16.xpose.msra.mxu0 0
    %342 = vmatprep.subr.bf16.mxu0 0
    %343 = vmatpush1.bf16.xpose.msra.mxu0 0
    %344 = vmatprep.subr.bf16.mxu0 0
    %345 = vmatpush1.bf16.xpose.msra.mxu0 0
    %346 = vmatprep.subr.bf16.mxu0 0
    %347 = vmatpush1.bf16.xpose.msra.mxu0 0
    %348 = vmatprep.subr.bf16.mxu0 0
    %349 = vmatpush1.bf16.xpose.msra.mxu0 0
    %350 = vmatprep.subr.bf16.mxu0 0
    %351 = vmatpush1.bf16.xpose.msra.mxu0 0
    %352 = vmatprep.subr.bf16.mxu0 0
    %353 = vmatpush1.bf16.xpose.msra.mxu0 0
    %354 = vmatprep.subr.bf16.mxu0 0
    %355 = vmatpush1.bf16.xpose.msra.mxu0 0
    %356 = vmatprep.subr.bf16.mxu0 0
    %357 = vmatpush1.bf16.xpose.msra.mxu0 0
    %358 = vmatprep.subr.bf16.mxu0 0
    %359 = vmatpush1.bf16.xpose.msra.mxu0 0
    %360 = vmatprep.mubr.bf16.mxu0 0
    %361 = vmatmul.mubr.bf16.gmra.mrb[0].mxu0 %v323
    %v362 = vpop.f32.mrb[0].mxu0
    %v363 = vadd.f32 %v97, %v362
    %v364 = vpop.f32.mrb[0].mxu0
    %v365 = vpop.f32.mrb[0].mxu0
    %v366 = vpop.f32.mrb[0].mxu0
    %367 = vdwg.mxu0
    %368 = vrot.lane.b32.xlu0 %v315, 96
    %v369 = vpop.permute.xlu0 %368
    %v371 = vsel %vm321, %v315, 0
    %v374 = vsel %vm321, %v369, 0
    %376 = vmatprep.subr.bf16.mxu0 0
    %377 = vmatpush1.bf16.xpose.msra.mxu0 %v374
    %378 = vmatprep.subr.bf16.mxu0 0
    %379 = vmatpush1.bf16.xpose.msra.mxu0 0
    %380 = vmatprep.subr.bf16.mxu0 0
    %381 = vmatpush1.bf16.xpose.msra.mxu0 0
    %382 = vmatprep.subr.bf16.mxu0 0
    %383 = vmatpush1.bf16.xpose.msra.mxu0 0
    %384 = vmatprep.subr.bf16.mxu0 0
    %385 = vmatpush1.bf16.xpose.msra.mxu0 0
    %386 = vmatprep.subr.bf16.mxu0 0
    %387 = vmatpush1.bf16.xpose.msra.mxu0 0
    %388 = vmatprep.subr.bf16.mxu0 0
    %389 = vmatpush1.bf16.xpose.msra.mxu0 0
    %390 = vmatprep.subr.bf16.mxu0 0
    %391 = vmatpush1.bf16.xpose.msra.mxu0 0
    %392 = vmatprep.subr.bf16.mxu0 0
    %393 = vmatpush1.bf16.xpose.msra.mxu0 0
    %394 = vmatprep.subr.bf16.mxu0 0
    %395 = vmatpush1.bf16.xpose.msra.mxu0 0
    %396 = vmatprep.subr.bf16.mxu0 0
    %397 = vmatpush1.bf16.xpose.msra.mxu0 0
    %398 = vmatprep.subr.bf16.mxu0 0
    %399 = vmatpush1.bf16.xpose.msra.mxu0 0
    %400 = vmatprep.subr.bf16.mxu0 0
    %401 = vmatpush1.bf16.xpose.msra.mxu0 0
    %402 = vmatprep.subr.bf16.mxu0 0
    %403 = vmatpush1.bf16.xpose.msra.mxu0 0
    %404 = vmatprep.subr.bf16.mxu0 0
    %405 = vmatpush1.bf16.xpose.msra.mxu0 0
    %406 = vmatprep.subr.bf16.mxu0 0
    %407 = vmatpush1.bf16.xpose.msra.mxu0 0
    %408 = vmatprep.mubr.bf16.mxu0 0
    %409 = vmatmul.mubr.bf16.gmra.mrb[0].mxu0 %v371
    %v410 = vpop.f32.mrb[0].mxu0
    %v411 = vadd.f32 %v97, %v410
    %v412 = vpop.f32.mrb[0].mxu0
    %v413 = vpop.f32.mrb[0].mxu0
    %v414 = vpop.f32.mrb[0].mxu0
    %415 = vdwg.mxu0
    %vm416 = vcmask 64512
    %v417 = vsel %vm416, %v363, -inf
    %418 = vmax.xlane.f32.xlu0 %v417
    %v419 = vpop.xlane.xlu0 %418
    %v420 = vsel %vm416, %v411, -inf
    %421 = vmax.xlane.f32.xlu0 %v420
    %v422 = vpop.xlane.xlu0 %421
    %v423 = vsub.f32 %v363, %v419
    %v424 = vsub.f32 %v411, %v422
    %v425 = vmul.f32 %v423, 1.442695
    %v426 = vpow.pop %v425
    %v427 = vmul.f32 %v424, 1.442695
    %v428 = vpow.pop %v427
    %v429 = vsel %vm416, %v426, 0.0
    %430 = vadd.xlane.f32.xlu0 %v429
    %v431 = vpop.xlane.xlu0 %430
    %v432 = vsel %vm416, %v428, 0.0
    %433 = vadd.xlane.f32.xlu0 %v432
    %v434 = vpop.xlane.xlu0 %433
    %v435 = vrcp.pop %v431
    %v436 = vrcp.pop %v434
    %v437 = vmul.f32 %v426, %v435
    %v438 = vmul.f32 %v428, %v436
    %v439 = vpack.c.bf16 %v437, %v437
    %v440 = vpack.c.bf16 %v438, %v438
    %v442 = vsel %vm416, %v439, 0
    %vm444 = vcmask 1043456
    %v446 = vsel %vm444, %v312, 0
    %448 = vmatprep.subr.bf16.mxu0 0
    %449 = vmatpush1.bf16.msra.mxu0 %v446
    %450 = vmatprep.subr.bf16.mxu0 0
    %451 = vmatpush1.bf16.msra.mxu0 0
    %452 = vmatprep.subr.bf16.mxu0 0
    %453 = vmatpush1.bf16.msra.mxu0 0
    %454 = vmatprep.subr.bf16.mxu0 0
    %455 = vmatpush1.bf16.msra.mxu0 0
    %456 = vmatprep.subr.bf16.mxu0 0
    %457 = vmatpush1.bf16.msra.mxu0 0
    %458 = vmatprep.subr.bf16.mxu0 0
    %459 = vmatpush1.bf16.msra.mxu0 0
    %460 = vmatprep.subr.bf16.mxu0 0
    %461 = vmatpush1.bf16.msra.mxu0 0
    %462 = vmatprep.subr.bf16.mxu0 0
    %463 = vmatpush1.bf16.msra.mxu0 0
    %464 = vmatprep.subr.bf16.mxu0 0
    %465 = vmatpush1.bf16.msra.mxu0 0
    %466 = vmatprep.subr.bf16.mxu0 0
    %467 = vmatpush1.bf16.msra.mxu0 0
    %468 = vmatprep.subr.bf16.mxu0 0
    %469 = vmatpush1.bf16.msra.mxu0 0
    %470 = vmatprep.subr.bf16.mxu0 0
    %471 = vmatpush1.bf16.msra.mxu0 0
    %472 = vmatprep.subr.bf16.mxu0 0
    %473 = vmatpush1.bf16.msra.mxu0 0
    %474 = vmatprep.subr.bf16.mxu0 0
    %475 = vmatpush1.bf16.msra.mxu0 0
    %476 = vmatprep.subr.bf16.mxu0 0
    %477 = vmatpush1.bf16.msra.mxu0 0
    %478 = vmatprep.subr.bf16.mxu0 0
    %479 = vmatpush1.bf16.msra.mxu0 0
    %480 = vmatprep.mubr.bf16.mxu0 0
    %481 = vmatmul.mubr.bf16.gmra.mrb[0].mxu0 %v442
    %v482 = vpop.f32.mrb[0].mxu0
    %v483 = vadd.f32 0.0, %v482
    %v484 = vpop.f32.mrb[0].mxu0
    %v485 = vpop.f32.mrb[0].mxu0
    %v486 = vpop.f32.mrb[0].mxu0
    %487 = vdwg.mxu0
    %v489 = vsel %vm416, %v440, 0
    %v492 = vsel %vm444, %v318, 0
    %494 = vmatprep.subr.bf16.mxu0 0
    %495 = vmatpush1.bf16.msra.mxu0 %v492
    %496 = vmatprep.subr.bf16.mxu0 0
    %497 = vmatpush1.bf16.msra.mxu0 0
    %498 = vmatprep.subr.bf16.mxu0 0
    %499 = vmatpush1.bf16.msra.mxu0 0
    %500 = vmatprep.subr.bf16.mxu0 0
    %501 = vmatpush1.bf16.msra.mxu0 0
    %502 = vmatprep.subr.bf16.mxu0 0
    %503 = vmatpush1.bf16.msra.mxu0 0
    %504 = vmatprep.subr.bf16.mxu0 0
    %505 = vmatpush1.bf16.msra.mxu0 0
    %506 = vmatprep.subr.bf16.mxu0 0
    %507 = vmatpush1.bf16.msra.mxu0 0
    %508 = vmatprep.subr.bf16.mxu0 0
    %509 = vmatpush1.bf16.msra.mxu0 0
    %510 = vmatprep.subr.bf16.mxu0 0
    %511 = vmatpush1.bf16.msra.mxu0 0
    %512 = vmatprep.subr.bf16.mxu0 0
    %513 = vmatpush1.bf16.msra.mxu0 0
    %514 = vmatprep.subr.bf16.mxu0 0
    %515 = vmatpush1.bf16.msra.mxu0 0
    %516 = vmatprep.subr.bf16.mxu0 0
    %517 = vmatpush1.bf16.msra.mxu0 0
    %518 = vmatprep.subr.bf16.mxu0 0
    %519 = vmatpush1.bf16.msra.mxu0 0
    %520 = vmatprep.subr.bf16.mxu0 0
    %521 = vmatpush1.bf16.msra.mxu0 0
    %522 = vmatprep.subr.bf16.mxu0 0
    %523 = vmatpush1.bf16.msra.mxu0 0
    %524 = vmatprep.subr.bf16.mxu0 0
    %525 = vmatpush1.bf16.msra.mxu0 0
    %526 = vmatprep.mubr.bf16.mxu0 0
    %527 = vmatmul.mubr.bf16.gmra.mrb[0].mxu0 %v489
    %v528 = vpop.f32.mrb[0].mxu0
    %v529 = vadd.f32 0.0, %v528
    %v530 = vpop.f32.mrb[0].mxu0
    %v531 = vpop.f32.mrb[0].mxu0
    %v532 = vpop.f32.mrb[0].mxu0
    %533 = vdwg.mxu0
    %535 = vrot.lane.b32.xlu0 %v529, 16
    %v536 = vpop.permute.xlu0 %535
    %v538 = vsel %vm321, %v483, %v536
    %v539 = vrot.slane %v311, 4
    %540 = vrot.lane.b32.xlu0 %v539, 96
    %v541 = vpop.permute.xlu0 %540
    %v543 = vsel %vm321, %v539, 0
    %v546 = vsel %vm321, %v541, 0
    %548 = vmatprep.subr.bf16.mxu0 0
    %549 = vmatpush1.bf16.xpose.msra.mxu0 %v546
    %550 = vmatprep.subr.bf16.mxu0 0
    %551 = vmatpush1.bf16.xpose.msra.mxu0 0
    %552 = vmatprep.subr.bf16.mxu0 0
    %553 = vmatpush1.bf16.xpose.msra.mxu0 0
    %554 = vmatprep.subr.bf16.mxu0 0
    %555 = vmatpush1.bf16.xpose.msra.mxu0 0
    %556 = vmatprep.subr.bf16.mxu0 0
    %557 = vmatpush1.bf16.xpose.msra.mxu0 0
    %558 = vmatprep.subr.bf16.mxu0 0
    %559 = vmatpush1.bf16.xpose.msra.mxu0 0
    %560 = vmatprep.subr.bf16.mxu0 0
    %561 = vmatpush1.bf16.xpose.msra.mxu0 0
    %562 = vmatprep.subr.bf16.mxu0 0
    %563 = vmatpush1.bf16.xpose.msra.mxu0 0
    %564 = vmatprep.subr.bf16.mxu0 0
    %565 = vmatpush1.bf16.xpose.msra.mxu0 0
    %566 = vmatprep.subr.bf16.mxu0 0
    %567 = vmatpush1.bf16.xpose.msra.mxu0 0
    %568 = vmatprep.subr.bf16.mxu0 0
    %569 = vmatpush1.bf16.xpose.msra.mxu0 0
    %570 = vmatprep.subr.bf16.mxu0 0
    %571 = vmatpush1.bf16.xpose.msra.mxu0 0
    %572 = vmatprep.subr.bf16.mxu0 0
    %573 = vmatpush1.bf16.xpose.msra.mxu0 0
    %574 = vmatprep.subr.bf16.mxu0 0
    %575 = vmatpush1.bf16.xpose.msra.mxu0 0
    %576 = vmatprep.subr.bf16.mxu0 0
    %577 = vmatpush1.bf16.xpose.msra.mxu0 0
    %578 = vmatprep.subr.bf16.mxu0 0
    %579 = vmatpush1.bf16.xpose.msra.mxu0 0
    %580 = vmatprep.mubr.bf16.mxu0 0
    %581 = vmatmul.mubr.bf16.gmra.mrb[0].mxu0 %v543
    %v582 = vpop.f32.mrb[0].mxu0
    %v583 = vadd.f32 %v97, %v582
    %v584 = vpop.f32.mrb[0].mxu0
    %v585 = vpop.f32.mrb[0].mxu0
    %v586 = vpop.f32.mrb[0].mxu0
    %587 = vdwg.mxu0
    %v588 = vrot.slane %v315, 4
    %589 = vrot.lane.b32.xlu0 %v588, 96
    %v590 = vpop.permute.xlu0 %589
    %v592 = vsel %vm321, %v588, 0
    %v595 = vsel %vm321, %v590, 0
    %597 = vmatprep.subr.bf16.mxu0 0
    %598 = vmatpush1.bf16.xpose.msra.mxu0 %v595
    %599 = vmatprep.subr.bf16.mxu0 0
    %600 = vmatpush1.bf16.xpose.msra.mxu0 0
    %601 = vmatprep.subr.bf16.mxu0 0
    %602 = vmatpush1.bf16.xpose.msra.mxu0 0
    %603 = vmatprep.subr.bf16.mxu0 0
    %604 = vmatpush1.bf16.xpose.msra.mxu0 0
    %605 = vmatprep.subr.bf16.mxu0 0
    %606 = vmatpush1.bf16.xpose.msra.mxu0 0
    %607 = vmatprep.subr.bf16.mxu0 0
    %608 = vmatpush1.bf16.xpose.msra.mxu0 0
    %609 = vmatprep.subr.bf16.mxu0 0
    %610 = vmatpush1.bf16.xpose.msra.mxu0 0
    %611 = vmatprep.subr.bf16.mxu0 0
    %612 = vmatpush1.bf16.xpose.msra.mxu0 0
    %613 = vmatprep.subr.bf16.mxu0 0
    %614 = vmatpush1.bf16.xpose.msra.mxu0 0
    %615 = vmatprep.subr.bf16.mxu0 0
    %616 = vmatpush1.bf16.xpose.msra.mxu0 0
    %617 = vmatprep.subr.bf16.mxu0 0
    %618 = vmatpush1.bf16.xpose.msra.mxu0 0
    %619 = vmatprep.subr.bf16.mxu0 0
    %620 = vmatpush1.bf16.xpose.msra.mxu0 0
    %621 = vmatprep.subr.bf16.mxu0 0
    %622 = vmatpush1.bf16.xpose.msra.mxu0 0
    %623 = vmatprep.subr.bf16.mxu0 0
    %624 = vmatpush1.bf16.xpose.msra.mxu0 0
    %625 = vmatprep.subr.bf16.mxu0 0
    %626 = vmatpush1.bf16.xpose.msra.mxu0 0
    %627 = vmatprep.subr.bf16.mxu0 0
    %628 = vmatpush1.bf16.xpose.msra.mxu0 0
    %629 = vmatprep.mubr.bf16.mxu0 0
    %630 = vmatmul.mubr.bf16.gmra.mrb[0].mxu0 %v592
    %v631 = vpop.f32.mrb[0].mxu0
    %v632 = vadd.f32 %v97, %v631
    %v633 = vpop.f32.mrb[0].mxu0
    %v634 = vpop.f32.mrb[0].mxu0
    %v635 = vpop.f32.mrb[0].mxu0
    %636 = vdwg.mxu0
    %v637 = vsel %vm416, %v583, -inf
    %638 = vmax.xlane.f32.xlu0 %v637
    %v639 = vpop.xlane.xlu0 %638
    %v640 = vsel %vm416, %v632, -inf
    %641 = vmax.xlane.f32.xlu0 %v640
    %v642 = vpop.xlane.xlu0 %641
    %v643 = vsub.f32 %v583, %v639
    %v644 = vsub.f32 %v632, %v642
    %v645 = vmul.f32 %v643, 1.442695
    %v646 = vpow.pop %v645
    %v647 = vmul.f32 %v644, 1.442695
    %v648 = vpow.pop %v647
    %v649 = vsel %vm416, %v646, 0.0
    %650 = vadd.xlane.f32.xlu0 %v649
    %v651 = vpop.xlane.xlu0 %650
    %v652 = vsel %vm416, %v648, 0.0
    %653 = vadd.xlane.f32.xlu0 %v652
    %v654 = vpop.xlane.xlu0 %653
    %v655 = vrcp.pop %v651
    %v656 = vrcp.pop %v654
    %v657 = vmul.f32 %v646, %v655
    %v658 = vmul.f32 %v648, %v656
    %v659 = vpack.c.bf16 %v657, %v657
    %v660 = vpack.c.bf16 %v658, %v658
    %v661 = vrot.slane %v312, 4
    %v663 = vsel %vm416, %v659, 0
    %v666 = vsel %vm444, %v661, 0
    %668 = vmatprep.subr.bf16.mxu0 0
    %669 = vmatpush1.bf16.msra.mxu0 %v666
    %670 = vmatprep.subr.bf16.mxu0 0
    %671 = vmatpush1.bf16.msra.mxu0 0
    %672 = vmatprep.subr.bf16.mxu0 0
    %673 = vmatpush1.bf16.msra.mxu0 0
    %674 = vmatprep.subr.bf16.mxu0 0
    %675 = vmatpush1.bf16.msra.mxu0 0
    %676 = vmatprep.subr.bf16.mxu0 0
    %677 = vmatpush1.bf16.msra.mxu0 0
    %678 = vmatprep.subr.bf16.mxu0 0
    %679 = vmatpush1.bf16.msra.mxu0 0
    %680 = vmatprep.subr.bf16.mxu0 0
    %681 = vmatpush1.bf16.msra.mxu0 0
    %682 = vmatprep.subr.bf16.mxu0 0
    %683 = vmatpush1.bf16.msra.mxu0 0
    %684 = vmatprep.subr.bf16.mxu0 0
    %685 = vmatpush1.bf16.msra.mxu0 0
    %686 = vmatprep.subr.bf16.mxu0 0
    %687 = vmatpush1.bf16.msra.mxu0 0
    %688 = vmatprep.subr.bf16.mxu0 0
    %689 = vmatpush1.bf16.msra.mxu0 0
    %690 = vmatprep.subr.bf16.mxu0 0
    %691 = vmatpush1.bf16.msra.mxu0 0
    %692 = vmatprep.subr.bf16.mxu0 0
    %693 = vmatpush1.bf16.msra.mxu0 0
    %694 = vmatprep.subr.bf16.mxu0 0
    %695 = vmatpush1.bf16.msra.mxu0 0
    %696 = vmatprep.subr.bf16.mxu0 0
    %697 = vmatpush1.bf16.msra.mxu0 0
    %698 = vmatprep.subr.bf16.mxu0 0
    %699 = vmatpush1.bf16.msra.mxu0 0
    %700 = vmatprep.mubr.bf16.mxu0 0
    %701 = vmatmul.mubr.bf16.gmra.mrb[0].mxu0 %v663
    %v702 = vpop.f32.mrb[0].mxu0
    %v703 = vadd.f32 0.0, %v702
    %v704 = vpop.f32.mrb[0].mxu0
    %v705 = vpop.f32.mrb[0].mxu0
    %v706 = vpop.f32.mrb[0].mxu0
    %707 = vdwg.mxu0
    %v708 = vrot.slane %v318, 4
    %v710 = vsel %vm416, %v660, 0
    %v713 = vsel %vm444, %v708, 0
    %715 = vmatprep.subr.bf16.mxu0 0
    %716 = vmatpush1.bf16.msra.mxu0 %v713
    %717 = vmatprep.subr.bf16.mxu0 0
    %718 = vmatpush1.bf16.msra.mxu0 0
    %719 = vmatprep.subr.bf16.mxu0 0
    %720 = vmatpush1.bf16.msra.mxu0 0
    %721 = vmatprep.subr.bf16.mxu0 0
    %722 = vmatpush1.bf16.msra.mxu0 0
    %723 = vmatprep.subr.bf16.mxu0 0
    %724 = vmatpush1.bf16.msra.mxu0 0
    %725 = vmatprep.subr.bf16.mxu0 0
    %726 = vmatpush1.bf16.msra.mxu0 0
    %727 = vmatprep.subr.bf16.mxu0 0
    %728 = vmatpush1.bf16.msra.mxu0 0
    %729 = vmatprep.subr.bf16.mxu0 0
    %730 = vmatpush1.bf16.msra.mxu0 0
    %731 = vmatprep.subr.bf16.mxu0 0
    %732 = vmatpush1.bf16.msra.mxu0 0
    %733 = vmatprep.subr.bf16.mxu0 0
    %734 = vmatpush1.bf16.msra.mxu0 0
    %735 = vmatprep.subr.bf16.mxu0 0
    %736 = vmatpush1.bf16.msra.mxu0 0
    %737 = vmatprep.subr.bf16.mxu0 0
    %738 = vmatpush1.bf16.msra.mxu0 0
    %739 = vmatprep.subr.bf16.mxu0 0
    %740 = vmatpush1.bf16.msra.mxu0 0
    %741 = vmatprep.subr.bf16.mxu0 0
    %742 = vmatpush1.bf16.msra.mxu0 0
    %743 = vmatprep.subr.bf16.mxu0 0
    %744 = vmatpush1.bf16.msra.mxu0 0
    %745 = vmatprep.subr.bf16.mxu0 0
    %746 = vmatpush1.bf16.msra.mxu0 0
    %747 = vmatprep.mubr.bf16.mxu0 0
    %748 = vmatmul.mubr.bf16.gmra.mrb[0].mxu0 %v710
    %v749 = vpop.f32.mrb[0].mxu0
    %v750 = vadd.f32 0.0, %v749
    %v751 = vpop.f32.mrb[0].mxu0
    %v752 = vpop.f32.mrb[0].mxu0
    %v753 = vpop.f32.mrb[0].mxu0
    %754 = vdwg.mxu0
    %756 = vrot.lane.b32.xlu0 %v750, 16
    %v757 = vpop.permute.xlu0 %756
    %v759 = vsel %vm321, %v703, %v757
    %v760 = vpack.c.bf16 %v759, %v538
    %v761 = vld [vmem:[#allocation8] sm:$0xf]
    %v762 = vld [vmem:[#allocation8 + $0x4] sm:$0xf]
    %v763 = vld [vmem:[#allocation8 + $0x8] sm:$0xf]
    %v764 = vld [vmem:[#allocation8 + $0xc] sm:$0xf]
    %v765 = vlaneseq
    %v766 = vshrl.u32 %v765, 7
    %v767 = vsub.s32 7, %v766
    %v768 = vrot.slane %v98, %v767
    %v773 = vunpack.c.l.b16 %v761
    %v774 = vunpack.c.l.b16 %v762
    %v775 = vunpack.c.l.b16 %v763
    %v776 = vunpack.c.l.b16 %v764
    %v777 = vpack.c.b16 %v774, %v773
    %v778 = vpack.c.b16 %v776, %v775
    %v782 = vsel %vm100, %v760, 0
    %784 = vmatprep.subr.bf16.mxu0 0
    %785 = vmatpush1.bf16.msra.mxu0 %v777
    %786 = vmatprep.subr.bf16.mxu0 0
    %787 = vmatpush1.bf16.msra.mxu0 %v778
    %788 = vmatprep.subr.bf16.mxu0 0
    %789 = vmatpush1.bf16.msra.mxu0 0
    %790 = vmatprep.subr.bf16.mxu0 0
    %791 = vmatpush1.bf16.msra.mxu0 0
    %792 = vmatprep.subr.bf16.mxu0 0
    %793 = vmatpush1.bf16.msra.mxu0 0
    %794 = vmatprep.subr.bf16.mxu0 0
    %795 = vmatpush1.bf16.msra.mxu0 0
    %796 = vmatprep.subr.bf16.mxu0 0
    %797 = vmatpush1.bf16.msra.mxu0 0
    %798 = vmatprep.subr.bf16.mxu0 0
    %799 = vmatpush1.bf16.msra.mxu0 0
    %800 = vmatprep.subr.bf16.mxu0 0
    %801 = vmatpush1.bf16.msra.mxu0 0
    %802 = vmatprep.subr.bf16.mxu0 0
    %803 = vmatpush1.bf16.msra.mxu0 0
    %804 = vmatprep.subr.bf16.mxu0 0
    %805 = vmatpush1.bf16.msra.mxu0 0
    %806 = vmatprep.subr.bf16.mxu0 0
    %807 = vmatpush1.bf16.msra.mxu0 0
    %808 = vmatprep.subr.bf16.mxu0 0
    %809 = vmatpush1.bf16.msra.mxu0 0
    %810 = vmatprep.subr.bf16.mxu0 0
    %811 = vmatpush1.bf16.msra.mxu0 0
    %812 = vmatprep.subr.bf16.mxu0 0
    %813 = vmatpush1.bf16.msra.mxu0 0
    %814 = vmatprep.subr.bf16.mxu0 0
    %815 = vmatpush1.bf16.msra.mxu0 0
    %816 = vmatprep.mubr.bf16.mxu0 0
    %817 = vmatmul.mubr.bf16.gmra.mrb[0].mxu0 %v782
    %v818 = vpop.f32.mrb[0].mxu0
    %v819 = vadd.f32 %v768, %v818
    %v820 = vpop.f32.mrb[0].mxu0
    %v821 = vpop.f32.mrb[0].mxu0
    %v822 = vadd.f32 %v768, %v821
    %v823 = vpop.f32.mrb[0].mxu0
    %824 = vdwg.mxu0
    %v825 = vadd.f32 %v819, %v176
    %v826 = vadd.f32 %v822, %v177
    %v827 = vsel %vm100, %v825, 0.0
    %828 = vadd.xlane.f32.xlu0 %v827
    %v829 = vpop.xlane.xlu0 %828
    %v830 = vsel %vm100, %v826, 0.0
    %831 = vadd.xlane.f32.xlu0 %v830
    %v832 = vpop.xlane.xlu0 %831
    %v833 = vmul.f32 %v829, %v107
    %v834 = vmul.f32 %v832, %v107
    %v835 = vsub.f32 %v825, %v833
    %v836 = vsub.f32 %v826, %v834
    %v837 = vmul.f32 %v835, %v835
    %v838 = vmul.f32 %v836, %v836
    %v839 = vsel %vm100, %v837, 0.0
    %840 = vadd.xlane.f32.xlu0 %v839
    %v841 = vpop.xlane.xlu0 %840
    %v842 = vsel %vm100, %v838, 0.0
    %843 = vadd.xlane.f32.xlu0 %v842
    %v844 = vpop.xlane.xlu0 %843
    %v845 = vmul.f32 %v841, %v107
    %v846 = vmul.f32 %v844, %v107
    %v847 = vadd.f32 %v845, 1e-12
    %v848 = vadd.f32 %v846, 1e-12
    %v849 = vrsqrt.pop %v847
    %v850 = vrsqrt.pop %v848
    %v851 = vmul.f32 %v835, %v849
    %v852 = vmul.f32 %v836, %v850
    %v853 = vlaneseq
    %v854 = vshrl.u32 %v853, 7
    %v855 = vsub.s32 4, %v854
    %v856 = vrot.slane %v98, %v855
    %v857 = vmul.f32 %v851, %v856
    %v858 = vmul.f32 %v852, %v856
    %v859 = vlaneseq
    %v860 = vshrl.u32 %v859, 7
    %v861 = vsub.s32 5, %v860
    %v862 = vrot.slane %v98, %v861
    %v863 = vadd.f32 %v857, %v862
    %v864 = vadd.f32 %v858, %v862
    %v865 = vpack.c.bf16 %v864, %v863
    %v866 = vld [vmem:[%s9] sm:$0xf]
    %v867 = vld [vmem:[%s9 + $0x4] sm:$0xf]
    %v868 = vld [vmem:[%s9 + $0x8] sm:$0xf]
    %v869 = vld [vmem:[%s9 + $0xc] sm:$0xf]
    %v870 = vld [vmem:[%s5] sm:$0x1]
    %v872 = vlaneseq
    %v873 = vshrl.u32 %v872, 7
    %v874 = vsub.s32 0, %v873
    %v875 = vrot.slane %v870, %v874
    %v881 = vunpack.c.l.b16 %v866
    %v882 = vunpack.c.l.b16 %v867
    %v883 = vunpack.c.l.b16 %v868
    %v884 = vunpack.c.l.b16 %v869
    %v885 = vpack.c.b16 %v882, %v881
    %v886 = vpack.c.b16 %v884, %v883
    %v890 = vsel %vm100, %v865, 0
    %892 = vmatprep.subr.bf16.mxu0 0
    %893 = vmatpush1.bf16.msra.mxu0 %v885
    %894 = vmatprep.subr.bf16.mxu0 0
    %895 = vmatpush1.bf16.msra.mxu0 %v886
    %896 = vmatprep.subr.bf16.mxu0 0
    %897 = vmatpush1.bf16.msra.mxu0 0
    %898 = vmatprep.subr.bf16.mxu0 0
    %899 = vmatpush1.bf16.msra.mxu0 0
    %900 = vmatprep.subr.bf16.mxu0 0
    %901 = vmatpush1.bf16.msra.mxu0 0
    %902 = vmatprep.subr.bf16.mxu0 0
    %903 = vmatpush1.bf16.msra.mxu0 0
    %904 = vmatprep.subr.bf16.mxu0 0
    %905 = vmatpush1.bf16.msra.mxu0 0
    %906 = vmatprep.subr.bf16.mxu0 0
    %907 = vmatpush1.bf16.msra.mxu0 0
    %908 = vmatprep.subr.bf16.mxu0 0
    %909 = vmatpush1.bf16.msra.mxu0 0
    %910 = vmatprep.subr.bf16.mxu0 0
    %911 = vmatpush1.bf16.msra.mxu0 0
    %912 = vmatprep.subr.bf16.mxu0 0
    %913 = vmatpush1.bf16.msra.mxu0 0
    %914 = vmatprep.subr.bf16.mxu0 0
    %915 = vmatpush1.bf16.msra.mxu0 0
    %916 = vmatprep.subr.bf16.mxu0 0
    %917 = vmatpush1.bf16.msra.mxu0 0
    %918 = vmatprep.subr.bf16.mxu0 0
    %919 = vmatpush1.bf16.msra.mxu0 0
    %920 = vmatprep.subr.bf16.mxu0 0
    %921 = vmatpush1.bf16.msra.mxu0 0
    %922 = vmatprep.subr.bf16.mxu0 0
    %923 = vmatpush1.bf16.msra.mxu0 0
    %924 = vmatprep.mubr.bf16.mxu0 0
    %925 = vmatmul.mubr.bf16.gmra.mrb[0].mxu0 %v890
    %v926 = vpop.f32.mrb[0].mxu0
    %v927 = vadd.f32 %v875, %v926
    %v928 = vpop.f32.mrb[0].mxu0
    %v929 = vpop.f32.mrb[0].mxu0
    %v930 = vadd.f32 %v875, %v929
    %v931 = vpop.f32.mrb[0].mxu0
    %932 = vdwg.mxu0
    %v933 = vmul.f32 %v927, 0.5
    %v934 = vmul.f32 %v930, 0.5
    %v935 = vmul.f32 %v927, 0.70710677
    %v936 = vmul.f32 %v930, 0.70710677
    %v937 = verf.f32.pop %v935
    %v938 = verf.f32.pop %v936
    %v939 = vadd.f32 %v937, 1.0
    %v940 = vadd.f32 %v938, 1.0
    %v941 = vmul.f32 %v933, %v939
    %v942 = vmul.f32 %v934, %v940
    %v943 = vpack.c.bf16 %v942, %v941
    %v944 = vld [vmem:[%s10] sm:$0xf]
    %v945 = vld [vmem:[%s10 + $0x4] sm:$0xf]
    %v946 = vld [vmem:[%s10 + $0x8] sm:$0xf]
    %v947 = vld [vmem:[%s10 + $0xc] sm:$0xf]
    %v948 = vld [vmem:[%s10 + $0x10] sm:$0xf]
    %v949 = vld [vmem:[%s10 + $0x14] sm:$0xf]
    %v950 = vld [vmem:[%s10 + $0x18] sm:$0xf]
    %v951 = vld [vmem:[%s10 + $0x1c] sm:$0xf]
    %v952 = vlaneseq
    %v953 = vshrl.u32 %v952, 7
    %v954 = vsub.s32 0, %v953
    %v955 = vrot.slane %v99, %v954
    %v964 = vunpack.c.l.b16 %v944
    %v965 = vunpack.c.l.b16 %v945
    %v966 = vunpack.c.l.b16 %v946
    %v967 = vunpack.c.l.b16 %v947
    %v968 = vunpack.c.l.b16 %v948
    %v969 = vunpack.c.l.b16 %v949
    %v970 = vunpack.c.l.b16 %v950
    %v971 = vunpack.c.l.b16 %v951
    %v972 = vpack.c.b16 %v965, %v964
    %v973 = vpack.c.b16 %v967, %v966
    %v974 = vpack.c.b16 %v969, %v968
    %v975 = vpack.c.b16 %v971, %v970
    %vm980 = vcmask 523264
    %v982 = vsel %vm980, %v943, 0
    %984 = vmatprep.subr.bf16.mxu0 0
    %985 = vmatpush1.bf16.msra.mxu0 %v972
    %986 = vmatprep.subr.bf16.mxu0 0
    %987 = vmatpush1.bf16.msra.mxu0 %v973
    %988 = vmatprep.subr.bf16.mxu0 0
    %989 = vmatpush1.bf16.msra.mxu0 %v974
    %990 = vmatprep.subr.bf16.mxu0 0
    %991 = vmatpush1.bf16.msra.mxu0 %v975
    %992 = vmatprep.subr.bf16.mxu0 0
    %993 = vmatpush1.bf16.msra.mxu0 0
    %994 = vmatprep.subr.bf16.mxu0 0
    %995 = vmatpush1.bf16.msra.mxu0 0
    %996 = vmatprep.subr.bf16.mxu0 0
    %997 = vmatpush1.bf16.msra.mxu0 0
    %998 = vmatprep.subr.bf16.mxu0 0
    %999 = vmatpush1.bf16.msra.mxu0 0
    %1000 = vmatprep.subr.bf16.mxu0 0
    %1001 = vmatpush1.bf16.msra.mxu0 0
    %1002 = vmatprep.subr.bf16.mxu0 0
    %1003 = vmatpush1.bf16.msra.mxu0 0
    %1004 = vmatprep.subr.bf16.mxu0 0
    %1005 = vmatpush1.bf16.msra.mxu0 0
    %1006 = vmatprep.subr.bf16.mxu0 0
    %1007 = vmatpush1.bf16.msra.mxu0 0
    %1008 = vmatprep.subr.bf16.mxu0 0
    %1009 = vmatpush1.bf16.msra.mxu0 0
    %1010 = vmatprep.subr.bf16.mxu0 0
    %1011 = vmatpush1.bf16.msra.mxu0 0
    %1012 = vmatprep.subr.bf16.mxu0 0
    %1013 = vmatpush1.bf16.msra.mxu0 0
    %1014 = vmatprep.subr.bf16.mxu0 0
    %1015 = vmatpush1.bf16.msra.mxu0 0
    %1016 = vmatprep.mubr.bf16.mxu0 0
    %1017 = vmatmul.mubr.bf16.gmra.mrb[0].mxu0 %v982
    %v1018 = vpop.f32.mrb[0].mxu0
    %v1019 = vadd.f32 %v955, %v1018
    %v1020 = vpop.f32.mrb[0].mxu0
    %v1021 = vpop.f32.mrb[0].mxu0
    %v1022 = vadd.f32 %v955, %v1021
    %v1023 = vpop.f32.mrb[0].mxu0
    %1024 = vdwg.mxu0
    %v1025 = vadd.f32 %v1019, %v863
    %v1026 = vadd.f32 %v1022, %v864
    %1027 = vst.msk [vmem:[#allocation10] sm:$0xff] %vm100, %v1025
    %1028 = vst.msk [vmem:[#allocation10 + $0x8] sm:$0xff] %vm100, %v1026
    // Predicated region
    $region62: #{tpu_custom_call.1} parent=1 // pred_check
      _
    $region63: #{tpu_custom_call.1} parent=1 // pred_check_branch
      %1030 = sbr.rel (0) target = $region65
    $region64: #{tpu_custom_call.1} parent=1 // pred_region
      %s1032 = ssub.s32 256, 256
      %1033 = vsyncadd [#allocation4], %s1032
      %s1034 = sshll.u32 [#allocation10], 4
      %s1035 = int_to_ptr.vmem [resolvable:$true] %s1034
      %1040 = dma.vmem_to_hbm [thread:$0]  %s1035, 256, %s11, [#allocation4], 128, 128, 8
    $region65: #{tpu_custom_call.1} parent=1 // pred_fallthru
      _
    // Predicated region
    $region66: #{tpu_custom_call.1} parent=1 // pred_check
      _
    $region67: #{tpu_custom_call.1} parent=1 // pred_check_branch
      %1042 = sbr.rel (0) target = $region69
    $region68: #{tpu_custom_call.1} parent=1 // pred_region
      %1043 = dma.done [#allocation4], 256
    $region69: #{tpu_custom_call.1} parent=1 // pred_fallthru
      _
    %1044 = vsyncpa [#allocation3], 1
    %1045 = vsyncpa [#allocation6], 1
    %1046 = vsyncpa [#allocation9], 1
    %1047 = vsyncpa [#allocation4], 1

</llo_original>
